<compile_context>
chip_gen: v7x
topology: tpu7x:2x2x1
jax: 0.10.0
libtpu: 0.0.40
codegen_flags: <defaults>
</compile_context>

<pallas_src>
import functools
import math

import jax
import jax.numpy as jnp
from jax import lax
from jax.experimental import pallas as pl
from jax.experimental.pallas import tpu as pltpu

# ---------------- synthetic DistilBERT config (small) ----------------
VOCAB = 100        # real: 30522
MAX_POS = 32       # real: 512
HIDDEN = 32        # real: 768
N_HEADS = 2        # real: 12
HEAD_DIM = HIDDEN // N_HEADS
FFN = 64           # real: 3072
N_LAYERS = 2       # real: 6 (same block structure, fewer layers for the demo)
N_LABELS = 2
BATCH = 2
SEQ = 8
LN_EPS = 1e-12


# ---------------- fused Pallas kernel (grid = transformer layers) ----------------
def _bert_kernel(emb_ref, emb_ln_g_ref, emb_ln_b_ref,
                 q_w_ref, q_b_ref, k_w_ref, k_b_ref, v_w_ref, v_b_ref,
                 o_w_ref, o_b_ref, sa_ln_g_ref, sa_ln_b_ref,
                 ff1_w_ref, ff1_b_ref, ff2_w_ref, ff2_b_ref,
                 out_ln_g_ref, out_ln_b_ref,
                 pre_w_ref, pre_b_ref, cls_w_ref, cls_b_ref,
                 labels_ref,
                 logits_ref, loss_ref,
                 h_ref,
                 *, batch, seq):
    layer = pl.program_id(0)
    rows = batch * seq
    inv_sqrt2 = 1.0 / math.sqrt(2.0)
    scale = 1.0 / math.sqrt(HEAD_DIM)

    def layernorm(x, g, b):
        mean = jnp.mean(x, axis=-1, keepdims=True)
        var = jnp.mean((x - mean) ** 2, axis=-1, keepdims=True)
        return (x - mean) * lax.rsqrt(var + LN_EPS) * g + b

    def mm(x, w):  # bf16 MXU inputs, f32 accumulation
        return jnp.dot(x.astype(jnp.bfloat16), w.astype(jnp.bfloat16),
                       preferred_element_type=jnp.float32)

    def bmm(eq, a, b):  # batched matmul, bf16 inputs, f32 accumulation
        return jnp.einsum(eq, a.astype(jnp.bfloat16), b.astype(jnp.bfloat16),
                          preferred_element_type=jnp.float32)

    # ---- embeddings LayerNorm (word+pos sum precomputed outside) ----
    @pl.when(layer == 0)
    def _():
        h_ref[...] = layernorm(emb_ref[...].astype(jnp.float32),
                               emb_ln_g_ref[...], emb_ln_b_ref[...])

    h = h_ref[...]                                                # (B*S, H) f32

    # ---- multi-head self-attention: per-head weight matmuls, no lane slicing.
    # Heads accumulate directly into the output projection (no concat).
    attn = jnp.zeros((rows, HIDDEN), jnp.float32)
    for hd in range(N_HEADS):
        qh = (mm(h, q_w_ref[0, hd]) + q_b_ref[0, hd]) * scale      # (B*S, dH)
        kh = mm(h, k_w_ref[0, hd]) + k_b_ref[0, hd]
        vh = mm(h, v_w_ref[0, hd]) + v_b_ref[0, hd]
        qh = qh.reshape(batch, seq, HEAD_DIM)
        kh = kh.reshape(batch, seq, HEAD_DIM)
        vh = vh.reshape(batch, seq, HEAD_DIM)
        s = bmm('bqd,bkd->bqk', qh, kh)                            # (B, S, S) f32
        m = jnp.max(s, axis=-1, keepdims=True)
        p = jnp.exp(s - m)
        p = p * pl.reciprocal(jnp.sum(p, axis=-1, keepdims=True), approx=True)
        ctx = bmm('bqk,bkd->bqd', p, vh)                           # (B, S, dH)
        attn = attn + mm(ctx.reshape(rows, HEAD_DIM), o_w_ref[0, hd])
    attn = attn + o_b_ref[0]
    h = layernorm(attn + h, sa_ln_g_ref[0], sa_ln_b_ref[0])

    # ---- FFN (exact erf-GELU, as in DistilBERT) ----
    ff = mm(h, ff1_w_ref[0]) + ff1_b_ref[0]                        # (B*S, FFN)
    ff = 0.5 * ff * (1.0 + lax.erf(ff * inv_sqrt2))
    ff = mm(ff, ff2_w_ref[0]) + ff2_b_ref[0]
    h = layernorm(ff + h, out_ln_g_ref[0], out_ln_b_ref[0])
    h_ref[...] = h                                                 # carry to next layer

    # ---- classification head + vectorized cross-entropy at the last layer ----
    @pl.when(layer == N_LAYERS - 1)
    def _():
        pooled = h.reshape(batch, seq, HIDDEN)[:, 0, :]            # (B, H) CLS rows
        pooled = mm(pooled, pre_w_ref[...]) + pre_b_ref[...]
        pooled = jnp.maximum(pooled, 0.0)                          # ReLU
        # TODO(synk): dropout after pre_classifier omitted (eval-mode identity).
        logits = mm(pooled, cls_w_ref[...]) + cls_b_ref[...]       # (B, C) f32
        logits_ref[...] = logits.astype(logits_ref.dtype)

        mx = jnp.max(logits, axis=-1, keepdims=True)
        lse = mx + jnp.log(jnp.sum(jnp.exp(logits - mx), axis=-1, keepdims=True))
        col = lax.broadcasted_iota(jnp.int32, (batch, N_LABELS), 1)
        onehot = (col == labels_ref[...]).astype(jnp.float32)      # labels: (B,1) int32
        picked = jnp.sum(onehot * logits, axis=-1, keepdims=True)  # (B, 1)
        loss_ref[...] = jnp.sum(lse - picked, keepdims=True) * (1.0 / batch)


# ---------------- BlockSpec helpers ----------------
def _const_spec(shape):
    nd = len(shape)
    return pl.BlockSpec(tuple(shape), lambda l, _nd=nd: (0,) * _nd)


def _layer_spec(shape):  # leading axis is the layer axis -> streamed per grid step
    nd = len(shape)
    return pl.BlockSpec((1,) + tuple(shape[1:]),
                        lambda l, _nd=nd: (l,) + (0,) * (_nd - 1))


def bert_fused_call(emb, params, labels, *, batch, seq):
    rows = batch * seq
    kernel = functools.partial(_bert_kernel, batch=batch, seq=seq)
    in_specs = [
        _const_spec((rows, HIDDEN)),            # emb
        _const_spec((1, HIDDEN)),               # emb_ln_g
        _const_spec((1, HIDDEN)),               # emb_ln_b
        _layer_spec(params["q_w"].shape),       # (L, nH, H, dH)
        _layer_spec(params["q_b"].shape),       # (L, nH, 1, dH)
        _layer_spec(params["k_w"].shape),
        _layer_spec(params["k_b"].shape),
        _layer_spec(params["v_w"].shape),
        _layer_spec(params["v_b"].shape),
        _layer_spec(params["o_w"].shape),       # (L, nH, dH, H)
        _layer_spec(params["o_b"].shape),       # (L, 1, H)
        _layer_spec(params["sa_ln_g"].shape),
        _layer_spec(params["sa_ln_b"].shape),
        _layer_spec(params["ff1_w"].shape),
        _layer_spec(params["ff1_b"].shape),
        _layer_spec(params["ff2_w"].shape),
        _layer_spec(params["ff2_b"].shape),
        _layer_spec(params["out_ln_g"].shape),
        _layer_spec(params["out_ln_b"].shape),
        _const_spec((HIDDEN, HIDDEN)),          # pre_w
        _const_spec((1, HIDDEN)),               # pre_b
        _const_spec((HIDDEN, N_LABELS)),        # cls_w
        _const_spec((1, N_LABELS)),             # cls_b
        _const_spec((batch, 1)),                # labels
    ]
    out_specs = (_const_spec((batch, N_LABELS)), _const_spec((1, 1)))

    grid_spec = pltpu.PrefetchScalarGridSpec(
        num_scalar_prefetch=0,
        grid=(N_LAYERS,),
        in_specs=in_specs,
        out_specs=out_specs,
        scratch_shapes=[pltpu.VMEM((rows, HIDDEN), jnp.float32)],  # hidden-state carry
    )
    # TODO(synk): when outputs grow, pad logits to a (B, 128) lane-dense slab
    #             and slice in the wrapper to avoid masked partial stores.
    logits, loss = pl.pallas_call(
        kernel,
        out_shape=(jax.ShapeDtypeStruct((batch, N_LABELS), jnp.float32),
                   jax.ShapeDtypeStruct((1, 1), jnp.float32)),
        grid_spec=grid_spec,
        compiler_params=pltpu.CompilerParams(
            dimension_semantics=("arbitrary",),        # layer axis carries state
            vmem_limit_bytes=32 * 1024 * 1024),
    )(emb,
      params["emb_ln_g"], params["emb_ln_b"],
      params["q_w"], params["q_b"], params["k_w"], params["k_b"],
      params["v_w"], params["v_b"],
      params["o_w"], params["o_b"],
      params["sa_ln_g"], params["sa_ln_b"],
      params["ff1_w"], params["ff1_b"], params["ff2_w"], params["ff2_b"],
      params["out_ln_g"], params["out_ln_b"],
      params["pre_w"], params["pre_b"], params["cls_w"], params["cls_b"],
      labels)
    return logits, loss


# ---------------- parameter init (deterministic, synthetic, per-head split) ----------------
def init_params(key):
    def nrm(k, shape, scale=0.02):
        return scale * jax.random.normal(k, shape, dtype=jnp.float32)

    def split_qkv(w):  # (H, H) -> (nH, H, dH): per-head column blocks of W
        return w.reshape(HIDDEN, N_HEADS, HEAD_DIM).transpose(1, 0, 2)

    def split_out(w):  # (H, H) -> (nH, dH, H): per-head row blocks of Wo
        return w.reshape(N_HEADS, HEAD_DIM, HIDDEN)

    bf16 = jnp.bfloat16
    keys = iter(jax.random.split(key, 4 + N_LAYERS * 6))
    params = {
        "word_emb": nrm(next(keys), (VOCAB, HIDDEN)),
        "pos_emb": nrm(next(keys), (MAX_POS, HIDDEN)),
        "emb_ln_g": jnp.ones((1, HIDDEN), jnp.float32),
        "emb_ln_b": jnp.zeros((1, HIDDEN), jnp.float32),
        "pre_w": nrm(next(keys), (HIDDEN, HIDDEN)).astype(bf16),
        "pre_b": jnp.zeros((1, HIDDEN), jnp.float32),
        "cls_w": nrm(next(keys), (HIDDEN, N_LABELS)).astype(bf16),
        "cls_b": jnp.zeros((1, N_LABELS), jnp.float32),
    }
    q_w, k_w, v_w, o_w, ff1_w, ff2_w = [], [], [], [], [], []
    for _ in range(N_LAYERS):
        q_w.append(split_qkv(nrm(next(keys), (HIDDEN, HIDDEN))))
        k_w.append(split_qkv(nrm(next(keys), (HIDDEN, HIDDEN))))
        v_w.append(split_qkv(nrm(next(keys), (HIDDEN, HIDDEN))))
        o_w.append(split_out(nrm(next(keys), (HIDDEN, HIDDEN))))
        ff1_w.append(nrm(next(keys), (HIDDEN, FFN)))
        ff2_w.append(nrm(next(keys), (FFN, HIDDEN)))
    params.update({
        "q_w": jnp.stack(q_w).astype(bf16),                        # (L, nH, H, dH)
        "k_w": jnp.stack(k_w).astype(bf16),
        "v_w": jnp.stack(v_w).astype(bf16),
        "q_b": jnp.zeros((N_LAYERS, N_HEADS, 1, HEAD_DIM), jnp.float32),
        "k_b": jnp.zeros((N_LAYERS, N_HEADS, 1, HEAD_DIM), jnp.float32),
        "v_b": jnp.zeros((N_LAYERS, N_HEADS, 1, HEAD_DIM), jnp.float32),
        "o_w": jnp.stack(o_w).astype(bf16),                        # (L, nH, dH, H)
        "o_b": jnp.zeros((N_LAYERS, 1, HIDDEN), jnp.float32),
        "sa_ln_g": jnp.ones((N_LAYERS, 1, HIDDEN), jnp.float32),
        "sa_ln_b": jnp.zeros((N_LAYERS, 1, HIDDEN), jnp.float32),
        "ff1_w": jnp.stack(ff1_w).astype(bf16),                    # (L, H, FFN)
        "ff1_b": jnp.zeros((N_LAYERS, 1, FFN), jnp.float32),
        "ff2_w": jnp.stack(ff2_w).astype(bf16),                    # (L, FFN, H)
        "ff2_b": jnp.zeros((N_LAYERS, 1, HIDDEN), jnp.float32),
        "out_ln_g": jnp.ones((N_LAYERS, 1, HIDDEN), jnp.float32),
        "out_ln_b": jnp.zeros((N_LAYERS, 1, HIDDEN), jnp.float32),
    })
    return params


# ---------------- forward pass (embedding gather in JAX, everything else fused) ----------------
def bert_forward(params, label, text):
    """Mirrors BERT.forward(label, text) -> (loss, logits)."""
    B, S = text.shape
    word = jnp.take(params["word_emb"], text, axis=0)              # (B,S,H) gather (glue)
    pos = params["pos_emb"][:S]                                    # (S,H)
    emb = (word + pos[None, :, :]).reshape(B * S, HIDDEN)          # single HBM input

    logits, loss = bert_fused_call(
        emb, params, label.astype(jnp.int32).reshape(B, 1), batch=B, seq=S)
    return loss[0, 0], logits


if __name__ == "__main__":
    key = jax.random.PRNGKey(0)
    k_params, k_text, k_label = jax.random.split(key, 3)

    params = init_params(k_params)
    text = jax.random.randint(k_text, (BATCH, SEQ), 0, VOCAB, dtype=jnp.int32)
    label = jax.random.randint(k_label, (BATCH,), 0, N_LABELS, dtype=jnp.int32)

    loss, logits = jax.jit(bert_forward)(params, label, text)
    jax.block_until_ready((loss, logits))

    assert loss.shape == () and logits.shape == (BATCH, N_LABELS)
    assert bool(jnp.isfinite(loss)) and bool(jnp.all(jnp.isfinite(logits)))
    print("KERNEL_OK")
</pallas_src>

<mosaic_0001>
module attributes {stable_mosaic.version = 11 : i64} {
  func.func @_bert_kernel(%arg0: i32, %arg1: memref<16x32xf32, #tpu.memory_space<vmem>>, %arg2: memref<1x32xf32, #tpu.memory_space<vmem>>, %arg3: memref<1x32xf32, #tpu.memory_space<vmem>>, %arg4: memref<1x2x32x16xbf16, #tpu.memory_space<vmem>>, %arg5: memref<1x2x1x16xf32, #tpu.memory_space<vmem>>, %arg6: memref<1x2x32x16xbf16, #tpu.memory_space<vmem>>, %arg7: memref<1x2x1x16xf32, #tpu.memory_space<vmem>>, %arg8: memref<1x2x32x16xbf16, #tpu.memory_space<vmem>>, %arg9: memref<1x2x1x16xf32, #tpu.memory_space<vmem>>, %arg10: memref<1x2x16x32xbf16, #tpu.memory_space<vmem>>, %arg11: memref<1x1x32xf32, #tpu.memory_space<vmem>>, %arg12: memref<1x1x32xf32, #tpu.memory_space<vmem>>, %arg13: memref<1x1x32xf32, #tpu.memory_space<vmem>>, %arg14: memref<1x32x64xbf16, #tpu.memory_space<vmem>>, %arg15: memref<1x1x64xf32, #tpu.memory_space<vmem>>, %arg16: memref<1x64x32xbf16, #tpu.memory_space<vmem>>, %arg17: memref<1x1x32xf32, #tpu.memory_space<vmem>>, %arg18: memref<1x1x32xf32, #tpu.memory_space<vmem>>, %arg19: memref<1x1x32xf32, #tpu.memory_space<vmem>>, %arg20: memref<32x32xbf16, #tpu.memory_space<vmem>>, %arg21: memref<1x32xf32, #tpu.memory_space<vmem>>, %arg22: memref<32x2xbf16, #tpu.memory_space<vmem>>, %arg23: memref<1x2xf32, #tpu.memory_space<vmem>>, %arg24: memref<2x1xi32, #tpu.memory_space<vmem>>, %arg25: memref<2x2xf32, #tpu.memory_space<vmem>>, %arg26: memref<1x1xf32, #tpu.memory_space<vmem>>, %arg27: memref<16x32xf32, #tpu.memory_space<vmem>>) attributes {dimension_semantics = [#tpu.dimension_semantics<arbitrary>], iteration_bounds = array<i64: 2>, scalar_prefetch = 0 : i64, scratch_operands = 1 : i64, tpu.core_type = #tpu.core_type<tc>, window_params = [{pipeline_mode = #tpu.pipeline_mode<synchronous>, transform_indices = @transform_0, window_bounds = array<i64: 16, 32>}, {pipeline_mode = #tpu.pipeline_mode<synchronous>, transform_indices = @transform_1, window_bounds = array<i64: 1, 32>}, {pipeline_mode = #tpu.pipeline_mode<synchronous>, transform_indices = @transform_2, window_bounds = array<i64: 1, 32>}, {transform_indices = @transform_3, window_bounds = array<i64: 1, 2, 32, 16>}, {transform_indices = @transform_4, window_bounds = array<i64: 1, 2, 1, 16>}, {transform_indices = @transform_5, window_bounds = array<i64: 1, 2, 32, 16>}, {transform_indices = @transform_6, window_bounds = array<i64: 1, 2, 1, 16>}, {transform_indices = @transform_7, window_bounds = array<i64: 1, 2, 32, 16>}, {transform_indices = @transform_8, window_bounds = array<i64: 1, 2, 1, 16>}, {transform_indices = @transform_9, window_bounds = array<i64: 1, 2, 16, 32>}, {transform_indices = @transform_10, window_bounds = array<i64: 1, 1, 32>}, {transform_indices = @transform_11, window_bounds = array<i64: 1, 1, 32>}, {transform_indices = @transform_12, window_bounds = array<i64: 1, 1, 32>}, {transform_indices = @transform_13, window_bounds = array<i64: 1, 32, 64>}, {transform_indices = @transform_14, window_bounds = array<i64: 1, 1, 64>}, {transform_indices = @transform_15, window_bounds = array<i64: 1, 64, 32>}, {transform_indices = @transform_16, window_bounds = array<i64: 1, 1, 32>}, {transform_indices = @transform_17, window_bounds = array<i64: 1, 1, 32>}, {transform_indices = @transform_18, window_bounds = array<i64: 1, 1, 32>}, {pipeline_mode = #tpu.pipeline_mode<synchronous>, transform_indices = @transform_19, window_bounds = array<i64: 32, 32>}, {pipeline_mode = #tpu.pipeline_mode<synchronous>, transform_indices = @transform_20, window_bounds = array<i64: 1, 32>}, {pipeline_mode = #tpu.pipeline_mode<synchronous>, transform_indices = @transform_21, window_bounds = array<i64: 32, 2>}, {pipeline_mode = #tpu.pipeline_mode<synchronous>, transform_indices = @transform_22, window_bounds = array<i64: 1, 2>}, {pipeline_mode = #tpu.pipeline_mode<synchronous>, transform_indices = @transform_23, window_bounds = array<i64: 2, 1>}, {pipeline_mode = #tpu.pipeline_mode<synchronous>, transform_indices = @transform_24, window_bounds = array<i64: 2, 2>}, {pipeline_mode = #tpu.pipeline_mode<synchronous>, transform_indices = @transform_25, window_bounds = array<i64: 1, 1>}]} {
    %c0_i32 = arith.constant 0 : i32
    %0 = arith.cmpi eq, %arg0, %c0_i32 : i32
    %1 = arith.extui %0 : i1 to i32
    %c0_i32_0 = arith.constant 0 : i32
    %2 = arith.cmpi ne, %1, %c0_i32_0 : i32
    scf.if %2 {
      %c0_120 = arith.constant 0 : index
      %c0_121 = arith.constant 0 : index
      %193 = vector.load %arg1[%c0_120, %c0_121] : memref<16x32xf32, #tpu.memory_space<vmem>>, vector<16x32xf32>
      %c0_122 = arith.constant 0 : index
      %c0_123 = arith.constant 0 : index
      %194 = vector.load %arg2[%c0_122, %c0_123] : memref<1x32xf32, #tpu.memory_space<vmem>>, vector<1x32xf32>
      %c0_124 = arith.constant 0 : index
      %c0_125 = arith.constant 0 : index
      %195 = vector.load %arg3[%c0_124, %c0_125] : memref<1x32xf32, #tpu.memory_space<vmem>>, vector<1x32xf32>
      %cst_126 = arith.constant dense<0.000000e+00> : vector<16xf32>
      %196 = vector.multi_reduction <add>, %193, %cst_126 [1] : vector<16x32xf32> to vector<16xf32>
      %197 = vector.shape_cast %196 : vector<16xf32> to vector<16x1xf32>
      %cst_127 = arith.constant 3.200000e+01 : f32
      %198 = vector.broadcast %cst_127 : f32 to vector<16x1xf32>
      %199 = arith.divf %197, %198 : vector<16x1xf32>
      %200 = vector.broadcast %199 : vector<16x1xf32> to vector<16x32xf32>
      %201 = arith.subf %193, %200 : vector<16x32xf32>
      %202 = arith.mulf %201, %201 : vector<16x32xf32>
      %cst_128 = arith.constant dense<0.000000e+00> : vector<16xf32>
      %203 = vector.multi_reduction <add>, %202, %cst_128 [1] : vector<16x32xf32> to vector<16xf32>
      %204 = vector.shape_cast %203 : vector<16xf32> to vector<16x1xf32>
      %cst_129 = arith.constant 3.200000e+01 : f32
      %205 = vector.broadcast %cst_129 : f32 to vector<16x1xf32>
      %206 = arith.divf %204, %205 : vector<16x1xf32>
      %207 = vector.broadcast %199 : vector<16x1xf32> to vector<16x32xf32>
      %208 = arith.subf %193, %207 : vector<16x32xf32>
      %cst_130 = arith.constant 9.99999996E-13 : f32
      %209 = vector.broadcast %cst_130 : f32 to vector<16x1xf32>
      %210 = arith.addf %206, %209 : vector<16x1xf32>
      %211 = math.rsqrt %210 : vector<16x1xf32>
      %212 = vector.broadcast %211 : vector<16x1xf32> to vector<16x32xf32>
      %213 = arith.mulf %208, %212 : vector<16x32xf32>
      %214 = vector.broadcast %194 : vector<1x32xf32> to vector<16x32xf32>
      %215 = arith.mulf %213, %214 : vector<16x32xf32>
      %216 = vector.broadcast %195 : vector<1x32xf32> to vector<16x32xf32>
      %217 = arith.addf %215, %216 : vector<16x32xf32>
      %c0_131 = arith.constant 0 : index
      %c0_132 = arith.constant 0 : index
      %218 = vector.load %arg27[%c0_131, %c0_132] : memref<16x32xf32, #tpu.memory_space<vmem>>, vector<16x32xf32>
      tpu.vector_store %arg27[%c0_131, %c0_132], %217 {strides = array<i32>} : memref<16x32xf32, #tpu.memory_space<vmem>>, vector<16x32xf32>,
    } else {
    }
    %c0 = arith.constant 0 : index
    %c0_1 = arith.constant 0 : index
    %3 = vector.load %arg27[%c0, %c0_1] : memref<16x32xf32, #tpu.memory_space<vmem>>, vector<16x32xf32>
    %cst = arith.constant 0.000000e+00 : f32
    %4 = vector.broadcast %cst : f32 to vector<16x32xf32>
    %c0_2 = arith.constant 0 : index
    %c0_3 = arith.constant 0 : index
    %c0_4 = arith.constant 0 : index
    %c0_5 = arith.constant 0 : index
    %5 = vector.load %arg4[%c0_2, %c0_3, %c0_4, %c0_5] : memref<1x2x32x16xbf16, #tpu.memory_space<vmem>>, vector<1x1x32x16xbf16>
    %6 = vector.shape_cast %5 : vector<1x1x32x16xbf16> to vector<32x16xbf16>
    %7 = arith.truncf %3 : vector<16x32xf32> to vector<16x32xbf16>
    %cst_6 = arith.constant dense<0.000000e+00> : vector<16x16xf32>
    %8 = tpu.matmul %7, %6, %cst_6 {dimension_numbers = #tpu.dot_dimension_numbers<[1], [0], [0], [1], [0, 0, 1, 1], [], []>} : vector<16x32xbf16>, vector<32x16xbf16>, vector<16x16xf32> -> vector<16x16xf32>
    %c0_7 = arith.constant 0 : index
    %c0_8 = arith.constant 0 : index
    %c0_9 = arith.constant 0 : index
    %c0_10 = arith.constant 0 : index
    %9 = vector.load %arg5[%c0_7, %c0_8, %c0_9, %c0_10] : memref<1x2x1x16xf32, #tpu.memory_space<vmem>>, vector<1x1x1x16xf32>
    %10 = vector.shape_cast %9 : vector<1x1x1x16xf32> to vector<1x16xf32>
    %11 = vector.broadcast %10 : vector<1x16xf32> to vector<16x16xf32>
    %12 = arith.addf %8, %11 : vector<16x16xf32>
    %cst_11 = arith.constant 2.500000e-01 : f32
    %13 = vector.broadcast %cst_11 : f32 to vector<16x16xf32>
    %14 = arith.mulf %12, %13 : vector<16x16xf32>
    %c0_12 = arith.constant 0 : index
    %c0_13 = arith.constant 0 : index
    %c0_14 = arith.constant 0 : index
    %c0_15 = arith.constant 0 : index
    %15 = vector.load %arg6[%c0_12, %c0_13, %c0_14, %c0_15] : memref<1x2x32x16xbf16, #tpu.memory_space<vmem>>, vector<1x1x32x16xbf16>
    %16 = vector.shape_cast %15 : vector<1x1x32x16xbf16> to vector<32x16xbf16>
    %17 = arith.truncf %3 : vector<16x32xf32> to vector<16x32xbf16>
    %cst_16 = arith.constant dense<0.000000e+00> : vector<16x16xf32>
    %18 = tpu.matmul %17, %16, %cst_16 {dimension_numbers = #tpu.dot_dimension_numbers<[1], [0], [0], [1], [0, 0, 1, 1], [], []>} : vector<16x32xbf16>, vector<32x16xbf16>, vector<16x16xf32> -> vector<16x16xf32>
    %c0_17 = arith.constant 0 : index
    %c0_18 = arith.constant 0 : index
    %c0_19 = arith.constant 0 : index
    %c0_20 = arith.constant 0 : index
    %19 = vector.load %arg7[%c0_17, %c0_18, %c0_19, %c0_20] : memref<1x2x1x16xf32, #tpu.memory_space<vmem>>, vector<1x1x1x16xf32>
    %20 = vector.shape_cast %19 : vector<1x1x1x16xf32> to vector<1x16xf32>
    %21 = vector.broadcast %20 : vector<1x16xf32> to vector<16x16xf32>
    %22 = arith.addf %18, %21 : vector<16x16xf32>
    %c0_21 = arith.constant 0 : index
    %c0_22 = arith.constant 0 : index
    %c0_23 = arith.constant 0 : index
    %c0_24 = arith.constant 0 : index
    %23 = vector.load %arg8[%c0_21, %c0_22, %c0_23, %c0_24] : memref<1x2x32x16xbf16, #tpu.memory_space<vmem>>, vector<1x1x32x16xbf16>
    %24 = vector.shape_cast %23 : vector<1x1x32x16xbf16> to vector<32x16xbf16>
    %25 = arith.truncf %3 : vector<16x32xf32> to vector<16x32xbf16>
    %cst_25 = arith.constant dense<0.000000e+00> : vector<16x16xf32>
    %26 = tpu.matmul %25, %24, %cst_25 {dimension_numbers = #tpu.dot_dimension_numbers<[1], [0], [0], [1], [0, 0, 1, 1], [], []>} : vector<16x32xbf16>, vector<32x16xbf16>, vector<16x16xf32> -> vector<16x16xf32>
    %c0_26 = arith.constant 0 : index
    %c0_27 = arith.constant 0 : index
    %c0_28 = arith.constant 0 : index
    %c0_29 = arith.constant 0 : index
    %27 = vector.load %arg9[%c0_26, %c0_27, %c0_28, %c0_29] : memref<1x2x1x16xf32, #tpu.memory_space<vmem>>, vector<1x1x1x16xf32>
    %28 = vector.shape_cast %27 : vector<1x1x1x16xf32> to vector<1x16xf32>
    %29 = vector.broadcast %28 : vector<1x16xf32> to vector<16x16xf32>
    %30 = arith.addf %26, %29 : vector<16x16xf32>
    %31 = vector.shape_cast %14 : vector<16x16xf32> to vector<2x8x16xf32>
    %32 = vector.shape_cast %22 : vector<16x16xf32> to vector<2x8x16xf32>
    %33 = vector.shape_cast %30 : vector<16x16xf32> to vector<2x8x16xf32>
    %34 = arith.truncf %31 : vector<2x8x16xf32> to vector<2x8x16xbf16>
    %35 = arith.truncf %32 : vector<2x8x16xf32> to vector<2x8x16xbf16>
    "tpu.trace_start"() <{level = 10 : i32, message = "bqd,bkd->bqk"}> : () -> ()
    %cst_30 = arith.constant dense<0.000000e+00> : vector<2x8x8xf32>
    %36 = tpu.matmul %34, %35, %cst_30 {dimension_numbers = #tpu.dot_dimension_numbers<[2], [2], [1], [1], [0, 0, 0, 1, 1, 1], [0], [0]>} : vector<2x8x16xbf16>, vector<2x8x16xbf16>, vector<2x8x8xf32> -> vector<2x8x8xf32>
    "tpu.trace_stop"() : () -> ()
    %cst_31 = arith.constant dense<0xFF800000> : vector<2x8xf32>
    %37 = vector.multi_reduction <maximumf>, %36, %cst_31 [2] : vector<2x8x8xf32> to vector<2x8xf32>
    %38 = vector.shape_cast %37 : vector<2x8xf32> to vector<2x8x1xf32>
    %39 = vector.broadcast %38 : vector<2x8x1xf32> to vector<2x8x8xf32>
    %40 = arith.subf %36, %39 : vector<2x8x8xf32>
    %41 = math.exp %40 : vector<2x8x8xf32>
    %cst_32 = arith.constant dense<0.000000e+00> : vector<2x8xf32>
    %42 = vector.multi_reduction <add>, %41, %cst_32 [2] : vector<2x8x8xf32> to vector<2x8xf32>
    %43 = vector.shape_cast %42 : vector<2x8xf32> to vector<2x8x1xf32>
    %44 = tpu.reciprocal %43 {approx = true} : vector<2x8x1xf32> -> vector<2x8x1xf32>
    %45 = vector.broadcast %44 : vector<2x8x1xf32> to vector<2x8x8xf32>
    %46 = arith.mulf %41, %45 : vector<2x8x8xf32>
    %47 = arith.truncf %46 : vector<2x8x8xf32> to vector<2x8x8xbf16>
    %48 = arith.truncf %33 : vector<2x8x16xf32> to vector<2x8x16xbf16>
    "tpu.trace_start"() <{level = 10 : i32, message = "bqk,bkd->bqd"}> : () -> ()
    %cst_33 = arith.constant dense<0.000000e+00> : vector<2x8x16xf32>
    %49 = tpu.matmul %47, %48, %cst_33 {dimension_numbers = #tpu.dot_dimension_numbers<[2], [1], [1], [2], [0, 0, 0, 1, 1, 2], [0], [0]>} : vector<2x8x8xbf16>, vector<2x8x16xbf16>, vector<2x8x16xf32> -> vector<2x8x16xf32>
    "tpu.trace_stop"() : () -> ()
    %50 = vector.shape_cast %49 : vector<2x8x16xf32> to vector<16x16xf32>
    %c0_34 = arith.constant 0 : index
    %c0_35 = arith.constant 0 : index
    %c0_36 = arith.constant 0 : index
    %c0_37 = arith.constant 0 : index
    %51 = vector.load %arg10[%c0_34, %c0_35, %c0_36, %c0_37] : memref<1x2x16x32xbf16, #tpu.memory_space<vmem>>, vector<1x1x16x32xbf16>
    %52 = vector.shape_cast %51 : vector<1x1x16x32xbf16> to vector<16x32xbf16>
    %53 = arith.truncf %50 : vector<16x16xf32> to vector<16x16xbf16>
    %cst_38 = arith.constant dense<0.000000e+00> : vector<16x32xf32>
    %54 = tpu.matmul %53, %52, %cst_38 {dimension_numbers = #tpu.dot_dimension_numbers<[1], [0], [0], [1], [0, 0, 1, 1], [], []>} : vector<16x16xbf16>, vector<16x32xbf16>, vector<16x32xf32> -> vector<16x32xf32>
    %55 = arith.addf %4, %54 : vector<16x32xf32>
    %c0_39 = arith.constant 0 : index
    %c1 = arith.constant 1 : index
    %c0_40 = arith.constant 0 : index
    %c0_41 = arith.constant 0 : index
    %56 = vector.load %arg4[%c0_39, %c1, %c0_40, %c0_41] : memref<1x2x32x16xbf16, #tpu.memory_space<vmem>>, vector<1x1x32x16xbf16>
    %57 = vector.shape_cast %56 : vector<1x1x32x16xbf16> to vector<32x16xbf16>
    %58 = arith.truncf %3 : vector<16x32xf32> to vector<16x32xbf16>
    %cst_42 = arith.constant dense<0.000000e+00> : vector<16x16xf32>
    %59 = tpu.matmul %58, %57, %cst_42 {dimension_numbers = #tpu.dot_dimension_numbers<[1], [0], [0], [1], [0, 0, 1, 1], [], []>} : vector<16x32xbf16>, vector<32x16xbf16>, vector<16x16xf32> -> vector<16x16xf32>
    %c0_43 = arith.constant 0 : index
    %c1_44 = arith.constant 1 : index
    %c0_45 = arith.constant 0 : index
    %c0_46 = arith.constant 0 : index
    %60 = vector.load %arg5[%c0_43, %c1_44, %c0_45, %c0_46] : memref<1x2x1x16xf32, #tpu.memory_space<vmem>>, vector<1x1x1x16xf32>
    %61 = vector.shape_cast %60 : vector<1x1x1x16xf32> to vector<1x16xf32>
    %62 = vector.broadcast %61 : vector<1x16xf32> to vector<16x16xf32>
    %63 = arith.addf %59, %62 : vector<16x16xf32>
    %cst_47 = arith.constant 2.500000e-01 : f32
    %64 = vector.broadcast %cst_47 : f32 to vector<16x16xf32>
    %65 = arith.mulf %63, %64 : vector<16x16xf32>
    %c0_48 = arith.constant 0 : index
    %c1_49 = arith.constant 1 : index
    %c0_50 = arith.constant 0 : index
    %c0_51 = arith.constant 0 : index
    %66 = vector.load %arg6[%c0_48, %c1_49, %c0_50, %c0_51] : memref<1x2x32x16xbf16, #tpu.memory_space<vmem>>, vector<1x1x32x16xbf16>
    %67 = vector.shape_cast %66 : vector<1x1x32x16xbf16> to vector<32x16xbf16>
    %68 = arith.truncf %3 : vector<16x32xf32> to vector<16x32xbf16>
    %cst_52 = arith.constant dense<0.000000e+00> : vector<16x16xf32>
    %69 = tpu.matmul %68, %67, %cst_52 {dimension_numbers = #tpu.dot_dimension_numbers<[1], [0], [0], [1], [0, 0, 1, 1], [], []>} : vector<16x32xbf16>, vector<32x16xbf16>, vector<16x16xf32> -> vector<16x16xf32>
    %c0_53 = arith.constant 0 : index
    %c1_54 = arith.constant 1 : index
    %c0_55 = arith.constant 0 : index
    %c0_56 = arith.constant 0 : index
    %70 = vector.load %arg7[%c0_53, %c1_54, %c0_55, %c0_56] : memref<1x2x1x16xf32, #tpu.memory_space<vmem>>, vector<1x1x1x16xf32>
    %71 = vector.shape_cast %70 : vector<1x1x1x16xf32> to vector<1x16xf32>
    %72 = vector.broadcast %71 : vector<1x16xf32> to vector<16x16xf32>
    %73 = arith.addf %69, %72 : vector<16x16xf32>
    %c0_57 = arith.constant 0 : index
    %c1_58 = arith.constant 1 : index
    %c0_59 = arith.constant 0 : index
    %c0_60 = arith.constant 0 : index
    %74 = vector.load %arg8[%c0_57, %c1_58, %c0_59, %c0_60] : memref<1x2x32x16xbf16, #tpu.memory_space<vmem>>, vector<1x1x32x16xbf16>
    %75 = vector.shape_cast %74 : vector<1x1x32x16xbf16> to vector<32x16xbf16>
    %76 = arith.truncf %3 : vector<16x32xf32> to vector<16x32xbf16>
    %cst_61 = arith.constant dense<0.000000e+00> : vector<16x16xf32>
    %77 = tpu.matmul %76, %75, %cst_61 {dimension_numbers = #tpu.dot_dimension_numbers<[1], [0], [0], [1], [0, 0, 1, 1], [], []>} : vector<16x32xbf16>, vector<32x16xbf16>, vector<16x16xf32> -> vector<16x16xf32>
    %c0_62 = arith.constant 0 : index
    %c1_63 = arith.constant 1 : index
    %c0_64 = arith.constant 0 : index
    %c0_65 = arith.constant 0 : index
    %78 = vector.load %arg9[%c0_62, %c1_63, %c0_64, %c0_65] : memref<1x2x1x16xf32, #tpu.memory_space<vmem>>, vector<1x1x1x16xf32>
    %79 = vector.shape_cast %78 : vector<1x1x1x16xf32> to vector<1x16xf32>
    %80 = vector.broadcast %79 : vector<1x16xf32> to vector<16x16xf32>
    %81 = arith.addf %77, %80 : vector<16x16xf32>
    %82 = vector.shape_cast %65 : vector<16x16xf32> to vector<2x8x16xf32>
    %83 = vector.shape_cast %73 : vector<16x16xf32> to vector<2x8x16xf32>
    %84 = vector.shape_cast %81 : vector<16x16xf32> to vector<2x8x16xf32>
    %85 = arith.truncf %82 : vector<2x8x16xf32> to vector<2x8x16xbf16>
    %86 = arith.truncf %83 : vector<2x8x16xf32> to vector<2x8x16xbf16>
    "tpu.trace_start"() <{level = 10 : i32, message = "bqd,bkd->bqk"}> : () -> ()
    %cst_66 = arith.constant dense<0.000000e+00> : vector<2x8x8xf32>
    %87 = tpu.matmul %85, %86, %cst_66 {dimension_numbers = #tpu.dot_dimension_numbers<[2], [2], [1], [1], [0, 0, 0, 1, 1, 1], [0], [0]>} : vector<2x8x16xbf16>, vector<2x8x16xbf16>, vector<2x8x8xf32> -> vector<2x8x8xf32>
    "tpu.trace_stop"() : () -> ()
    %cst_67 = arith.constant dense<0xFF800000> : vector<2x8xf32>
    %88 = vector.multi_reduction <maximumf>, %87, %cst_67 [2] : vector<2x8x8xf32> to vector<2x8xf32>
    %89 = vector.shape_cast %88 : vector<2x8xf32> to vector<2x8x1xf32>
    %90 = vector.broadcast %89 : vector<2x8x1xf32> to vector<2x8x8xf32>
    %91 = arith.subf %87, %90 : vector<2x8x8xf32>
    %92 = math.exp %91 : vector<2x8x8xf32>
    %cst_68 = arith.constant dense<0.000000e+00> : vector<2x8xf32>
    %93 = vector.multi_reduction <add>, %92, %cst_68 [2] : vector<2x8x8xf32> to vector<2x8xf32>
    %94 = vector.shape_cast %93 : vector<2x8xf32> to vector<2x8x1xf32>
    %95 = tpu.reciprocal %94 {approx = true} : vector<2x8x1xf32> -> vector<2x8x1xf32>
    %96 = vector.broadcast %95 : vector<2x8x1xf32> to vector<2x8x8xf32>
    %97 = arith.mulf %92, %96 : vector<2x8x8xf32>
    %98 = arith.truncf %97 : vector<2x8x8xf32> to vector<2x8x8xbf16>
    %99 = arith.truncf %84 : vector<2x8x16xf32> to vector<2x8x16xbf16>
    "tpu.trace_start"() <{level = 10 : i32, message = "bqk,bkd->bqd"}> : () -> ()
    %cst_69 = arith.constant dense<0.000000e+00> : vector<2x8x16xf32>
    %100 = tpu.matmul %98, %99, %cst_69 {dimension_numbers = #tpu.dot_dimension_numbers<[2], [1], [1], [2], [0, 0, 0, 1, 1, 2], [0], [0]>} : vector<2x8x8xbf16>, vector<2x8x16xbf16>, vector<2x8x16xf32> -> vector<2x8x16xf32>
    "tpu.trace_stop"() : () -> ()
    %101 = vector.shape_cast %100 : vector<2x8x16xf32> to vector<16x16xf32>
    %c0_70 = arith.constant 0 : index
    %c1_71 = arith.constant 1 : index
    %c0_72 = arith.constant 0 : index
    %c0_73 = arith.constant 0 : index
    %102 = vector.load %arg10[%c0_70, %c1_71, %c0_72, %c0_73] : memref<1x2x16x32xbf16, #tpu.memory_space<vmem>>, vector<1x1x16x32xbf16>
    %103 = vector.shape_cast %102 : vector<1x1x16x32xbf16> to vector<16x32xbf16>
    %104 = arith.truncf %101 : vector<16x16xf32> to vector<16x16xbf16>
    %cst_74 = arith.constant dense<0.000000e+00> : vector<16x32xf32>
    %105 = tpu.matmul %104, %103, %cst_74 {dimension_numbers = #tpu.dot_dimension_numbers<[1], [0], [0], [1], [0, 0, 1, 1], [], []>} : vector<16x16xbf16>, vector<16x32xbf16>, vector<16x32xf32> -> vector<16x32xf32>
    %106 = arith.addf %55, %105 : vector<16x32xf32>
    %c0_75 = arith.constant 0 : index
    %c0_76 = arith.constant 0 : index
    %c0_77 = arith.constant 0 : index
    %107 = vector.load %arg11[%c0_75, %c0_76, %c0_77] : memref<1x1x32xf32, #tpu.memory_space<vmem>>, vector<1x1x32xf32>
    %108 = vector.shape_cast %107 : vector<1x1x32xf32> to vector<1x32xf32>
    %109 = vector.broadcast %108 : vector<1x32xf32> to vector<16x32xf32>
    %110 = arith.addf %106, %109 : vector<16x32xf32>
    %111 = arith.addf %110, %3 : vector<16x32xf32>
    %c0_78 = arith.constant 0 : index
    %c0_79 = arith.constant 0 : index
    %c0_80 = arith.constant 0 : index
    %112 = vector.load %arg12[%c0_78, %c0_79, %c0_80] : memref<1x1x32xf32, #tpu.memory_space<vmem>>, vector<1x1x32xf32>
    %113 = vector.shape_cast %112 : vector<1x1x32xf32> to vector<1x32xf32>
    %c0_81 = arith.constant 0 : index
    %c0_82 = arith.constant 0 : index
    %c0_83 = arith.constant 0 : index
    %114 = vector.load %arg13[%c0_81, %c0_82, %c0_83] : memref<1x1x32xf32, #tpu.memory_space<vmem>>, vector<1x1x32xf32>
    %115 = vector.shape_cast %114 : vector<1x1x32xf32> to vector<1x32xf32>
    %cst_84 = arith.constant dense<0.000000e+00> : vector<16xf32>
    %116 = vector.multi_reduction <add>, %111, %cst_84 [1] : vector<16x32xf32> to vector<16xf32>
    %117 = vector.shape_cast %116 : vector<16xf32> to vector<16x1xf32>
    %cst_85 = arith.constant 3.200000e+01 : f32
    %118 = vector.broadcast %cst_85 : f32 to vector<16x1xf32>
    %119 = arith.divf %117, %118 : vector<16x1xf32>
    %120 = vector.broadcast %119 : vector<16x1xf32> to vector<16x32xf32>
    %121 = arith.subf %111, %120 : vector<16x32xf32>
    %122 = arith.mulf %121, %121 : vector<16x32xf32>
    %cst_86 = arith.constant dense<0.000000e+00> : vector<16xf32>
    %123 = vector.multi_reduction <add>, %122, %cst_86 [1] : vector<16x32xf32> to vector<16xf32>
    %124 = vector.shape_cast %123 : vector<16xf32> to vector<16x1xf32>
    %cst_87 = arith.constant 3.200000e+01 : f32
    %125 = vector.broadcast %cst_87 : f32 to vector<16x1xf32>
    %126 = arith.divf %124, %125 : vector<16x1xf32>
    %127 = vector.broadcast %119 : vector<16x1xf32> to vector<16x32xf32>
    %128 = arith.subf %111, %127 : vector<16x32xf32>
    %cst_88 = arith.constant 9.99999996E-13 : f32
    %129 = vector.broadcast %cst_88 : f32 to vector<16x1xf32>
    %130 = arith.addf %126, %129 : vector<16x1xf32>
    %131 = math.rsqrt %130 : vector<16x1xf32>
    %132 = vector.broadcast %131 : vector<16x1xf32> to vector<16x32xf32>
    %133 = arith.mulf %128, %132 : vector<16x32xf32>
    %134 = vector.broadcast %113 : vector<1x32xf32> to vector<16x32xf32>
    %135 = arith.mulf %133, %134 : vector<16x32xf32>
    %136 = vector.broadcast %115 : vector<1x32xf32> to vector<16x32xf32>
    %137 = arith.addf %135, %136 : vector<16x32xf32>
    %c0_89 = arith.constant 0 : index
    %c0_90 = arith.constant 0 : index
    %c0_91 = arith.constant 0 : index
    %138 = vector.load %arg14[%c0_89, %c0_90, %c0_91] : memref<1x32x64xbf16, #tpu.memory_space<vmem>>, vector<1x32x64xbf16>
    %139 = vector.shape_cast %138 : vector<1x32x64xbf16> to vector<32x64xbf16>
    %140 = arith.truncf %137 : vector<16x32xf32> to vector<16x32xbf16>
    %cst_92 = arith.constant dense<0.000000e+00> : vector<16x64xf32>
    %141 = tpu.matmul %140, %139, %cst_92 {dimension_numbers = #tpu.dot_dimension_numbers<[1], [0], [0], [1], [0, 0, 1, 1], [], []>} : vector<16x32xbf16>, vector<32x64xbf16>, vector<16x64xf32> -> vector<16x64xf32>
    %c0_93 = arith.constant 0 : index
    %c0_94 = arith.constant 0 : index
    %c0_95 = arith.constant 0 : index
    %142 = vector.load %arg15[%c0_93, %c0_94, %c0_95] : memref<1x1x64xf32, #tpu.memory_space<vmem>>, vector<1x1x64xf32>
    %143 = vector.shape_cast %142 : vector<1x1x64xf32> to vector<1x64xf32>
    %144 = vector.broadcast %143 : vector<1x64xf32> to vector<16x64xf32>
    %145 = arith.addf %141, %144 : vector<16x64xf32>
    %cst_96 = arith.constant 5.000000e-01 : f32
    %146 = vector.broadcast %cst_96 : f32 to vector<16x64xf32>
    %147 = arith.mulf %146, %145 : vector<16x64xf32>
    %cst_97 = arith.constant 0.707106769 : f32
    %148 = vector.broadcast %cst_97 : f32 to vector<16x64xf32>
    %149 = arith.mulf %145, %148 : vector<16x64xf32>
    %150 = math.erf %149 : vector<16x64xf32>
    %cst_98 = arith.constant 1.000000e+00 : f32
    %151 = vector.broadcast %cst_98 : f32 to vector<16x64xf32>
    %152 = arith.addf %151, %150 : vector<16x64xf32>
    %153 = arith.mulf %147, %152 : vector<16x64xf32>
    %c0_99 = arith.constant 0 : index
    %c0_100 = arith.constant 0 : index
    %c0_101 = arith.constant 0 : index
    %154 = vector.load %arg16[%c0_99, %c0_100, %c0_101] : memref<1x64x32xbf16, #tpu.memory_space<vmem>>, vector<1x64x32xbf16>
    %155 = vector.shape_cast %154 : vector<1x64x32xbf16> to vector<64x32xbf16>
    %156 = arith.truncf %153 : vector<16x64xf32> to vector<16x64xbf16>
    %cst_102 = arith.constant dense<0.000000e+00> : vector<16x32xf32>
    %157 = tpu.matmul %156, %155, %cst_102 {dimension_numbers = #tpu.dot_dimension_numbers<[1], [0], [0], [1], [0, 0, 1, 1], [], []>} : vector<16x64xbf16>, vector<64x32xbf16>, vector<16x32xf32> -> vector<16x32xf32>
    %c0_103 = arith.constant 0 : index
    %c0_104 = arith.constant 0 : index
    %c0_105 = arith.constant 0 : index
    %158 = vector.load %arg17[%c0_103, %c0_104, %c0_105] : memref<1x1x32xf32, #tpu.memory_space<vmem>>, vector<1x1x32xf32>
    %159 = vector.shape_cast %158 : vector<1x1x32xf32> to vector<1x32xf32>
    %160 = vector.broadcast %159 : vector<1x32xf32> to vector<16x32xf32>
    %161 = arith.addf %157, %160 : vector<16x32xf32>
    %162 = arith.addf %161, %137 : vector<16x32xf32>
    %c0_106 = arith.constant 0 : index
    %c0_107 = arith.constant 0 : index
    %c0_108 = arith.constant 0 : index
    %163 = vector.load %arg18[%c0_106, %c0_107, %c0_108] : memref<1x1x32xf32, #tpu.memory_space<vmem>>, vector<1x1x32xf32>
    %164 = vector.shape_cast %163 : vector<1x1x32xf32> to vector<1x32xf32>
    %c0_109 = arith.constant 0 : index
    %c0_110 = arith.constant 0 : index
    %c0_111 = arith.constant 0 : index
    %165 = vector.load %arg19[%c0_109, %c0_110, %c0_111] : memref<1x1x32xf32, #tpu.memory_space<vmem>>, vector<1x1x32xf32>
    %166 = vector.shape_cast %165 : vector<1x1x32xf32> to vector<1x32xf32>
    %cst_112 = arith.constant dense<0.000000e+00> : vector<16xf32>
    %167 = vector.multi_reduction <add>, %162, %cst_112 [1] : vector<16x32xf32> to vector<16xf32>
    %168 = vector.shape_cast %167 : vector<16xf32> to vector<16x1xf32>
    %cst_113 = arith.constant 3.200000e+01 : f32
    %169 = vector.broadcast %cst_113 : f32 to vector<16x1xf32>
    %170 = arith.divf %168, %169 : vector<16x1xf32>
    %171 = vector.broadcast %170 : vector<16x1xf32> to vector<16x32xf32>
    %172 = arith.subf %162, %171 : vector<16x32xf32>
    %173 = arith.mulf %172, %172 : vector<16x32xf32>
    %cst_114 = arith.constant dense<0.000000e+00> : vector<16xf32>
    %174 = vector.multi_reduction <add>, %173, %cst_114 [1] : vector<16x32xf32> to vector<16xf32>
    %175 = vector.shape_cast %174 : vector<16xf32> to vector<16x1xf32>
    %cst_115 = arith.constant 3.200000e+01 : f32
    %176 = vector.broadcast %cst_115 : f32 to vector<16x1xf32>
    %177 = arith.divf %175, %176 : vector<16x1xf32>
    %178 = vector.broadcast %170 : vector<16x1xf32> to vector<16x32xf32>
    %179 = arith.subf %162, %178 : vector<16x32xf32>
    %cst_116 = arith.constant 9.99999996E-13 : f32
    %180 = vector.broadcast %cst_116 : f32 to vector<16x1xf32>
    %181 = arith.addf %177, %180 : vector<16x1xf32>
    %182 = math.rsqrt %181 : vector<16x1xf32>
    %183 = vector.broadcast %182 : vector<16x1xf32> to vector<16x32xf32>
    %184 = arith.mulf %179, %183 : vector<16x32xf32>
    %185 = vector.broadcast %164 : vector<1x32xf32> to vector<16x32xf32>
    %186 = arith.mulf %184, %185 : vector<16x32xf32>
    %187 = vector.broadcast %166 : vector<1x32xf32> to vector<16x32xf32>
    %188 = arith.addf %186, %187 : vector<16x32xf32>
    %c0_117 = arith.constant 0 : index
    %c0_118 = arith.constant 0 : index
    %189 = vector.load %arg27[%c0_117, %c0_118] : memref<16x32xf32, #tpu.memory_space<vmem>>, vector<16x32xf32>
    tpu.vector_store %arg27[%c0_117, %c0_118], %188 {strides = array<i32>} : memref<16x32xf32, #tpu.memory_space<vmem>>, vector<16x32xf32>,
    %c1_i32 = arith.constant 1 : i32
    %190 = arith.cmpi eq, %arg0, %c1_i32 : i32
    %191 = arith.extui %190 : i1 to i32
    %c0_i32_119 = arith.constant 0 : i32
    %192 = arith.cmpi ne, %191, %c0_i32_119 : i32
    scf.if %192 {
      %193 = vector.shape_cast %188 : vector<16x32xf32> to vector<2x8x32xf32>
      %194 = vector.extract_strided_slice %193 {offsets = [0, 0, 0], sizes = [2, 1, 32], strides = [1, 1, 1]} : vector<2x8x32xf32> to vector<2x1x32xf32>
      %195 = vector.shape_cast %194 : vector<2x1x32xf32> to vector<2x32xf32>
      %c0_120 = arith.constant 0 : index
      %c0_121 = arith.constant 0 : index
      %196 = vector.load %arg20[%c0_120, %c0_121] : memref<32x32xbf16, #tpu.memory_space<vmem>>, vector<32x32xbf16>
      %197 = arith.truncf %195 : vector<2x32xf32> to vector<2x32xbf16>
      %cst_122 = arith.constant dense<0.000000e+00> : vector<2x32xf32>
      %198 = tpu.matmul %197, %196, %cst_122 {dimension_numbers = #tpu.dot_dimension_numbers<[1], [0], [0], [1], [0, 0, 1, 1], [], []>} : vector<2x32xbf16>, vector<32x32xbf16>, vector<2x32xf32> -> vector<2x32xf32>
      %c0_123 = arith.constant 0 : index
      %c0_124 = arith.constant 0 : index
      %199 = vector.load %arg21[%c0_123, %c0_124] : memref<1x32xf32, #tpu.memory_space<vmem>>, vector<1x32xf32>
      %200 = vector.broadcast %199 : vector<1x32xf32> to vector<2x32xf32>
      %201 = arith.addf %198, %200 : vector<2x32xf32>
      %cst_125 = arith.constant 0.000000e+00 : f32
      %202 = vector.broadcast %cst_125 : f32 to vector<2x32xf32>
      %203 = arith.maximumf %201, %202 : vector<2x32xf32>
      %c0_126 = arith.constant 0 : index
      %c0_127 = arith.constant 0 : index
      %204 = vector.load %arg22[%c0_126, %c0_127] : memref<32x2xbf16, #tpu.memory_space<vmem>>, vector<32x2xbf16>
      %205 = arith.truncf %203 : vector<2x32xf32> to vector<2x32xbf16>
      %cst_128 = arith.constant dense<0.000000e+00> : vector<2x2xf32>
      %206 = tpu.matmul %205, %204, %cst_128 {dimension_numbers = #tpu.dot_dimension_numbers<[1], [0], [0], [1], [0, 0, 1, 1], [], []>} : vector<2x32xbf16>, vector<32x2xbf16>, vector<2x2xf32> -> vector<2x2xf32>
      %c0_129 = arith.constant 0 : index
      %c0_130 = arith.constant 0 : index
      %207 = vector.load %arg23[%c0_129, %c0_130] : memref<1x2xf32, #tpu.memory_space<vmem>>, vector<1x2xf32>
      %208 = vector.broadcast %207 : vector<1x2xf32> to vector<2x2xf32>
      %209 = arith.addf %206, %208 : vector<2x2xf32>
      %c0_131 = arith.constant 0 : index
      %c0_132 = arith.constant 0 : index
      %210 = vector.load %arg25[%c0_131, %c0_132] : memref<2x2xf32, #tpu.memory_space<vmem>>, vector<2x2xf32>
      tpu.vector_store %arg25[%c0_131, %c0_132], %209 {strides = array<i32>} : memref<2x2xf32, #tpu.memory_space<vmem>>, vector<2x2xf32>,
      %cst_133 = arith.constant dense<0xFF800000> : vector<2xf32>
      %211 = vector.multi_reduction <maximumf>, %209, %cst_133 [1] : vector<2x2xf32> to vector<2xf32>
      %212 = vector.shape_cast %211 : vector<2xf32> to vector<2x1xf32>
      %213 = vector.broadcast %212 : vector<2x1xf32> to vector<2x2xf32>
      %214 = arith.subf %209, %213 : vector<2x2xf32>
      %215 = math.exp %214 : vector<2x2xf32>
      %cst_134 = arith.constant dense<0.000000e+00> : vector<2xf32>
      %216 = vector.multi_reduction <add>, %215, %cst_134 [1] : vector<2x2xf32> to vector<2xf32>
      %217 = vector.shape_cast %216 : vector<2xf32> to vector<2x1xf32>
      %218 = math.log %217 : vector<2x1xf32>
      %219 = arith.addf %212, %218 : vector<2x1xf32>
      %220 = tpu.iota {dimensions = array<i32: 1>} : vector<2x2xi32>
      %c0_135 = arith.constant 0 : index
      %c0_136 = arith.constant 0 : index
      %221 = vector.load %arg24[%c0_135, %c0_136] : memref<2x1xi32, #tpu.memory_space<vmem>>, vector<2x1xi32>
      %222 = vector.broadcast %221 : vector<2x1xi32> to vector<2x2xi32>
      %223 = arith.cmpi eq, %220, %222 : vector<2x2xi32>
      %224 = arith.extui %223 : vector<2x2xi1> to vector<2x2xi32>
      %225 = arith.sitofp %224 : vector<2x2xi32> to vector<2x2xf32>
      %226 = arith.mulf %225, %209 : vector<2x2xf32>
      %cst_137 = arith.constant dense<0.000000e+00> : vector<2xf32>
      %227 = vector.multi_reduction <add>, %226, %cst_137 [1] : vector<2x2xf32> to vector<2xf32>
      %228 = vector.shape_cast %227 : vector<2xf32> to vector<2x1xf32>
      %229 = arith.subf %219, %228 : vector<2x1xf32>
      %230 = vector.shape_cast %229 : vector<2x1xf32> to vector<1x2x1xf32>
      %cst_138 = arith.constant dense<0.000000e+00> : vector<1xf32>
      %231 = vector.multi_reduction <add>, %230, %cst_138 [1, 2] : vector<1x2x1xf32> to vector<1xf32>
      %232 = vector.shape_cast %231 : vector<1xf32> to vector<1x1x1xf32>
      %233 = vector.extract %232[0, 0, 0] : f32 from vector<1x1x1xf32>
      %234 = vector.broadcast %233 : f32 to vector<1x1xf32>
      %cst_139 = arith.constant 5.000000e-01 : f32
      %235 = vector.broadcast %cst_139 : f32 to vector<1x1xf32>
      %236 = arith.mulf %234, %235 : vector<1x1xf32>
      %c0_140 = arith.constant 0 : index
      %c0_141 = arith.constant 0 : index
      %237 = vector.load %arg26[%c0_140, %c0_141] : memref<1x1xf32, #tpu.memory_space<vmem>>, vector<1x1xf32>
      tpu.vector_store %arg26[%c0_140, %c0_141], %236 {strides = array<i32>} : memref<1x1xf32, #tpu.memory_space<vmem>>, vector<1x1xf32>,
    } else {
    }
    return
  }
  func.func @transform_0(%arg0: i32) -> (i32, i32) {
    %c0_i32 = arith.constant 0 : i32
    %c0_i32_0 = arith.constant 0 : i32
    %c0_i32_1 = arith.constant 0 : i32
    return %c0_i32, %c0_i32_0 : i32, i32
  }
  func.func @transform_1(%arg0: i32) -> (i32, i32) {
    %c0_i32 = arith.constant 0 : i32
    %c0_i32_0 = arith.constant 0 : i32
    %c0_i32_1 = arith.constant 0 : i32
    return %c0_i32, %c0_i32_0 : i32, i32
  }
  func.func @transform_2(%arg0: i32) -> (i32, i32) {
    %c0_i32 = arith.constant 0 : i32
    %c0_i32_0 = arith.constant 0 : i32
    %c0_i32_1 = arith.constant 0 : i32
    return %c0_i32, %c0_i32_0 : i32, i32
  }
  func.func @transform_3(%arg0: i32) -> (i32, i32, i32, i32) {
    %c0_i32 = arith.constant 0 : i32
    %c0_i32_0 = arith.constant 0 : i32
    %c0_i32_1 = arith.constant 0 : i32
    %c0_i32_2 = arith.constant 0 : i32
    return %arg0, %c0_i32, %c0_i32_0, %c0_i32_1 : i32, i32, i32, i32
  }
  func.func @transform_4(%arg0: i32) -> (i32, i32, i32, i32) {
    %c0_i32 = arith.constant 0 : i32
    %c0_i32_0 = arith.constant 0 : i32
    %c0_i32_1 = arith.constant 0 : i32
    %c0_i32_2 = arith.constant 0 : i32
    return %arg0, %c0_i32, %c0_i32_0, %c0_i32_1 : i32, i32, i32, i32
  }
  func.func @transform_5(%arg0: i32) -> (i32, i32, i32, i32) {
    %c0_i32 = arith.constant 0 : i32
    %c0_i32_0 = arith.constant 0 : i32
    %c0_i32_1 = arith.constant 0 : i32
    %c0_i32_2 = arith.constant 0 : i32
    return %arg0, %c0_i32, %c0_i32_0, %c0_i32_1 : i32, i32, i32, i32
  }
  func.func @transform_6(%arg0: i32) -> (i32, i32, i32, i32) {
    %c0_i32 = arith.constant 0 : i32
    %c0_i32_0 = arith.constant 0 : i32
    %c0_i32_1 = arith.constant 0 : i32
    %c0_i32_2 = arith.constant 0 : i32
    return %arg0, %c0_i32, %c0_i32_0, %c0_i32_1 : i32, i32, i32, i32
  }
  func.func @transform_7(%arg0: i32) -> (i32, i32, i32, i32) {
    %c0_i32 = arith.constant 0 : i32
    %c0_i32_0 = arith.constant 0 : i32
    %c0_i32_1 = arith.constant 0 : i32
    %c0_i32_2 = arith.constant 0 : i32
    return %arg0, %c0_i32, %c0_i32_0, %c0_i32_1 : i32, i32, i32, i32
  }
  func.func @transform_8(%arg0: i32) -> (i32, i32, i32, i32) {
    %c0_i32 = arith.constant 0 : i32
    %c0_i32_0 = arith.constant 0 : i32
    %c0_i32_1 = arith.constant 0 : i32
    %c0_i32_2 = arith.constant 0 : i32
    return %arg0, %c0_i32, %c0_i32_0, %c0_i32_1 : i32, i32, i32, i32
  }
  func.func @transform_9(%arg0: i32) -> (i32, i32, i32, i32) {
    %c0_i32 = arith.constant 0 : i32
    %c0_i32_0 = arith.constant 0 : i32
    %c0_i32_1 = arith.constant 0 : i32
    %c0_i32_2 = arith.constant 0 : i32
    return %arg0, %c0_i32, %c0_i32_0, %c0_i32_1 : i32, i32, i32, i32
  }
  func.func @transform_10(%arg0: i32) -> (i32, i32, i32) {
    %c0_i32 = arith.constant 0 : i32
    %c0_i32_0 = arith.constant 0 : i32
    %c0_i32_1 = arith.constant 0 : i32
    return %arg0, %c0_i32, %c0_i32_0 : i32, i32, i32
  }
  func.func @transform_11(%arg0: i32) -> (i32, i32, i32) {
    %c0_i32 = arith.constant 0 : i32
    %c0_i32_0 = arith.constant 0 : i32
    %c0_i32_1 = arith.constant 0 : i32
    return %arg0, %c0_i32, %c0_i32_0 : i32, i32, i32
  }
  func.func @transform_12(%arg0: i32) -> (i32, i32, i32) {
    %c0_i32 = arith.constant 0 : i32
    %c0_i32_0 = arith.constant 0 : i32
    %c0_i32_1 = arith.constant 0 : i32
    return %arg0, %c0_i32, %c0_i32_0 : i32, i32, i32
  }
  func.func @transform_13(%arg0: i32) -> (i32, i32, i32) {
    %c0_i32 = arith.constant 0 : i32
    %c0_i32_0 = arith.constant 0 : i32
    %c0_i32_1 = arith.constant 0 : i32
    return %arg0, %c0_i32, %c0_i32_0 : i32, i32, i32
  }
  func.func @transform_14(%arg0: i32) -> (i32, i32, i32) {
    %c0_i32 = arith.constant 0 : i32
    %c0_i32_0 = arith.constant 0 : i32
    %c0_i32_1 = arith.constant 0 : i32
    return %arg0, %c0_i32, %c0_i32_0 : i32, i32, i32
  }
  func.func @transform_15(%arg0: i32) -> (i32, i32, i32) {
    %c0_i32 = arith.constant 0 : i32
    %c0_i32_0 = arith.constant 0 : i32
    %c0_i32_1 = arith.constant 0 : i32
    return %arg0, %c0_i32, %c0_i32_0 : i32, i32, i32
  }
  func.func @transform_16(%arg0: i32) -> (i32, i32, i32) {
    %c0_i32 = arith.constant 0 : i32
    %c0_i32_0 = arith.constant 0 : i32
    %c0_i32_1 = arith.constant 0 : i32
    return %arg0, %c0_i32, %c0_i32_0 : i32, i32, i32
  }
  func.func @transform_17(%arg0: i32) -> (i32, i32, i32) {
    %c0_i32 = arith.constant 0 : i32
    %c0_i32_0 = arith.constant 0 : i32
    %c0_i32_1 = arith.constant 0 : i32
    return %arg0, %c0_i32, %c0_i32_0 : i32, i32, i32
  }
  func.func @transform_18(%arg0: i32) -> (i32, i32, i32) {
    %c0_i32 = arith.constant 0 : i32
    %c0_i32_0 = arith.constant 0 : i32
    %c0_i32_1 = arith.constant 0 : i32
    return %arg0, %c0_i32, %c0_i32_0 : i32, i32, i32
  }
  func.func @transform_19(%arg0: i32) -> (i32, i32) {
    %c0_i32 = arith.constant 0 : i32
    %c0_i32_0 = arith.constant 0 : i32
    %c0_i32_1 = arith.constant 0 : i32
    return %c0_i32, %c0_i32_0 : i32, i32
  }
  func.func @transform_20(%arg0: i32) -> (i32, i32) {
    %c0_i32 = arith.constant 0 : i32
    %c0_i32_0 = arith.constant 0 : i32
    %c0_i32_1 = arith.constant 0 : i32
    return %c0_i32, %c0_i32_0 : i32, i32
  }
  func.func @transform_21(%arg0: i32) -> (i32, i32) {
    %c0_i32 = arith.constant 0 : i32
    %c0_i32_0 = arith.constant 0 : i32
    %c0_i32_1 = arith.constant 0 : i32
    return %c0_i32, %c0_i32_0 : i32, i32
  }
  func.func @transform_22(%arg0: i32) -> (i32, i32) {
    %c0_i32 = arith.constant 0 : i32
    %c0_i32_0 = arith.constant 0 : i32
    %c0_i32_1 = arith.constant 0 : i32
    return %c0_i32, %c0_i32_0 : i32, i32
  }
  func.func @transform_23(%arg0: i32) -> (i32, i32) {
    %c0_i32 = arith.constant 0 : i32
    %c0_i32_0 = arith.constant 0 : i32
    %c0_i32_1 = arith.constant 0 : i32
    return %c0_i32, %c0_i32_0 : i32, i32
  }
  func.func @transform_24(%arg0: i32) -> (i32, i32) {
    %c0_i32 = arith.constant 0 : i32
    %c0_i32_0 = arith.constant 0 : i32
    %c0_i32_1 = arith.constant 0 : i32
    return %c0_i32, %c0_i32_0 : i32, i32
  }
  func.func @transform_25(%arg0: i32) -> (i32, i32) {
    %c0_i32 = arith.constant 0 : i32
    %c0_i32_0 = arith.constant 0 : i32
    %c0_i32_1 = arith.constant 0 : i32
    return %c0_i32, %c0_i32_0 : i32, i32
  }
}

</mosaic_0001>

<llo_original>
// kernel: bert_forward.1
$region0: #{bert_forward.1}
  #allocation0 [shape = 'u32[]', space=smem, size = 0x4, offset = 0x4, fixed_abs, tag = 'smem constant byte address 0x4 - core index']
  #allocation1 [shape = 'u32[144,128]{1,0:T(1,128)}', space=vmem, size = 0x12000, scoped, tag = 'internal scratch']
  #allocation2 [shape = 'f32[16,32]{1,0:T(8,128)}', space=vmem, size = 0x2000, scoped, tag = 'scratch operand']
  %s0 = inlined_call_operand.vmem [shape: f32[16,32], index: 0, kind: input, shape index: {}]
  %s1 = inlined_call_operand.vmem [shape: f32[1,32], index: 1, kind: input, shape index: {}]
  %s2 = inlined_call_operand.vmem [shape: f32[1,32], index: 2, kind: input, shape index: {}]
  %s3 = inlined_call_operand.vmem [shape: bf16[2,2,32,16], index: 3, kind: input, shape index: {}]
  %s4 = inlined_call_operand.vmem [shape: f32[2,2,1,16], index: 4, kind: input, shape index: {}]
  %s5 = inlined_call_operand.vmem [shape: bf16[2,2,32,16], index: 5, kind: input, shape index: {}]
  %s6 = inlined_call_operand.vmem [shape: f32[2,2,1,16], index: 6, kind: input, shape index: {}]
  %s7 = inlined_call_operand.vmem [shape: bf16[2,2,32,16], index: 7, kind: input, shape index: {}]
  %s8 = inlined_call_operand.vmem [shape: f32[2,2,1,16], index: 8, kind: input, shape index: {}]
  %s9 = inlined_call_operand.vmem [shape: bf16[2,2,16,32], index: 9, kind: input, shape index: {}]
  %s10 = inlined_call_operand.vmem [shape: f32[2,1,32], index: 10, kind: input, shape index: {}]
  %s11 = inlined_call_operand.vmem [shape: f32[2,1,32], index: 11, kind: input, shape index: {}]
  %s12 = inlined_call_operand.vmem [shape: f32[2,1,32], index: 12, kind: input, shape index: {}]
  %s13 = inlined_call_operand.vmem [shape: bf16[2,32,64], index: 13, kind: input, shape index: {}]
  %s14 = inlined_call_operand.vmem [shape: f32[2,1,64], index: 14, kind: input, shape index: {}]
  %s15 = inlined_call_operand.vmem [shape: bf16[2,64,32], index: 15, kind: input, shape index: {}]
  %s16 = inlined_call_operand.vmem [shape: f32[2,1,32], index: 16, kind: input, shape index: {}]
  %s17 = inlined_call_operand.vmem [shape: f32[2,1,32], index: 17, kind: input, shape index: {}]
  %s18 = inlined_call_operand.vmem [shape: f32[2,1,32], index: 18, kind: input, shape index: {}]
  %s19 = inlined_call_operand.vmem [shape: bf16[32,32], index: 19, kind: input, shape index: {}]
  %s20 = inlined_call_operand.vmem [shape: f32[1,32], index: 20, kind: input, shape index: {}]
  %s21 = inlined_call_operand.vmem [shape: bf16[32,2], index: 21, kind: input, shape index: {}]
  %s22 = inlined_call_operand.vmem [shape: f32[1,2], index: 22, kind: input, shape index: {}]
  %s23 = inlined_call_operand.vmem [shape: s32[2,1], index: 23, kind: input, shape index: {}]
  %s24 = inlined_call_operand.hbm [shape: f32[2,2], index: 24, kind: output, shape index: {0}]
  %s25 = inlined_call_operand.hbm [shape: f32[1,1], index: 25, kind: output, shape index: {1}]
  %26 = xla_tuple %s24, %s25
  %s27 = sld [smem:[#allocation0]]
  $region145: #{bert_forward.1} parent=0
    _
  %s29 = ssub.s32 1, %s27
  %s30 = scalar_select 0, %s29, %s27
  $region1: #{bert_forward.1} parent=0
    #allocation3 [shape = 'u8[1024]{0}', space=vmem, size = 0x400, scoped, tag = 'output window, operand 0, single buffered']
    #allocation4 [shape = 's32[2]{0}', space=sflag, size = 0x8, scoped, tag = 'scoped memory for bert_forward.1']
    #allocation5 [shape = 'u8[512]{0}', space=vmem, size = 0x400, scoped, tag = 'output window, operand 1, single buffered']
    #allocation6 [shape = 's32[1]{0}', space=sflag, size = 0x4, scoped, tag = 'scoped memory for bert_forward.1']
    %31 = vsyncpa [#allocation4], 0
    %32 = vsyncpa [#allocation6], 0
    loop: start=0, step=1, limit=4
    $region2: #{bert_forward.1} parent=1 // loop_pre_header
      _
    $region3: #{bert_forward.1} parent=1 // loop_header
      %s34 = sphi 0, %s38
      %p35 = scmp.ge.s32.totalorder %s34, 4
      %s42 = sphi 0, %s42
      %s44 = sphi 0, %s42
      %s45 = sphi 0, %s44
      %s59 = sphi 0, %s45
      %s63 = sphi 0, %s63
      %s65 = sphi 0, %s63
      %s66 = sphi 0, %s65
      %s80 = sphi 0, %s66
      %s84 = sphi 0, %s84
      %s86 = sphi 0, %s84
      %s87 = sphi 0, %s86
      %s101 = sphi 0, %s87
      %s107 = sphi 0, %s109
      %s110 = sphi 0, %s107
      %s111 = sphi 0, %s110
      %s127 = sphi 0, %s111
      %s133 = sphi 0, %s135
      %s136 = sphi 0, %s133
      %s137 = sphi 0, %s136
      %s153 = sphi 0, %s137
      %s159 = sphi 0, %s161
      %s162 = sphi 0, %s159
      %s163 = sphi 0, %s162
      %s179 = sphi 0, %s163
      %s185 = sphi 0, %s187
      %s188 = sphi 0, %s185
      %s189 = sphi 0, %s188
      %s205 = sphi 0, %s189
      %s211 = sphi 0, %s213
      %s214 = sphi 0, %s211
      %s215 = sphi 0, %s214
      %s231 = sphi 0, %s215
      %s237 = sphi 0, %s239
      %s240 = sphi 0, %s237
      %s241 = sphi 0, %s240
      %s257 = sphi 0, %s241
      %s263 = sphi 0, %s265
      %s266 = sphi 0, %s263
      %s267 = sphi 0, %s266
      %s283 = sphi 0, %s267
      %s289 = sphi 0, %s291
      %s292 = sphi 0, %s289
      %s293 = sphi 0, %s292
      %s309 = sphi 0, %s293
      %s315 = sphi 0, %s317
      %s318 = sphi 0, %s315
      %s319 = sphi 0, %s318
      %s335 = sphi 0, %s319
      %s341 = sphi 0, %s343
      %s344 = sphi 0, %s341
      %s345 = sphi 0, %s344
      %s361 = sphi 0, %s345
      %s367 = sphi 0, %s369
      %s370 = sphi 0, %s367
      %s371 = sphi 0, %s370
      %s387 = sphi 0, %s371
      %s393 = sphi 0, %s395
      %s396 = sphi 0, %s393
      %s397 = sphi 0, %s396
      %s413 = sphi 0, %s397
      %s419 = sphi 0, %s421
      %s422 = sphi 0, %s419
      %s423 = sphi 0, %s422
      %s439 = sphi 0, %s423
      %s445 = sphi 0, %s447
      %s448 = sphi 0, %s445
      %s449 = sphi 0, %s448
      %s465 = sphi 0, %s449
      %s471 = sphi 0, %s473
      %s474 = sphi 0, %s471
      %s475 = sphi 0, %s474
      %s491 = sphi 0, %s475
      %s497 = sphi 0, %s499
      %s500 = sphi 0, %s497
      %s501 = sphi 0, %s500
      %s517 = sphi 0, %s501
      %s521 = sphi 0, %s521
      %s523 = sphi 0, %s521
      %s524 = sphi 0, %s523
      %s538 = sphi 0, %s524
      %s542 = sphi 0, %s542
      %s544 = sphi 0, %s542
      %s545 = sphi 0, %s544
      %s559 = sphi 0, %s545
      %s563 = sphi 0, %s563
      %s565 = sphi 0, %s563
      %s566 = sphi 0, %s565
      %s580 = sphi 0, %s566
      %s584 = sphi 0, %s584
      %s586 = sphi 0, %s584
      %s587 = sphi 0, %s586
      %s601 = sphi 0, %s587
      %s605 = sphi 0, %s605
      %s607 = sphi 0, %s605
      %s608 = sphi 0, %s607
      %s622 = sphi 0, %s608
      %s626 = sphi 0, %s626
      %s628 = sphi 0, %s626
      %s629 = sphi 0, %s628
      %s643 = sphi 0, %s629
      %s647 = sphi 0, %s647
      %s649 = sphi 0, %s647
      %s650 = sphi 0, %s649
      %s664 = sphi 0, %s650
    $region4: #{bert_forward.1} parent=1 // loop_header_branch
      %37 = sbr.rel (%p35) target = $region8
    $region5: #{bert_forward.1} parent=1 // loop_body
      %s39 = ssub.s32 %s34, 1
      %s40 = ssub.s32 %s34, 2
      %s41 = sadd.s32 %s34, 1
      %s43 = sadd.s32 %s42, 1
      %p46 = scmp.eq.s32.totalorder %s34, 1
      %p47 = scmp.ne.s32.totalorder %s42, %s44
      %p48 = scmp.eq.s32.totalorder %s34, 0
      %p49 = por %p47, %p48
      %p50 = scmp.ne.s32.totalorder %s42, %s44
      %p51 = scmp.eq.s32.totalorder %s39, 1
      %p52 = por %p50, %p51
      %p53 = scmp.ne.s32.totalorder %s44, %s45
      %p54 = scmp.eq.s32.totalorder %s39, 0
      %p55 = por %p53, %p54
      %p56 = scmp.ne.s32.totalorder %s44, %s45
      %p57 = scmp.eq.s32.totalorder %s40, 1
      %p58 = por %p56, %p57
      %p60 = scmp.ne.s32.totalorder %s45, %s59
      %p61 = scmp.eq.s32.totalorder %s40, 0
      %p62 = por %p60, %p61
      %s64 = sadd.s32 %s63, 1
      %p67 = scmp.eq.s32.totalorder %s34, 1
      %p68 = scmp.ne.s32.totalorder %s63, %s65
      %p69 = scmp.eq.s32.totalorder %s34, 0
      %p70 = por %p68, %p69
      %p71 = scmp.ne.s32.totalorder %s63, %s65
      %p72 = scmp.eq.s32.totalorder %s39, 1
      %p73 = por %p71, %p72
      %p74 = scmp.ne.s32.totalorder %s65, %s66
      %p75 = scmp.eq.s32.totalorder %s39, 0
      %p76 = por %p74, %p75
      %p77 = scmp.ne.s32.totalorder %s65, %s66
      %p78 = scmp.eq.s32.totalorder %s40, 1
      %p79 = por %p77, %p78
      %p81 = scmp.ne.s32.totalorder %s66, %s80
      %p82 = scmp.eq.s32.totalorder %s40, 0
      %p83 = por %p81, %p82
      %s85 = sadd.s32 %s84, 1
      %p88 = scmp.eq.s32.totalorder %s34, 1
      %p89 = scmp.ne.s32.totalorder %s84, %s86
      %p90 = scmp.eq.s32.totalorder %s34, 0
      %p91 = por %p89, %p90
      %p92 = scmp.ne.s32.totalorder %s84, %s86
      %p93 = scmp.eq.s32.totalorder %s39, 1
      %p94 = por %p92, %p93
      %p95 = scmp.ne.s32.totalorder %s86, %s87
      %p96 = scmp.eq.s32.totalorder %s39, 0
      %p97 = por %p95, %p96
      %p98 = scmp.ne.s32.totalorder %s86, %s87
      %p99 = scmp.eq.s32.totalorder %s40, 1
      %p100 = por %p98, %p99
      %p102 = scmp.ne.s32.totalorder %s87, %s101
      %p103 = scmp.eq.s32.totalorder %s40, 0
      %p104 = por %p102, %p103
      %s105 = ssub.s32 %s34, %s41
      %p106 = scmp.eq.s32.totalorder %s105, 0
      %s108 = sadd.s32 %s107, 1
      %s109 = scalar_select %p106, %s107, %s108
      %p112 = pneg %p106
      %p113 = scmp.eq.s32.totalorder %s34, 1
      %p114 = por %p112, %p113
      %p115 = scmp.ne.s32.totalorder %s107, %s110
      %p116 = scmp.eq.s32.totalorder %s34, 0
      %p117 = por %p115, %p116
      %p118 = scmp.ne.s32.totalorder %s107, %s110
      %p119 = scmp.eq.s32.totalorder %s39, 1
      %p120 = por %p118, %p119
      %p121 = scmp.ne.s32.totalorder %s110, %s111
      %p122 = scmp.eq.s32.totalorder %s39, 0
      %p123 = por %p121, %p122
      %p124 = scmp.ne.s32.totalorder %s110, %s111
      %p125 = scmp.eq.s32.totalorder %s40, 1
      %p126 = por %p124, %p125
      %p128 = scmp.ne.s32.totalorder %s111, %s127
      %p129 = scmp.eq.s32.totalorder %s40, 0
      %p130 = por %p128, %p129
      %s131 = ssub.s32 %s34, %s41
      %p132 = scmp.eq.s32.totalorder %s131, 0
      %s134 = sadd.s32 %s133, 1
      %s135 = scalar_select %p132, %s133, %s134
      %p138 = pneg %p132
      %p139 = scmp.eq.s32.totalorder %s34, 1
      %p140 = por %p138, %p139
      %p141 = scmp.ne.s32.totalorder %s133, %s136
      %p142 = scmp.eq.s32.totalorder %s34, 0
      %p143 = por %p141, %p142
      %p144 = scmp.ne.s32.totalorder %s133, %s136
      %p145 = scmp.eq.s32.totalorder %s39, 1
      %p146 = por %p144, %p145
      %p147 = scmp.ne.s32.totalorder %s136, %s137
      %p148 = scmp.eq.s32.totalorder %s39, 0
      %p149 = por %p147, %p148
      %p150 = scmp.ne.s32.totalorder %s136, %s137
      %p151 = scmp.eq.s32.totalorder %s40, 1
      %p152 = por %p150, %p151
      %p154 = scmp.ne.s32.totalorder %s137, %s153
      %p155 = scmp.eq.s32.totalorder %s40, 0
      %p156 = por %p154, %p155
      %s157 = ssub.s32 %s34, %s41
      %p158 = scmp.eq.s32.totalorder %s157, 0
      %s160 = sadd.s32 %s159, 1
      %s161 = scalar_select %p158, %s159, %s160
      %p164 = pneg %p158
      %p165 = scmp.eq.s32.totalorder %s34, 1
      %p166 = por %p164, %p165
      %p167 = scmp.ne.s32.totalorder %s159, %s162
      %p168 = scmp.eq.s32.totalorder %s34, 0
      %p169 = por %p167, %p168
      %p170 = scmp.ne.s32.totalorder %s159, %s162
      %p171 = scmp.eq.s32.totalorder %s39, 1
      %p172 = por %p170, %p171
      %p173 = scmp.ne.s32.totalorder %s162, %s163
      %p174 = scmp.eq.s32.totalorder %s39, 0
      %p175 = por %p173, %p174
      %p176 = scmp.ne.s32.totalorder %s162, %s163
      %p177 = scmp.eq.s32.totalorder %s40, 1
      %p178 = por %p176, %p177
      %p180 = scmp.ne.s32.totalorder %s163, %s179
      %p181 = scmp.eq.s32.totalorder %s40, 0
      %p182 = por %p180, %p181
      %s183 = ssub.s32 %s34, %s41
      %p184 = scmp.eq.s32.totalorder %s183, 0
      %s186 = sadd.s32 %s185, 1
      %s187 = scalar_select %p184, %s185, %s186
      %p190 = pneg %p184
      %p191 = scmp.eq.s32.totalorder %s34, 1
      %p192 = por %p190, %p191
      %p193 = scmp.ne.s32.totalorder %s185, %s188
      %p194 = scmp.eq.s32.totalorder %s34, 0
      %p195 = por %p193, %p194
      %p196 = scmp.ne.s32.totalorder %s185, %s188
      %p197 = scmp.eq.s32.totalorder %s39, 1
      %p198 = por %p196, %p197
      %p199 = scmp.ne.s32.totalorder %s188, %s189
      %p200 = scmp.eq.s32.totalorder %s39, 0
      %p201 = por %p199, %p200
      %p202 = scmp.ne.s32.totalorder %s188, %s189
      %p203 = scmp.eq.s32.totalorder %s40, 1
      %p204 = por %p202, %p203
      %p206 = scmp.ne.s32.totalorder %s189, %s205
      %p207 = scmp.eq.s32.totalorder %s40, 0
      %p208 = por %p206, %p207
      %s209 = ssub.s32 %s34, %s41
      %p210 = scmp.eq.s32.totalorder %s209, 0
      %s212 = sadd.s32 %s211, 1
      %s213 = scalar_select %p210, %s211, %s212
      %p216 = pneg %p210
      %p217 = scmp.eq.s32.totalorder %s34, 1
      %p218 = por %p216, %p217
      %p219 = scmp.ne.s32.totalorder %s211, %s214
      %p220 = scmp.eq.s32.totalorder %s34, 0
      %p221 = por %p219, %p220
      %p222 = scmp.ne.s32.totalorder %s211, %s214
      %p223 = scmp.eq.s32.totalorder %s39, 1
      %p224 = por %p222, %p223
      %p225 = scmp.ne.s32.totalorder %s214, %s215
      %p226 = scmp.eq.s32.totalorder %s39, 0
      %p227 = por %p225, %p226
      %p228 = scmp.ne.s32.totalorder %s214, %s215
      %p229 = scmp.eq.s32.totalorder %s40, 1
      %p230 = por %p228, %p229
      %p232 = scmp.ne.s32.totalorder %s215, %s231
      %p233 = scmp.eq.s32.totalorder %s40, 0
      %p234 = por %p232, %p233
      %s235 = ssub.s32 %s34, %s41
      %p236 = scmp.eq.s32.totalorder %s235, 0
      %s238 = sadd.s32 %s237, 1
      %s239 = scalar_select %p236, %s237, %s238
      %p242 = pneg %p236
      %p243 = scmp.eq.s32.totalorder %s34, 1
      %p244 = por %p242, %p243
      %p245 = scmp.ne.s32.totalorder %s237, %s240
      %p246 = scmp.eq.s32.totalorder %s34, 0
      %p247 = por %p245, %p246
      %p248 = scmp.ne.s32.totalorder %s237, %s240
      %p249 = scmp.eq.s32.totalorder %s39, 1
      %p250 = por %p248, %p249
      %p251 = scmp.ne.s32.totalorder %s240, %s241
      %p252 = scmp.eq.s32.totalorder %s39, 0
      %p253 = por %p251, %p252
      %p254 = scmp.ne.s32.totalorder %s240, %s241
      %p255 = scmp.eq.s32.totalorder %s40, 1
      %p256 = por %p254, %p255
      %p258 = scmp.ne.s32.totalorder %s241, %s257
      %p259 = scmp.eq.s32.totalorder %s40, 0
      %p260 = por %p258, %p259
      %s261 = ssub.s32 %s34, %s41
      %p262 = scmp.eq.s32.totalorder %s261, 0
      %s264 = sadd.s32 %s263, 1
      %s265 = scalar_select %p262, %s263, %s264
      %p268 = pneg %p262
      %p269 = scmp.eq.s32.totalorder %s34, 1
      %p270 = por %p268, %p269
      %p271 = scmp.ne.s32.totalorder %s263, %s266
      %p272 = scmp.eq.s32.totalorder %s34, 0
      %p273 = por %p271, %p272
      %p274 = scmp.ne.s32.totalorder %s263, %s266
      %p275 = scmp.eq.s32.totalorder %s39, 1
      %p276 = por %p274, %p275
      %p277 = scmp.ne.s32.totalorder %s266, %s267
      %p278 = scmp.eq.s32.totalorder %s39, 0
      %p279 = por %p277, %p278
      %p280 = scmp.ne.s32.totalorder %s266, %s267
      %p281 = scmp.eq.s32.totalorder %s40, 1
      %p282 = por %p280, %p281
      %p284 = scmp.ne.s32.totalorder %s267, %s283
      %p285 = scmp.eq.s32.totalorder %s40, 0
      %p286 = por %p284, %p285
      %s287 = ssub.s32 %s34, %s41
      %p288 = scmp.eq.s32.totalorder %s287, 0
      %s290 = sadd.s32 %s289, 1
      %s291 = scalar_select %p288, %s289, %s290
      %p294 = pneg %p288
      %p295 = scmp.eq.s32.totalorder %s34, 1
      %p296 = por %p294, %p295
      %p297 = scmp.ne.s32.totalorder %s289, %s292
      %p298 = scmp.eq.s32.totalorder %s34, 0
      %p299 = por %p297, %p298
      %p300 = scmp.ne.s32.totalorder %s289, %s292
      %p301 = scmp.eq.s32.totalorder %s39, 1
      %p302 = por %p300, %p301
      %p303 = scmp.ne.s32.totalorder %s292, %s293
      %p304 = scmp.eq.s32.totalorder %s39, 0
      %p305 = por %p303, %p304
      %p306 = scmp.ne.s32.totalorder %s292, %s293
      %p307 = scmp.eq.s32.totalorder %s40, 1
      %p308 = por %p306, %p307
      %p310 = scmp.ne.s32.totalorder %s293, %s309
      %p311 = scmp.eq.s32.totalorder %s40, 0
      %p312 = por %p310, %p311
      %s313 = ssub.s32 %s34, %s41
      %p314 = scmp.eq.s32.totalorder %s313, 0
      %s316 = sadd.s32 %s315, 1
      %s317 = scalar_select %p314, %s315, %s316
      %p320 = pneg %p314
      %p321 = scmp.eq.s32.totalorder %s34, 1
      %p322 = por %p320, %p321
      %p323 = scmp.ne.s32.totalorder %s315, %s318
      %p324 = scmp.eq.s32.totalorder %s34, 0
      %p325 = por %p323, %p324
      %p326 = scmp.ne.s32.totalorder %s315, %s318
      %p327 = scmp.eq.s32.totalorder %s39, 1
      %p328 = por %p326, %p327
      %p329 = scmp.ne.s32.totalorder %s318, %s319
      %p330 = scmp.eq.s32.totalorder %s39, 0
      %p331 = por %p329, %p330
      %p332 = scmp.ne.s32.totalorder %s318, %s319
      %p333 = scmp.eq.s32.totalorder %s40, 1
      %p334 = por %p332, %p333
      %p336 = scmp.ne.s32.totalorder %s319, %s335
      %p337 = scmp.eq.s32.totalorder %s40, 0
      %p338 = por %p336, %p337
      %s339 = ssub.s32 %s34, %s41
      %p340 = scmp.eq.s32.totalorder %s339, 0
      %s342 = sadd.s32 %s341, 1
      %s343 = scalar_select %p340, %s341, %s342
      %p346 = pneg %p340
      %p347 = scmp.eq.s32.totalorder %s34, 1
      %p348 = por %p346, %p347
      %p349 = scmp.ne.s32.totalorder %s341, %s344
      %p350 = scmp.eq.s32.totalorder %s34, 0
      %p351 = por %p349, %p350
      %p352 = scmp.ne.s32.totalorder %s341, %s344
      %p353 = scmp.eq.s32.totalorder %s39, 1
      %p354 = por %p352, %p353
      %p355 = scmp.ne.s32.totalorder %s344, %s345
      %p356 = scmp.eq.s32.totalorder %s39, 0
      %p357 = por %p355, %p356
      %p358 = scmp.ne.s32.totalorder %s344, %s345
      %p359 = scmp.eq.s32.totalorder %s40, 1
      %p360 = por %p358, %p359
      %p362 = scmp.ne.s32.totalorder %s345, %s361
      %p363 = scmp.eq.s32.totalorder %s40, 0
      %p364 = por %p362, %p363
      %s365 = ssub.s32 %s34, %s41
      %p366 = scmp.eq.s32.totalorder %s365, 0
      %s368 = sadd.s32 %s367, 1
      %s369 = scalar_select %p366, %s367, %s368
      %p372 = pneg %p366
      %p373 = scmp.eq.s32.totalorder %s34, 1
      %p374 = por %p372, %p373
      %p375 = scmp.ne.s32.totalorder %s367, %s370
      %p376 = scmp.eq.s32.totalorder %s34, 0
      %p377 = por %p375, %p376
      %p378 = scmp.ne.s32.totalorder %s367, %s370
      %p379 = scmp.eq.s32.totalorder %s39, 1
      %p380 = por %p378, %p379
      %p381 = scmp.ne.s32.totalorder %s370, %s371
      %p382 = scmp.eq.s32.totalorder %s39, 0
      %p383 = por %p381, %p382
      %p384 = scmp.ne.s32.totalorder %s370, %s371
      %p385 = scmp.eq.s32.totalorder %s40, 1
      %p386 = por %p384, %p385
      %p388 = scmp.ne.s32.totalorder %s371, %s387
      %p389 = scmp.eq.s32.totalorder %s40, 0
      %p390 = por %p388, %p389
      %s391 = ssub.s32 %s34, %s41
      %p392 = scmp.eq.s32.totalorder %s391, 0
      %s394 = sadd.s32 %s393, 1
      %s395 = scalar_select %p392, %s393, %s394
      %p398 = pneg %p392
      %p399 = scmp.eq.s32.totalorder %s34, 1
      %p400 = por %p398, %p399
      %p401 = scmp.ne.s32.totalorder %s393, %s396
      %p402 = scmp.eq.s32.totalorder %s34, 0
      %p403 = por %p401, %p402
      %p404 = scmp.ne.s32.totalorder %s393, %s396
      %p405 = scmp.eq.s32.totalorder %s39, 1
      %p406 = por %p404, %p405
      %p407 = scmp.ne.s32.totalorder %s396, %s397
      %p408 = scmp.eq.s32.totalorder %s39, 0
      %p409 = por %p407, %p408
      %p410 = scmp.ne.s32.totalorder %s396, %s397
      %p411 = scmp.eq.s32.totalorder %s40, 1
      %p412 = por %p410, %p411
      %p414 = scmp.ne.s32.totalorder %s397, %s413
      %p415 = scmp.eq.s32.totalorder %s40, 0
      %p416 = por %p414, %p415
      %s417 = ssub.s32 %s34, %s41
      %p418 = scmp.eq.s32.totalorder %s417, 0
      %s420 = sadd.s32 %s419, 1
      %s421 = scalar_select %p418, %s419, %s420
      %p424 = pneg %p418
      %p425 = scmp.eq.s32.totalorder %s34, 1
      %p426 = por %p424, %p425
      %p427 = scmp.ne.s32.totalorder %s419, %s422
      %p428 = scmp.eq.s32.totalorder %s34, 0
      %p429 = por %p427, %p428
      %p430 = scmp.ne.s32.totalorder %s419, %s422
      %p431 = scmp.eq.s32.totalorder %s39, 1
      %p432 = por %p430, %p431
      %p433 = scmp.ne.s32.totalorder %s422, %s423
      %p434 = scmp.eq.s32.totalorder %s39, 0
      %p435 = por %p433, %p434
      %p436 = scmp.ne.s32.totalorder %s422, %s423
      %p437 = scmp.eq.s32.totalorder %s40, 1
      %p438 = por %p436, %p437
      %p440 = scmp.ne.s32.totalorder %s423, %s439
      %p441 = scmp.eq.s32.totalorder %s40, 0
      %p442 = por %p440, %p441
      %s443 = ssub.s32 %s34, %s41
      %p444 = scmp.eq.s32.totalorder %s443, 0
      %s446 = sadd.s32 %s445, 1
      %s447 = scalar_select %p444, %s445, %s446
      %p450 = pneg %p444
      %p451 = scmp.eq.s32.totalorder %s34, 1
      %p452 = por %p450, %p451
      %p453 = scmp.ne.s32.totalorder %s445, %s448
      %p454 = scmp.eq.s32.totalorder %s34, 0
      %p455 = por %p453, %p454
      %p456 = scmp.ne.s32.totalorder %s445, %s448
      %p457 = scmp.eq.s32.totalorder %s39, 1
      %p458 = por %p456, %p457
      %p459 = scmp.ne.s32.totalorder %s448, %s449
      %p460 = scmp.eq.s32.totalorder %s39, 0
      %p461 = por %p459, %p460
      %p462 = scmp.ne.s32.totalorder %s448, %s449
      %p463 = scmp.eq.s32.totalorder %s40, 1
      %p464 = por %p462, %p463
      %p466 = scmp.ne.s32.totalorder %s449, %s465
      %p467 = scmp.eq.s32.totalorder %s40, 0
      %p468 = por %p466, %p467
      %s469 = ssub.s32 %s34, %s41
      %p470 = scmp.eq.s32.totalorder %s469, 0
      %s472 = sadd.s32 %s471, 1
      %s473 = scalar_select %p470, %s471, %s472
      %p476 = pneg %p470
      %p477 = scmp.eq.s32.totalorder %s34, 1
      %p478 = por %p476, %p477
      %p479 = scmp.ne.s32.totalorder %s471, %s474
      %p480 = scmp.eq.s32.totalorder %s34, 0
      %p481 = por %p479, %p480
      %p482 = scmp.ne.s32.totalorder %s471, %s474
      %p483 = scmp.eq.s32.totalorder %s39, 1
      %p484 = por %p482, %p483
      %p485 = scmp.ne.s32.totalorder %s474, %s475
      %p486 = scmp.eq.s32.totalorder %s39, 0
      %p487 = por %p485, %p486
      %p488 = scmp.ne.s32.totalorder %s474, %s475
      %p489 = scmp.eq.s32.totalorder %s40, 1
      %p490 = por %p488, %p489
      %p492 = scmp.ne.s32.totalorder %s475, %s491
      %p493 = scmp.eq.s32.totalorder %s40, 0
      %p494 = por %p492, %p493
      %s495 = ssub.s32 %s34, %s41
      %p496 = scmp.eq.s32.totalorder %s495, 0
      %s498 = sadd.s32 %s497, 1
      %s499 = scalar_select %p496, %s497, %s498
      %p502 = pneg %p496
      %p503 = scmp.eq.s32.totalorder %s34, 1
      %p504 = por %p502, %p503
      %p505 = scmp.ne.s32.totalorder %s497, %s500
      %p506 = scmp.eq.s32.totalorder %s34, 0
      %p507 = por %p505, %p506
      %p508 = scmp.ne.s32.totalorder %s497, %s500
      %p509 = scmp.eq.s32.totalorder %s39, 1
      %p510 = por %p508, %p509
      %p511 = scmp.ne.s32.totalorder %s500, %s501
      %p512 = scmp.eq.s32.totalorder %s39, 0
      %p513 = por %p511, %p512
      %p514 = scmp.ne.s32.totalorder %s500, %s501
      %p515 = scmp.eq.s32.totalorder %s40, 1
      %p516 = por %p514, %p515
      %p518 = scmp.ne.s32.totalorder %s501, %s517
      %p519 = scmp.eq.s32.totalorder %s40, 0
      %p520 = por %p518, %p519
      %s522 = sadd.s32 %s521, 1
      %p525 = scmp.eq.s32.totalorder %s34, 1
      %p526 = scmp.ne.s32.totalorder %s521, %s523
      %p527 = scmp.eq.s32.totalorder %s34, 0
      %p528 = por %p526, %p527
      %p529 = scmp.ne.s32.totalorder %s521, %s523
      %p530 = scmp.eq.s32.totalorder %s39, 1
      %p531 = por %p529, %p530
      %p532 = scmp.ne.s32.totalorder %s523, %s524
      %p533 = scmp.eq.s32.totalorder %s39, 0
      %p534 = por %p532, %p533
      %p535 = scmp.ne.s32.totalorder %s523, %s524
      %p536 = scmp.eq.s32.totalorder %s40, 1
      %p537 = por %p535, %p536
      %p539 = scmp.ne.s32.totalorder %s524, %s538
      %p540 = scmp.eq.s32.totalorder %s40, 0
      %p541 = por %p539, %p540
      %s543 = sadd.s32 %s542, 1
      %p546 = scmp.eq.s32.totalorder %s34, 1
      %p547 = scmp.ne.s32.totalorder %s542, %s544
      %p548 = scmp.eq.s32.totalorder %s34, 0
      %p549 = por %p547, %p548
      %p550 = scmp.ne.s32.totalorder %s542, %s544
      %p551 = scmp.eq.s32.totalorder %s39, 1
      %p552 = por %p550, %p551
      %p553 = scmp.ne.s32.totalorder %s544, %s545
      %p554 = scmp.eq.s32.totalorder %s39, 0
      %p555 = por %p553, %p554
      %p556 = scmp.ne.s32.totalorder %s544, %s545
      %p557 = scmp.eq.s32.totalorder %s40, 1
      %p558 = por %p556, %p557
      %p560 = scmp.ne.s32.totalorder %s545, %s559
      %p561 = scmp.eq.s32.totalorder %s40, 0
      %p562 = por %p560, %p561
      %s564 = sadd.s32 %s563, 1
      %p567 = scmp.eq.s32.totalorder %s34, 1
      %p568 = scmp.ne.s32.totalorder %s563, %s565
      %p569 = scmp.eq.s32.totalorder %s34, 0
      %p570 = por %p568, %p569
      %p571 = scmp.ne.s32.totalorder %s563, %s565
      %p572 = scmp.eq.s32.totalorder %s39, 1
      %p573 = por %p571, %p572
      %p574 = scmp.ne.s32.totalorder %s565, %s566
      %p575 = scmp.eq.s32.totalorder %s39, 0
      %p576 = por %p574, %p575
      %p577 = scmp.ne.s32.totalorder %s565, %s566
      %p578 = scmp.eq.s32.totalorder %s40, 1
      %p579 = por %p577, %p578
      %p581 = scmp.ne.s32.totalorder %s566, %s580
      %p582 = scmp.eq.s32.totalorder %s40, 0
      %p583 = por %p581, %p582
      %s585 = sadd.s32 %s584, 1
      %p588 = scmp.eq.s32.totalorder %s34, 1
      %p589 = scmp.ne.s32.totalorder %s584, %s586
      %p590 = scmp.eq.s32.totalorder %s34, 0
      %p591 = por %p589, %p590
      %p592 = scmp.ne.s32.totalorder %s584, %s586
      %p593 = scmp.eq.s32.totalorder %s39, 1
      %p594 = por %p592, %p593
      %p595 = scmp.ne.s32.totalorder %s586, %s587
      %p596 = scmp.eq.s32.totalorder %s39, 0
      %p597 = por %p595, %p596
      %p598 = scmp.ne.s32.totalorder %s586, %s587
      %p599 = scmp.eq.s32.totalorder %s40, 1
      %p600 = por %p598, %p599
      %p602 = scmp.ne.s32.totalorder %s587, %s601
      %p603 = scmp.eq.s32.totalorder %s40, 0
      %p604 = por %p602, %p603
      %s606 = sadd.s32 %s605, 1
      %p609 = scmp.eq.s32.totalorder %s34, 1
      %p610 = scmp.ne.s32.totalorder %s605, %s607
      %p611 = scmp.eq.s32.totalorder %s34, 0
      %p612 = por %p610, %p611
      %p613 = scmp.ne.s32.totalorder %s605, %s607
      %p614 = scmp.eq.s32.totalorder %s39, 1
      %p615 = por %p613, %p614
      %p616 = scmp.ne.s32.totalorder %s607, %s608
      %p617 = scmp.eq.s32.totalorder %s39, 0
      %p618 = por %p616, %p617
      %p619 = scmp.ne.s32.totalorder %s607, %s608
      %p620 = scmp.eq.s32.totalorder %s40, 1
      %p621 = por %p619, %p620
      %p623 = scmp.ne.s32.totalorder %s608, %s622
      %p624 = scmp.eq.s32.totalorder %s40, 0
      %p625 = por %p623, %p624
      %s627 = sadd.s32 %s626, 1
      %p630 = scmp.eq.s32.totalorder %s34, 1
      %p631 = scmp.ne.s32.totalorder %s626, %s628
      %p632 = scmp.eq.s32.totalorder %s34, 0
      %p633 = por %p631, %p632
      %p634 = scmp.ne.s32.totalorder %s626, %s628
      %p635 = scmp.eq.s32.totalorder %s39, 1
      %p636 = por %p634, %p635
      %p637 = scmp.ne.s32.totalorder %s628, %s629
      %p638 = scmp.eq.s32.totalorder %s39, 0
      %p639 = por %p637, %p638
      %p640 = scmp.ne.s32.totalorder %s628, %s629
      %p641 = scmp.eq.s32.totalorder %s40, 1
      %p642 = por %p640, %p641
      %p644 = scmp.ne.s32.totalorder %s629, %s643
      %p645 = scmp.eq.s32.totalorder %s40, 0
      %p646 = por %p644, %p645
      %s648 = sadd.s32 %s647, 1
      %p651 = scmp.eq.s32.totalorder %s34, 1
      %p652 = scmp.ne.s32.totalorder %s647, %s649
      %p653 = scmp.eq.s32.totalorder %s34, 0
      %p654 = por %p652, %p653
      %p655 = scmp.ne.s32.totalorder %s647, %s649
      %p656 = scmp.eq.s32.totalorder %s39, 1
      %p657 = por %p655, %p656
      %p658 = scmp.ne.s32.totalorder %s649, %s650
      %p659 = scmp.eq.s32.totalorder %s39, 0
      %p660 = por %p658, %p659
      %p661 = scmp.ne.s32.totalorder %s649, %s650
      %p662 = scmp.eq.s32.totalorder %s40, 1
      %p663 = por %p661, %p662
      %p665 = scmp.ne.s32.totalorder %s650, %s664
      %p666 = scmp.eq.s32.totalorder %s40, 0
      %p667 = por %p665, %p666
      %p668 = scmp.le.s32.totalorder 1, %s34
      %p669 = scmp.lt.s32.totalorder %s34, 3
      %p670 = pnand %p668, %p669
      %p671 = pneg %p670
      // Predicated region
      $region9: #{bert_forward.1} parent=5 // pred_check
        _
      $region10: #{bert_forward.1} parent=5 // pred_check_branch
        %673 = sbr.rel (%p670) target = $region12
      $region11: #{bert_forward.1} parent=5 // pred_region
        %s674 = ssub.s32 %s34, 1
        // Predicated region
        $region13: #{bert_forward.1} parent=11 // pred_check
          %p675 = pneg %p55
        $region14: #{bert_forward.1} parent=11 // pred_check_branch
          %677 = sbr.rel (%p675) target = $region16
        $region15: #{bert_forward.1} parent=11 // pred_region
          _
        $region16: #{bert_forward.1} parent=11 // pred_fallthru
          _
        // Predicated region
        $region17: #{bert_forward.1} parent=11 // pred_check
          %p678 = pneg %p76
        $region18: #{bert_forward.1} parent=11 // pred_check_branch
          %680 = sbr.rel (%p678) target = $region20
        $region19: #{bert_forward.1} parent=11 // pred_region
          _
        $region20: #{bert_forward.1} parent=11 // pred_fallthru
          _
        // Predicated region
        $region21: #{bert_forward.1} parent=11 // pred_check
          %p681 = pneg %p97
        $region22: #{bert_forward.1} parent=11 // pred_check_branch
          %683 = sbr.rel (%p681) target = $region24
        $region23: #{bert_forward.1} parent=11 // pred_region
          _
        $region24: #{bert_forward.1} parent=11 // pred_fallthru
          _
        // Predicated region
        $region25: #{bert_forward.1} parent=11 // pred_check
          %p684 = pneg %p534
        $region26: #{bert_forward.1} parent=11 // pred_check_branch
          %686 = sbr.rel (%p684) target = $region28
        $region27: #{bert_forward.1} parent=11 // pred_region
          _
        $region28: #{bert_forward.1} parent=11 // pred_fallthru
          _
        // Predicated region
        $region29: #{bert_forward.1} parent=11 // pred_check
          %p687 = pneg %p555
        $region30: #{bert_forward.1} parent=11 // pred_check_branch
          %689 = sbr.rel (%p687) target = $region32
        $region31: #{bert_forward.1} parent=11 // pred_region
          _
        $region32: #{bert_forward.1} parent=11 // pred_fallthru
          _
        // Predicated region
        $region33: #{bert_forward.1} parent=11 // pred_check
          %p690 = pneg %p576
        $region34: #{bert_forward.1} parent=11 // pred_check_branch
          %692 = sbr.rel (%p690) target = $region36
        $region35: #{bert_forward.1} parent=11 // pred_region
          _
        $region36: #{bert_forward.1} parent=11 // pred_fallthru
          _
        // Predicated region
        $region37: #{bert_forward.1} parent=11 // pred_check
          %p693 = pneg %p597
        $region38: #{bert_forward.1} parent=11 // pred_check_branch
          %695 = sbr.rel (%p693) target = $region40
        $region39: #{bert_forward.1} parent=11 // pred_region
          _
        $region40: #{bert_forward.1} parent=11 // pred_fallthru
          _
        // Predicated region
        $region41: #{bert_forward.1} parent=11 // pred_check
          %p696 = pneg %p618
        $region42: #{bert_forward.1} parent=11 // pred_check_branch
          %698 = sbr.rel (%p696) target = $region44
        $region43: #{bert_forward.1} parent=11 // pred_region
          _
        $region44: #{bert_forward.1} parent=11 // pred_fallthru
          _
      $region12: #{bert_forward.1} parent=5 // pred_fallthru
        _
      %p699 = scmp.lt.s32.totalorder %s34, 2
      // Predicated region
      $region45: #{bert_forward.1} parent=5 // pred_check
        %p700 = pneg %p699
      $region46: #{bert_forward.1} parent=5 // pred_check_branch
        %702 = sbr.rel (%p700) target = $region48
      $region47: #{bert_forward.1} parent=5 // pred_region
        // Predicated region
        $region49: #{bert_forward.1} parent=47 // pred_check
          %p703 = pneg %p117
        $region50: #{bert_forward.1} parent=47 // pred_check_branch
          %705 = sbr.rel (%p703) target = $region52
        $region51: #{bert_forward.1} parent=47 // pred_region
          %p706 = scmp.lt.s32.totalorder %s34, 1
          %s707 = scalar_select %p706, %s34, 1
          %s708 = smul.addr %s707, 8
          %s709 = smul.addr %s708, 4
          %s710 = scalar_lea.vmem %s3, %s709
        $region52: #{bert_forward.1} parent=47 // pred_fallthru
          _
        // Predicated region
        $region53: #{bert_forward.1} parent=47 // pred_check
          %p711 = pneg %p143
        $region54: #{bert_forward.1} parent=47 // pred_check_branch
          %713 = sbr.rel (%p711) target = $region56
        $region55: #{bert_forward.1} parent=47 // pred_region
          %p714 = scmp.lt.s32.totalorder %s34, 1
          %s715 = scalar_select %p714, %s34, 1
          %s716 = smul.addr %s715, 2
          %s717 = scalar_lea.vmem %s4, %s716
        $region56: #{bert_forward.1} parent=47 // pred_fallthru
          _
        // Predicated region
        $region57: #{bert_forward.1} parent=47 // pred_check
          %p718 = pneg %p169
        $region58: #{bert_forward.1} parent=47 // pred_check_branch
          %720 = sbr.rel (%p718) target = $region60
        $region59: #{bert_forward.1} parent=47 // pred_region
          %p721 = scmp.lt.s32.totalorder %s34, 1
          %s722 = scalar_select %p721, %s34, 1
          %s723 = smul.addr %s722, 8
          %s724 = smul.addr %s723, 4
          %s725 = scalar_lea.vmem %s5, %s724
        $region60: #{bert_forward.1} parent=47 // pred_fallthru
          _
        // Predicated region
        $region61: #{bert_forward.1} parent=47 // pred_check
          %p726 = pneg %p195
        $region62: #{bert_forward.1} parent=47 // pred_check_branch
          %728 = sbr.rel (%p726) target = $region64
        $region63: #{bert_forward.1} parent=47 // pred_region
          %p729 = scmp.lt.s32.totalorder %s34, 1
          %s730 = scalar_select %p729, %s34, 1
          %s731 = smul.addr %s730, 2
          %s732 = scalar_lea.vmem %s6, %s731
        $region64: #{bert_forward.1} parent=47 // pred_fallthru
          _
        // Predicated region
        $region65: #{bert_forward.1} parent=47 // pred_check
          %p733 = pneg %p221
        $region66: #{bert_forward.1} parent=47 // pred_check_branch
          %735 = sbr.rel (%p733) target = $region68
        $region67: #{bert_forward.1} parent=47 // pred_region
          %p736 = scmp.lt.s32.totalorder %s34, 1
          %s737 = scalar_select %p736, %s34, 1
          %s738 = smul.addr %s737, 8
          %s739 = smul.addr %s738, 4
          %s740 = scalar_lea.vmem %s7, %s739
        $region68: #{bert_forward.1} parent=47 // pred_fallthru
          _
        // Predicated region
        $region69: #{bert_forward.1} parent=47 // pred_check
          %p741 = pneg %p247
        $region70: #{bert_forward.1} parent=47 // pred_check_branch
          %743 = sbr.rel (%p741) target = $region72
        $region71: #{bert_forward.1} parent=47 // pred_region
          %p744 = scmp.lt.s32.totalorder %s34, 1
          %s745 = scalar_select %p744, %s34, 1
          %s746 = smul.addr %s745, 2
          %s747 = scalar_lea.vmem %s8, %s746
        $region72: #{bert_forward.1} parent=47 // pred_fallthru
          _
        // Predicated region
        $region73: #{bert_forward.1} parent=47 // pred_check
          %p748 = pneg %p273
        $region74: #{bert_forward.1} parent=47 // pred_check_branch
          %750 = sbr.rel (%p748) target = $region76
        $region75: #{bert_forward.1} parent=47 // pred_region
          %p751 = scmp.lt.s32.totalorder %s34, 1
          %s752 = scalar_select %p751, %s34, 1
          %s753 = smul.addr %s752, 4
          %s754 = smul.addr %s753, 4
          %s755 = scalar_lea.vmem %s9, %s754
        $region76: #{bert_forward.1} parent=47 // pred_fallthru
          _
        // Predicated region
        $region77: #{bert_forward.1} parent=47 // pred_check
          %p756 = pneg %p299
        $region78: #{bert_forward.1} parent=47 // pred_check_branch
          %758 = sbr.rel (%p756) target = $region80
        $region79: #{bert_forward.1} parent=47 // pred_region
          %p759 = scmp.lt.s32.totalorder %s34, 1
          %s760 = scalar_select %p759, %s34, 1
          %s761 = scalar_lea.vmem %s10, %s760
        $region80: #{bert_forward.1} parent=47 // pred_fallthru
          _
        // Predicated region
        $region81: #{bert_forward.1} parent=47 // pred_check
          %p762 = pneg %p325
        $region82: #{bert_forward.1} parent=47 // pred_check_branch
          %764 = sbr.rel (%p762) target = $region84
        $region83: #{bert_forward.1} parent=47 // pred_region
          %p765 = scmp.lt.s32.totalorder %s34, 1
          %s766 = scalar_select %p765, %s34, 1
          %s767 = scalar_lea.vmem %s11, %s766
        $region84: #{bert_forward.1} parent=47 // pred_fallthru
          _
        // Predicated region
        $region85: #{bert_forward.1} parent=47 // pred_check
          %p768 = pneg %p351
        $region86: #{bert_forward.1} parent=47 // pred_check_branch
          %770 = sbr.rel (%p768) target = $region88
        $region87: #{bert_forward.1} parent=47 // pred_region
          %p771 = scmp.lt.s32.totalorder %s34, 1
          %s772 = scalar_select %p771, %s34, 1
          %s773 = scalar_lea.vmem %s12, %s772
        $region88: #{bert_forward.1} parent=47 // pred_fallthru
          _
        // Predicated region
        $region89: #{bert_forward.1} parent=47 // pred_check
          %p774 = pneg %p377
        $region90: #{bert_forward.1} parent=47 // pred_check_branch
          %776 = sbr.rel (%p774) target = $region92
        $region91: #{bert_forward.1} parent=47 // pred_region
          %p777 = scmp.lt.s32.totalorder %s34, 1
          %s778 = scalar_select %p777, %s34, 1
          %s779 = smul.addr %s778, 4
          %s780 = smul.addr %s779, 4
          %s781 = scalar_lea.vmem %s13, %s780
        $region92: #{bert_forward.1} parent=47 // pred_fallthru
          _
        // Predicated region
        $region93: #{bert_forward.1} parent=47 // pred_check
          %p782 = pneg %p403
        $region94: #{bert_forward.1} parent=47 // pred_check_branch
          %784 = sbr.rel (%p782) target = $region96
        $region95: #{bert_forward.1} parent=47 // pred_region
          %p785 = scmp.lt.s32.totalorder %s34, 1
          %s786 = scalar_select %p785, %s34, 1
          %s787 = scalar_lea.vmem %s14, %s786
        $region96: #{bert_forward.1} parent=47 // pred_fallthru
          _
        // Predicated region
        $region97: #{bert_forward.1} parent=47 // pred_check
          %p788 = pneg %p429
        $region98: #{bert_forward.1} parent=47 // pred_check_branch
          %790 = sbr.rel (%p788) target = $region100
        $region99: #{bert_forward.1} parent=47 // pred_region
          %p791 = scmp.lt.s32.totalorder %s34, 1
          %s792 = scalar_select %p791, %s34, 1
          %s793 = smul.addr %s792, 8
          %s794 = smul.addr %s793, 4
          %s795 = scalar_lea.vmem %s15, %s794
        $region100: #{bert_forward.1} parent=47 // pred_fallthru
          _
        // Predicated region
        $region101: #{bert_forward.1} parent=47 // pred_check
          %p796 = pneg %p455
        $region102: #{bert_forward.1} parent=47 // pred_check_branch
          %798 = sbr.rel (%p796) target = $region104
        $region103: #{bert_forward.1} parent=47 // pred_region
          %p799 = scmp.lt.s32.totalorder %s34, 1
          %s800 = scalar_select %p799, %s34, 1
          %s801 = scalar_lea.vmem %s16, %s800
        $region104: #{bert_forward.1} parent=47 // pred_fallthru
          _
        // Predicated region
        $region105: #{bert_forward.1} parent=47 // pred_check
          %p802 = pneg %p481
        $region106: #{bert_forward.1} parent=47 // pred_check_branch
          %804 = sbr.rel (%p802) target = $region108
        $region107: #{bert_forward.1} parent=47 // pred_region
          %p805 = scmp.lt.s32.totalorder %s34, 1
          %s806 = scalar_select %p805, %s34, 1
          %s807 = scalar_lea.vmem %s17, %s806
        $region108: #{bert_forward.1} parent=47 // pred_fallthru
          _
        // Predicated region
        $region109: #{bert_forward.1} parent=47 // pred_check
          %p808 = pneg %p507
        $region110: #{bert_forward.1} parent=47 // pred_check_branch
          %810 = sbr.rel (%p808) target = $region112
        $region111: #{bert_forward.1} parent=47 // pred_region
          %p811 = scmp.lt.s32.totalorder %s34, 1
          %s812 = scalar_select %p811, %s34, 1
          %s813 = scalar_lea.vmem %s18, %s812
        $region112: #{bert_forward.1} parent=47 // pred_fallthru
          _
      $region48: #{bert_forward.1} parent=5 // pred_fallthru
        _
      %p814 = scmp.le.s32.totalorder 1, %s34
      %p815 = scmp.lt.s32.totalorder %s34, 3
      %p816 = pnand %p814, %p815
      %p817 = pneg %p816
      // Predicated region
      $region113: #{bert_forward.1} parent=5 // pred_check
        _
      $region114: #{bert_forward.1} parent=5 // pred_check_branch
        %819 = sbr.rel (%p816) target = $region116
      $region115: #{bert_forward.1} parent=5 // pred_region
        %s820 = ssub.s32 %s34, 1
        %p821 = pneg %p55
        %p822 = pneg %p52
        %p823 = pneg %p76
        %p824 = pneg %p73
        %p825 = pneg %p97
        %p826 = pneg %p94
        %p827 = scmp.lt.s32.totalorder %s39, 1
        %s828 = scalar_select %p827, %s39, 1
        %s829 = smul.addr %s828, 8
        %s830 = smul.addr %s829, 4
        %s831 = scalar_lea.vmem %s3, %s830
        %p832 = pneg %p123
        %p833 = pneg %p120
        %p834 = scmp.lt.s32.totalorder %s39, 1
        %s835 = scalar_select %p834, %s39, 1
        %s836 = smul.addr %s835, 2
        %s837 = scalar_lea.vmem %s4, %s836
        %p838 = pneg %p149
        %p839 = pneg %p146
        %p840 = scmp.lt.s32.totalorder %s39, 1
        %s841 = scalar_select %p840, %s39, 1
        %s842 = smul.addr %s841, 8
        %s843 = smul.addr %s842, 4
        %s844 = scalar_lea.vmem %s5, %s843
        %p845 = pneg %p175
        %p846 = pneg %p172
        %p847 = scmp.lt.s32.totalorder %s39, 1
        %s848 = scalar_select %p847, %s39, 1
        %s849 = smul.addr %s848, 2
        %s850 = scalar_lea.vmem %s6, %s849
        %p851 = pneg %p201
        %p852 = pneg %p198
        %p853 = scmp.lt.s32.totalorder %s39, 1
        %s854 = scalar_select %p853, %s39, 1
        %s855 = smul.addr %s854, 8
        %s856 = smul.addr %s855, 4
        %s857 = scalar_lea.vmem %s7, %s856
        %p858 = pneg %p227
        %p859 = pneg %p224
        %p860 = scmp.lt.s32.totalorder %s39, 1
        %s861 = scalar_select %p860, %s39, 1
        %s862 = smul.addr %s861, 2
        %s863 = scalar_lea.vmem %s8, %s862
        %p864 = pneg %p253
        %p865 = pneg %p250
        %p866 = scmp.lt.s32.totalorder %s39, 1
        %s867 = scalar_select %p866, %s39, 1
        %s868 = smul.addr %s867, 4
        %s869 = smul.addr %s868, 4
        %s870 = scalar_lea.vmem %s9, %s869
        %p871 = pneg %p279
        %p872 = pneg %p276
        %p873 = scmp.lt.s32.totalorder %s39, 1
        %s874 = scalar_select %p873, %s39, 1
        %s875 = scalar_lea.vmem %s10, %s874
        %p876 = pneg %p305
        %p877 = pneg %p302
        %p878 = scmp.lt.s32.totalorder %s39, 1
        %s879 = scalar_select %p878, %s39, 1
        %s880 = scalar_lea.vmem %s11, %s879
        %p881 = pneg %p331
        %p882 = pneg %p328
        %p883 = scmp.lt.s32.totalorder %s39, 1
        %s884 = scalar_select %p883, %s39, 1
        %s885 = scalar_lea.vmem %s12, %s884
        %p886 = pneg %p357
        %p887 = pneg %p354
        %p888 = scmp.lt.s32.totalorder %s39, 1
        %s889 = scalar_select %p888, %s39, 1
        %s890 = smul.addr %s889, 4
        %s891 = smul.addr %s890, 4
        %s892 = scalar_lea.vmem %s13, %s891
        %p893 = pneg %p383
        %p894 = pneg %p380
        %p895 = scmp.lt.s32.totalorder %s39, 1
        %s896 = scalar_select %p895, %s39, 1
        %s897 = scalar_lea.vmem %s14, %s896
        %p898 = pneg %p409
        %p899 = pneg %p406
        %p900 = scmp.lt.s32.totalorder %s39, 1
        %s901 = scalar_select %p900, %s39, 1
        %s902 = smul.addr %s901, 8
        %s903 = smul.addr %s902, 4
        %s904 = scalar_lea.vmem %s15, %s903
        %p905 = pneg %p435
        %p906 = pneg %p432
        %p907 = scmp.lt.s32.totalorder %s39, 1
        %s908 = scalar_select %p907, %s39, 1
        %s909 = scalar_lea.vmem %s16, %s908
        %p910 = pneg %p461
        %p911 = pneg %p458
        %p912 = scmp.lt.s32.totalorder %s39, 1
        %s913 = scalar_select %p912, %s39, 1
        %s914 = scalar_lea.vmem %s17, %s913
        %p915 = pneg %p487
        %p916 = pneg %p484
        %p917 = scmp.lt.s32.totalorder %s39, 1
        %s918 = scalar_select %p917, %s39, 1
        %s919 = scalar_lea.vmem %s18, %s918
        %p920 = pneg %p513
        %p921 = pneg %p510
        %p922 = pneg %p534
        %p923 = pneg %p531
        %p924 = pneg %p555
        %p925 = pneg %p552
        %p926 = pneg %p576
        %p927 = pneg %p573
        %p928 = pneg %p597
        %p929 = pneg %p594
        %p930 = pneg %p618
        %p931 = pneg %p615
        %p932 = pneg %p639
        %p933 = pneg %p636
        %p934 = pneg %p660
        %p935 = pneg %p657
        %p936 = scmp.lt.s32.totalorder %s39, 1
        %s937 = scalar_select %p936, %s39, 1
        %s938 = smul.addr %s937, 8
        %s939 = smul.addr %s938, 4
        %s940 = scalar_lea.vmem %s3, %s939
        %p941 = scmp.lt.s32.totalorder %s39, 1
        %s942 = scalar_select %p941, %s39, 1
        %s943 = smul.addr %s942, 2
        %s944 = scalar_lea.vmem %s4, %s943
        %p945 = scmp.lt.s32.totalorder %s39, 1
        %s946 = scalar_select %p945, %s39, 1
        %s947 = smul.addr %s946, 8
        %s948 = smul.addr %s947, 4
        %s949 = scalar_lea.vmem %s5, %s948
        %p950 = scmp.lt.s32.totalorder %s39, 1
        %s951 = scalar_select %p950, %s39, 1
        %s952 = smul.addr %s951, 2
        %s953 = scalar_lea.vmem %s6, %s952
        %p954 = scmp.lt.s32.totalorder %s39, 1
        %s955 = scalar_select %p954, %s39, 1
        %s956 = smul.addr %s955, 8
        %s957 = smul.addr %s956, 4
        %s958 = scalar_lea.vmem %s7, %s957
        %p959 = scmp.lt.s32.totalorder %s39, 1
        %s960 = scalar_select %p959, %s39, 1
        %s961 = smul.addr %s960, 2
        %s962 = scalar_lea.vmem %s8, %s961
        %p963 = scmp.lt.s32.totalorder %s39, 1
        %s964 = scalar_select %p963, %s39, 1
        %s965 = smul.addr %s964, 4
        %s966 = smul.addr %s965, 4
        %s967 = scalar_lea.vmem %s9, %s966
        %p968 = scmp.lt.s32.totalorder %s39, 1
        %s969 = scalar_select %p968, %s39, 1
        %s970 = scalar_lea.vmem %s10, %s969
        %p971 = scmp.lt.s32.totalorder %s39, 1
        %s972 = scalar_select %p971, %s39, 1
        %s973 = scalar_lea.vmem %s11, %s972
        %p974 = scmp.lt.s32.totalorder %s39, 1
        %s975 = scalar_select %p974, %s39, 1
        %s976 = scalar_lea.vmem %s12, %s975
        %p977 = scmp.lt.s32.totalorder %s39, 1
        %s978 = scalar_select %p977, %s39, 1
        %s979 = smul.addr %s978, 4
        %s980 = smul.addr %s979, 4
        %s981 = scalar_lea.vmem %s13, %s980
        %p982 = scmp.lt.s32.totalorder %s39, 1
        %s983 = scalar_select %p982, %s39, 1
        %s984 = scalar_lea.vmem %s14, %s983
        %p985 = scmp.lt.s32.totalorder %s39, 1
        %s986 = scalar_select %p985, %s39, 1
        %s987 = smul.addr %s986, 8
        %s988 = smul.addr %s987, 4
        %s989 = scalar_lea.vmem %s15, %s988
        %p990 = scmp.lt.s32.totalorder %s39, 1
        %s991 = scalar_select %p990, %s39, 1
        %s992 = scalar_lea.vmem %s16, %s991
        %p993 = scmp.lt.s32.totalorder %s39, 1
        %s994 = scalar_select %p993, %s39, 1
        %s995 = scalar_lea.vmem %s17, %s994
        %p996 = scmp.lt.s32.totalorder %s39, 1
        %s997 = scalar_select %p996, %s39, 1
        %s998 = scalar_lea.vmem %s18, %s997
        %p1000 = scmp.eq.s32.totalorder %s39, 0
        // Predicated region
        $region117: #{bert_forward.1} parent=115 // pred_check
          %p1001 = pneg %p1000
        $region118: #{bert_forward.1} parent=115 // pred_check_branch
          %1003 = sbr.rel (%p1001) target = $region120
        $region119: #{bert_forward.1} parent=115 // pred_region
          %v1004 = vld [vmem:[%s0] sm:$0xff]
          %v1005 = vld [vmem:[%s0 + $0x8] sm:$0xff]
          %v1006 = vld [vmem:[%s1] sm:$0x1]
          %v1007 = vld [vmem:[%s2] sm:$0x1]
          %vm1008 = vcmask 261120
          %v1009 = vsel %vm1008, %v1004, 0.0
          %1010 = vadd.xlane.f32.xlu0 %v1009
          %v1011 = vpop.xlane.xlu0 %1010
          %v1012 = vsel %vm1008, %v1005, 0.0
          %1013 = vadd.xlane.f32.xlu0 %v1012
          %v1014 = vpop.xlane.xlu0 %1013
          %v1015 = vrcp.pop 32.0
          %v1016 = vmul.f32 %v1011, %v1015
          %v1017 = vmul.f32 %v1014, %v1015
          %v1018 = vsub.f32 %v1004, %v1016
          %v1019 = vsub.f32 %v1005, %v1017
          %v1020 = vmul.f32 %v1018, %v1018
          %v1021 = vmul.f32 %v1019, %v1019
          %v1022 = vsel %vm1008, %v1020, 0.0
          %1023 = vadd.xlane.f32.xlu0 %v1022
          %v1024 = vpop.xlane.xlu0 %1023
          %v1025 = vsel %vm1008, %v1021, 0.0
          %1026 = vadd.xlane.f32.xlu0 %v1025
          %v1027 = vpop.xlane.xlu0 %1026
          %v1028 = vmul.f32 %v1024, %v1015
          %v1029 = vmul.f32 %v1027, %v1015
          %v1030 = vadd.f32 %v1028, 1e-12
          %v1031 = vadd.f32 %v1029, 1e-12
          %v1032 = vrsqrt.pop %v1030
          %v1033 = vrsqrt.pop %v1031
          %v1034 = vmul.f32 %v1018, %v1032
          %v1035 = vmul.f32 %v1019, %v1033
          %v1037 = vlaneseq
          %v1038 = vshrl.u32 %v1037, 7
          %v1039 = vsub.s32 0, %v1038
          %v1040 = vrot.slane %v1006, %v1039
          %v1042 = vmul.f32 %v1034, %v1040
          %v1043 = vmul.f32 %v1035, %v1040
          %v1045 = vlaneseq
          %v1046 = vshrl.u32 %v1045, 7
          %v1047 = vsub.s32 0, %v1046
          %v1048 = vrot.slane %v1007, %v1047
          %v1050 = vadd.f32 %v1042, %v1048
          %v1051 = vadd.f32 %v1043, %v1048
          %1052 = vst.msk [vmem:[#allocation2] sm:$0xff] %vm1008, %v1050
          %1053 = vst.msk [vmem:[#allocation2 + $0x8] sm:$0xff] %vm1008, %v1051
        $region120: #{bert_forward.1} parent=115 // pred_fallthru
          _
        %v1054 = vld [vmem:[#allocation2] sm:$0xff]
        %v1055 = vld [vmem:[#allocation2 + $0x8] sm:$0xff]
        %v1056 = vld [vmem:[%s940] sm:$0xf]
        %v1057 = vld [vmem:[%s940 + $0x4] sm:$0xf]
        %v1058 = vld [vmem:[%s940 + $0x8] sm:$0xf]
        %v1059 = vld [vmem:[%s940 + $0xc] sm:$0xf]
        %v1060 = vpack.c.bf16 %v1055, %v1054
        %v1061 = vld [vmem:[%s944] sm:$0x1]
        %v1063 = vlaneseq
        %v1064 = vshrl.u32 %v1063, 7
        %v1065 = vsub.s32 0, %v1064
        %v1066 = vrot.slane %v1061, %v1065
        %v1072 = vunpack.c.l.b16 %v1056
        %v1073 = vunpack.c.l.b16 %v1057
        %v1074 = vunpack.c.l.b16 %v1058
        %v1075 = vunpack.c.l.b16 %v1059
        %v1076 = vpack.c.b16 %v1073, %v1072
        %v1077 = vpack.c.b16 %v1075, %v1074
        %vm1080 = vcmask 261120
        %v1082 = vsel %vm1080, %v1060, 0
        %1084 = vmatprep.subr.bf16.mxu0 0
        %1085 = vmatpush1.bf16.msra.mxu0 %v1076
        %1086 = vmatprep.subr.bf16.mxu0 0
        %1087 = vmatpush1.bf16.msra.mxu0 %v1077
        %1088 = vmatprep.subr.bf16.mxu0 0
        %1089 = vmatpush1.bf16.msra.mxu0 0
        %1090 = vmatprep.subr.bf16.mxu0 0
        %1091 = vmatpush1.bf16.msra.mxu0 0
        %1092 = vmatprep.subr.bf16.mxu0 0
        %1093 = vmatpush1.bf16.msra.mxu0 0
        %1094 = vmatprep.subr.bf16.mxu0 0
        %1095 = vmatpush1.bf16.msra.mxu0 0
        %1096 = vmatprep.subr.bf16.mxu0 0
        %1097 = vmatpush1.bf16.msra.mxu0 0
        %1098 = vmatprep.subr.bf16.mxu0 0
        %1099 = vmatpush1.bf16.msra.mxu0 0
        %1100 = vmatprep.subr.bf16.mxu0 0
        %1101 = vmatpush1.bf16.msra.mxu0 0
        %1102 = vmatprep.subr.bf16.mxu0 0
        %1103 = vmatpush1.bf16.msra.mxu0 0
        %1104 = vmatprep.subr.bf16.mxu0 0
        %1105 = vmatpush1.bf16.msra.mxu0 0
        %1106 = vmatprep.subr.bf16.mxu0 0
        %1107 = vmatpush1.bf16.msra.mxu0 0
        %1108 = vmatprep.subr.bf16.mxu0 0
        %1109 = vmatpush1.bf16.msra.mxu0 0
        %1110 = vmatprep.subr.bf16.mxu0 0
        %1111 = vmatpush1.bf16.msra.mxu0 0
        %1112 = vmatprep.subr.bf16.mxu0 0
        %1113 = vmatpush1.bf16.msra.mxu0 0
        %1114 = vmatprep.subr.bf16.mxu0 0
        %1115 = vmatpush1.bf16.msra.mxu0 0
        %1116 = vmatprep.mubr.bf16.mxu0 0
        %1117 = vmatmul.mubr.bf16.gmra.mrb[0].mxu0 %v1082
        %v1118 = vpop.f32.mrb[0].mxu0
        %v1119 = vadd.f32 %v1066, %v1118
        %v1120 = vpop.f32.mrb[0].mxu0
        %v1121 = vpop.f32.mrb[0].mxu0
        %v1122 = vadd.f32 %v1066, %v1121
        %v1123 = vpop.f32.mrb[0].mxu0
        %1124 = vdwg.mxu0
        %v1125 = vmul.f32 %v1119, 0.25
        %v1126 = vmul.f32 %v1122, 0.25
        %v1127 = vld [vmem:[%s949] sm:$0xf]
        %v1128 = vld [vmem:[%s949 + $0x4] sm:$0xf]
        %v1129 = vld [vmem:[%s949 + $0x8] sm:$0xf]
        %v1130 = vld [vmem:[%s949 + $0xc] sm:$0xf]
        %v1131 = vld [vmem:[%s953] sm:$0x1]
        %v1133 = vlaneseq
        %v1134 = vshrl.u32 %v1133, 7
        %v1135 = vsub.s32 0, %v1134
        %v1136 = vrot.slane %v1131, %v1135
        %v1142 = vunpack.c.l.b16 %v1127
        %v1143 = vunpack.c.l.b16 %v1128
        %v1144 = vunpack.c.l.b16 %v1129
        %v1145 = vunpack.c.l.b16 %v1130
        %v1146 = vpack.c.b16 %v1143, %v1142
        %v1147 = vpack.c.b16 %v1145, %v1144
        %1150 = vmatprep.subr.bf16.mxu0 0
        %1151 = vmatpush1.bf16.msra.mxu0 %v1146
        %1152 = vmatprep.subr.bf16.mxu0 0
        %1153 = vmatpush1.bf16.msra.mxu0 %v1147
        %1154 = vmatprep.subr.bf16.mxu0 0
        %1155 = vmatpush1.bf16.msra.mxu0 0
        %1156 = vmatprep.subr.bf16.mxu0 0
        %1157 = vmatpush1.bf16.msra.mxu0 0
        %1158 = vmatprep.subr.bf16.mxu0 0
        %1159 = vmatpush1.bf16.msra.mxu0 0
        %1160 = vmatprep.subr.bf16.mxu0 0
        %1161 = vmatpush1.bf16.msra.mxu0 0
        %1162 = vmatprep.subr.bf16.mxu0 0
        %1163 = vmatpush1.bf16.msra.mxu0 0
        %1164 = vmatprep.subr.bf16.mxu0 0
        %1165 = vmatpush1.bf16.msra.mxu0 0
        %1166 = vmatprep.subr.bf16.mxu0 0
        %1167 = vmatpush1.bf16.msra.mxu0 0
        %1168 = vmatprep.subr.bf16.mxu0 0
        %1169 = vmatpush1.bf16.msra.mxu0 0
        %1170 = vmatprep.subr.bf16.mxu0 0
        %1171 = vmatpush1.bf16.msra.mxu0 0
        %1172 = vmatprep.subr.bf16.mxu0 0
        %1173 = vmatpush1.bf16.msra.mxu0 0
        %1174 = vmatprep.subr.bf16.mxu0 0
        %1175 = vmatpush1.bf16.msra.mxu0 0
        %1176 = vmatprep.subr.bf16.mxu0 0
        %1177 = vmatpush1.bf16.msra.mxu0 0
        %1178 = vmatprep.subr.bf16.mxu0 0
        %1179 = vmatpush1.bf16.msra.mxu0 0
        %1180 = vmatprep.subr.bf16.mxu0 0
        %1181 = vmatpush1.bf16.msra.mxu0 0
        %1182 = vmatprep.mubr.bf16.mxu0 0
        %1183 = vmatmul.mubr.bf16.gmra.mrb[0].mxu0 %v1082
        %v1184 = vpop.f32.mrb[0].mxu0
        %v1185 = vadd.f32 %v1136, %v1184
        %v1186 = vpop.f32.mrb[0].mxu0
        %v1187 = vpop.f32.mrb[0].mxu0
        %v1188 = vadd.f32 %v1136, %v1187
        %v1189 = vpop.f32.mrb[0].mxu0
        %1190 = vdwg.mxu0
        %v1191 = vld [vmem:[%s958] sm:$0xf]
        %v1192 = vld [vmem:[%s958 + $0x4] sm:$0xf]
        %v1193 = vld [vmem:[%s958 + $0x8] sm:$0xf]
        %v1194 = vld [vmem:[%s958 + $0xc] sm:$0xf]
        %v1195 = vld [vmem:[%s962] sm:$0x1]
        %v1197 = vlaneseq
        %v1198 = vshrl.u32 %v1197, 7
        %v1199 = vsub.s32 0, %v1198
        %v1200 = vrot.slane %v1195, %v1199
        %v1206 = vunpack.c.l.b16 %v1191
        %v1207 = vunpack.c.l.b16 %v1192
        %v1208 = vunpack.c.l.b16 %v1193
        %v1209 = vunpack.c.l.b16 %v1194
        %v1210 = vpack.c.b16 %v1207, %v1206
        %v1211 = vpack.c.b16 %v1209, %v1208
        %1214 = vmatprep.subr.bf16.mxu0 0
        %1215 = vmatpush1.bf16.msra.mxu0 %v1210
        %1216 = vmatprep.subr.bf16.mxu0 0
        %1217 = vmatpush1.bf16.msra.mxu0 %v1211
        %1218 = vmatprep.subr.bf16.mxu0 0
        %1219 = vmatpush1.bf16.msra.mxu0 0
        %1220 = vmatprep.subr.bf16.mxu0 0
        %1221 = vmatpush1.bf16.msra.mxu0 0
        %1222 = vmatprep.subr.bf16.mxu0 0
        %1223 = vmatpush1.bf16.msra.mxu0 0
        %1224 = vmatprep.subr.bf16.mxu0 0
        %1225 = vmatpush1.bf16.msra.mxu0 0
        %1226 = vmatprep.subr.bf16.mxu0 0
        %1227 = vmatpush1.bf16.msra.mxu0 0
        %1228 = vmatprep.subr.bf16.mxu0 0
        %1229 = vmatpush1.bf16.msra.mxu0 0
        %1230 = vmatprep.subr.bf16.mxu0 0
        %1231 = vmatpush1.bf16.msra.mxu0 0
        %1232 = vmatprep.subr.bf16.mxu0 0
        %1233 = vmatpush1.bf16.msra.mxu0 0
        %1234 = vmatprep.subr.bf16.mxu0 0
        %1235 = vmatpush1.bf16.msra.mxu0 0
        %1236 = vmatprep.subr.bf16.mxu0 0
        %1237 = vmatpush1.bf16.msra.mxu0 0
        %1238 = vmatprep.subr.bf16.mxu0 0
        %1239 = vmatpush1.bf16.msra.mxu0 0
        %1240 = vmatprep.subr.bf16.mxu0 0
        %1241 = vmatpush1.bf16.msra.mxu0 0
        %1242 = vmatprep.subr.bf16.mxu0 0
        %1243 = vmatpush1.bf16.msra.mxu0 0
        %1244 = vmatprep.subr.bf16.mxu0 0
        %1245 = vmatpush1.bf16.msra.mxu0 0
        %1246 = vmatprep.mubr.bf16.mxu0 0
        %1247 = vmatmul.mubr.bf16.gmra.mrb[0].mxu0 %v1082
        %v1248 = vpop.f32.mrb[0].mxu0
        %v1249 = vadd.f32 %v1200, %v1248
        %v1250 = vpop.f32.mrb[0].mxu0
        %v1251 = vpop.f32.mrb[0].mxu0
        %v1252 = vadd.f32 %v1200, %v1251
        %v1253 = vpop.f32.mrb[0].mxu0
        %1254 = vdwg.mxu0
        %v1255 = vpack.c.bf16 %v1125, %v1125
        %v1256 = vpack.c.bf16 %v1126, %v1126
        %v1257 = vpack.c.bf16 %v1185, %v1185
        %v1258 = vpack.c.bf16 %v1188, %v1188
        %vm1259 = vcmask 130048
        %v1261 = vsel %vm1259, %v1255, 0
        %v1264 = vsel %vm1259, %v1257, 0
        %1266 = vmatprep.subr.bf16.mxu0 0
        %1267 = vmatpush1.bf16.xpose.msra.mxu0 %v1264
        %1268 = vmatprep.subr.bf16.mxu0 0
        %1269 = vmatpush1.bf16.xpose.msra.mxu0 0
        %1270 = vmatprep.subr.bf16.mxu0 0
        %1271 = vmatpush1.bf16.xpose.msra.mxu0 0
        %1272 = vmatprep.subr.bf16.mxu0 0
        %1273 = vmatpush1.bf16.xpose.msra.mxu0 0
        %1274 = vmatprep.subr.bf16.mxu0 0
        %1275 = vmatpush1.bf16.xpose.msra.mxu0 0
        %1276 = vmatprep.subr.bf16.mxu0 0
        %1277 = vmatpush1.bf16.xpose.msra.mxu0 0
        %1278 = vmatprep.subr.bf16.mxu0 0
        %1279 = vmatpush1.bf16.xpose.msra.mxu0 0
        %1280 = vmatprep.subr.bf16.mxu0 0
        %1281 = vmatpush1.bf16.xpose.msra.mxu0 0
        %1282 = vmatprep.subr.bf16.mxu0 0
        %1283 = vmatpush1.bf16.xpose.msra.mxu0 0
        %1284 = vmatprep.subr.bf16.mxu0 0
        %1285 = vmatpush1.bf16.xpose.msra.mxu0 0
        %1286 = vmatprep.subr.bf16.mxu0 0
        %1287 = vmatpush1.bf16.xpose.msra.mxu0 0
        %1288 = vmatprep.subr.bf16.mxu0 0
        %1289 = vmatpush1.bf16.xpose.msra.mxu0 0
        %1290 = vmatprep.subr.bf16.mxu0 0
        %1291 = vmatpush1.bf16.xpose.msra.mxu0 0
        %1292 = vmatprep.subr.bf16.mxu0 0
        %1293 = vmatpush1.bf16.xpose.msra.mxu0 0
        %1294 = vmatprep.subr.bf16.mxu0 0
        %1295 = vmatpush1.bf16.xpose.msra.mxu0 0
        %1296 = vmatprep.subr.bf16.mxu0 0
        %1297 = vmatpush1.bf16.xpose.msra.mxu0 0
        %1298 = vmatprep.mubr.bf16.mxu0 0
        %1299 = vmatmul.mubr.bf16.gmra.mrb[0].mxu0 %v1261
        %v1300 = vpop.f32.mrb[0].mxu0
        %v1301 = vadd.f32 0.0, %v1300
        %v1302 = vpop.f32.mrb[0].mxu0
        %v1303 = vpop.f32.mrb[0].mxu0
        %v1304 = vpop.f32.mrb[0].mxu0
        %1305 = vdwg.mxu0
        %v1307 = vsel %vm1259, %v1256, 0
        %v1310 = vsel %vm1259, %v1258, 0
        %1312 = vmatprep.subr.bf16.mxu0 0
        %1313 = vmatpush1.bf16.xpose.msra.mxu0 %v1310
        %1314 = vmatprep.subr.bf16.mxu0 0
        %1315 = vmatpush1.bf16.xpose.msra.mxu0 0
        %1316 = vmatprep.subr.bf16.mxu0 0
        %1317 = vmatpush1.bf16.xpose.msra.mxu0 0
        %1318 = vmatprep.subr.bf16.mxu0 0
        %1319 = vmatpush1.bf16.xpose.msra.mxu0 0
        %1320 = vmatprep.subr.bf16.mxu0 0
        %1321 = vmatpush1.bf16.xpose.msra.mxu0 0
        %1322 = vmatprep.subr.bf16.mxu0 0
        %1323 = vmatpush1.bf16.xpose.msra.mxu0 0
        %1324 = vmatprep.subr.bf16.mxu0 0
        %1325 = vmatpush1.bf16.xpose.msra.mxu0 0
        %1326 = vmatprep.subr.bf16.mxu0 0
        %1327 = vmatpush1.bf16.xpose.msra.mxu0 0
        %1328 = vmatprep.subr.bf16.mxu0 0
        %1329 = vmatpush1.bf16.xpose.msra.mxu0 0
        %1330 = vmatprep.subr.bf16.mxu0 0
        %1331 = vmatpush1.bf16.xpose.msra.mxu0 0
        %1332 = vmatprep.subr.bf16.mxu0 0
        %1333 = vmatpush1.bf16.xpose.msra.mxu0 0
        %1334 = vmatprep.subr.bf16.mxu0 0
        %1335 = vmatpush1.bf16.xpose.msra.mxu0 0
        %1336 = vmatprep.subr.bf16.mxu0 0
        %1337 = vmatpush1.bf16.xpose.msra.mxu0 0
        %1338 = vmatprep.subr.bf16.mxu0 0
        %1339 = vmatpush1.bf16.xpose.msra.mxu0 0
        %1340 = vmatprep.subr.bf16.mxu0 0
        %1341 = vmatpush1.bf16.xpose.msra.mxu0 0
        %1342 = vmatprep.subr.bf16.mxu0 0
        %1343 = vmatpush1.bf16.xpose.msra.mxu0 0
        %1344 = vmatprep.mubr.bf16.mxu0 0
        %1345 = vmatmul.mubr.bf16.gmra.mrb[0].mxu0 %v1307
        %v1346 = vpop.f32.mrb[0].mxu0
        %v1347 = vadd.f32 0.0, %v1346
        %v1348 = vpop.f32.mrb[0].mxu0
        %v1349 = vpop.f32.mrb[0].mxu0
        %v1350 = vpop.f32.mrb[0].mxu0
        %1351 = vdwg.mxu0
        %vm1352 = vcmask 64512
        %v1353 = vsel %vm1352, %v1301, -inf
        %1354 = vmax.xlane.f32.xlu0 %v1353
        %v1355 = vpop.xlane.xlu0 %1354
        %v1356 = vsel %vm1352, %v1347, -inf
        %1357 = vmax.xlane.f32.xlu0 %v1356
        %v1358 = vpop.xlane.xlu0 %1357
        %v1359 = vsub.f32 %v1301, %v1355
        %v1360 = vsub.f32 %v1347, %v1358
        %v1361 = vmul.f32 %v1359, 1.442695
        %v1362 = vpow.pop %v1361
        %v1363 = vmul.f32 %v1360, 1.442695
        %v1364 = vpow.pop %v1363
        %v1365 = vsel %vm1352, %v1362, 0.0
        %1366 = vadd.xlane.f32.xlu0 %v1365
        %v1367 = vpop.xlane.xlu0 %1366
        %v1368 = vsel %vm1352, %v1364, 0.0
        %1369 = vadd.xlane.f32.xlu0 %v1368
        %v1370 = vpop.xlane.xlu0 %1369
        %v1371 = vrcp.pop %v1367
        %v1372 = vrcp.pop %v1370
        %v1373 = vmul.f32 %v1362, %v1371
        %v1374 = vmul.f32 %v1364, %v1372
        %v1375 = vpack.c.bf16 %v1373, %v1373
        %v1376 = vpack.c.bf16 %v1374, %v1374
        %v1377 = vpack.c.bf16 %v1249, %v1249
        %v1378 = vpack.c.bf16 %v1252, %v1252
        %v1380 = vsel %vm1352, %v1375, 0
        %vm1382 = vcmask 1043456
        %v1384 = vsel %vm1382, %v1377, 0
        %1386 = vmatprep.subr.bf16.mxu0 0
        %1387 = vmatpush1.bf16.msra.mxu0 %v1384
        %1388 = vmatprep.subr.bf16.mxu0 0
        %1389 = vmatpush1.bf16.msra.mxu0 0
        %1390 = vmatprep.subr.bf16.mxu0 0
        %1391 = vmatpush1.bf16.msra.mxu0 0
        %1392 = vmatprep.subr.bf16.mxu0 0
        %1393 = vmatpush1.bf16.msra.mxu0 0
        %1394 = vmatprep.subr.bf16.mxu0 0
        %1395 = vmatpush1.bf16.msra.mxu0 0
        %1396 = vmatprep.subr.bf16.mxu0 0
        %1397 = vmatpush1.bf16.msra.mxu0 0
        %1398 = vmatprep.subr.bf16.mxu0 0
        %1399 = vmatpush1.bf16.msra.mxu0 0
        %1400 = vmatprep.subr.bf16.mxu0 0
        %1401 = vmatpush1.bf16.msra.mxu0 0
        %1402 = vmatprep.subr.bf16.mxu0 0
        %1403 = vmatpush1.bf16.msra.mxu0 0
        %1404 = vmatprep.subr.bf16.mxu0 0
        %1405 = vmatpush1.bf16.msra.mxu0 0
        %1406 = vmatprep.subr.bf16.mxu0 0
        %1407 = vmatpush1.bf16.msra.mxu0 0
        %1408 = vmatprep.subr.bf16.mxu0 0
        %1409 = vmatpush1.bf16.msra.mxu0 0
        %1410 = vmatprep.subr.bf16.mxu0 0
        %1411 = vmatpush1.bf16.msra.mxu0 0
        %1412 = vmatprep.subr.bf16.mxu0 0
        %1413 = vmatpush1.bf16.msra.mxu0 0
        %1414 = vmatprep.subr.bf16.mxu0 0
        %1415 = vmatpush1.bf16.msra.mxu0 0
        %1416 = vmatprep.subr.bf16.mxu0 0
        %1417 = vmatpush1.bf16.msra.mxu0 0
        %1418 = vmatprep.mubr.bf16.mxu0 0
        %1419 = vmatmul.mubr.bf16.gmra.mrb[0].mxu0 %v1380
        %v1420 = vpop.f32.mrb[0].mxu0
        %v1421 = vadd.f32 0.0, %v1420
        %v1422 = vpop.f32.mrb[0].mxu0
        %v1423 = vpop.f32.mrb[0].mxu0
        %v1424 = vpop.f32.mrb[0].mxu0
        %1425 = vdwg.mxu0
        %v1427 = vsel %vm1352, %v1376, 0
        %v1430 = vsel %vm1382, %v1378, 0
        %1432 = vmatprep.subr.bf16.mxu0 0
        %1433 = vmatpush1.bf16.msra.mxu0 %v1430
        %1434 = vmatprep.subr.bf16.mxu0 0
        %1435 = vmatpush1.bf16.msra.mxu0 0
        %1436 = vmatprep.subr.bf16.mxu0 0
        %1437 = vmatpush1.bf16.msra.mxu0 0
        %1438 = vmatprep.subr.bf16.mxu0 0
        %1439 = vmatpush1.bf16.msra.mxu0 0
        %1440 = vmatprep.subr.bf16.mxu0 0
        %1441 = vmatpush1.bf16.msra.mxu0 0
        %1442 = vmatprep.subr.bf16.mxu0 0
        %1443 = vmatpush1.bf16.msra.mxu0 0
        %1444 = vmatprep.subr.bf16.mxu0 0
        %1445 = vmatpush1.bf16.msra.mxu0 0
        %1446 = vmatprep.subr.bf16.mxu0 0
        %1447 = vmatpush1.bf16.msra.mxu0 0
        %1448 = vmatprep.subr.bf16.mxu0 0
        %1449 = vmatpush1.bf16.msra.mxu0 0
        %1450 = vmatprep.subr.bf16.mxu0 0
        %1451 = vmatpush1.bf16.msra.mxu0 0
        %1452 = vmatprep.subr.bf16.mxu0 0
        %1453 = vmatpush1.bf16.msra.mxu0 0
        %1454 = vmatprep.subr.bf16.mxu0 0
        %1455 = vmatpush1.bf16.msra.mxu0 0
        %1456 = vmatprep.subr.bf16.mxu0 0
        %1457 = vmatpush1.bf16.msra.mxu0 0
        %1458 = vmatprep.subr.bf16.mxu0 0
        %1459 = vmatpush1.bf16.msra.mxu0 0
        %1460 = vmatprep.subr.bf16.mxu0 0
        %1461 = vmatpush1.bf16.msra.mxu0 0
        %1462 = vmatprep.subr.bf16.mxu0 0
        %1463 = vmatpush1.bf16.msra.mxu0 0
        %1464 = vmatprep.mubr.bf16.mxu0 0
        %1465 = vmatmul.mubr.bf16.gmra.mrb[0].mxu0 %v1427
        %v1466 = vpop.f32.mrb[0].mxu0
        %v1467 = vadd.f32 0.0, %v1466
        %v1468 = vpop.f32.mrb[0].mxu0
        %v1469 = vpop.f32.mrb[0].mxu0
        %v1470 = vpop.f32.mrb[0].mxu0
        %1471 = vdwg.mxu0
        %v1472 = vld [vmem:[%s967] sm:$0xf]
        %v1473 = vld [vmem:[%s967 + $0x4] sm:$0xf]
        %v1474 = vpack.c.bf16 %v1467, %v1421
        %s1475 = scalar_lea.vmem %s940, 16
        %v1476 = vld [vmem:[%s1475] sm:$0xf]
        %v1477 = vld [vmem:[%s1475 + $0x4] sm:$0xf]
        %v1478 = vld [vmem:[%s1475 + $0x8] sm:$0xf]
        %v1479 = vld [vmem:[%s1475 + $0xc] sm:$0xf]
        %s1480 = scalar_lea.vmem %s944, 1
        %v1481 = vld [vmem:[%s1480] sm:$0x1]
        %v1483 = vlaneseq
        %v1484 = vshrl.u32 %v1483, 7
        %v1485 = vsub.s32 0, %v1484
        %v1486 = vrot.slane %v1481, %v1485
        %v1492 = vunpack.c.l.b16 %v1476
        %v1493 = vunpack.c.l.b16 %v1477
        %v1494 = vunpack.c.l.b16 %v1478
        %v1495 = vunpack.c.l.b16 %v1479
        %v1496 = vpack.c.b16 %v1493, %v1492
        %v1497 = vpack.c.b16 %v1495, %v1494
        %1500 = vmatprep.subr.bf16.mxu0 0
        %1501 = vmatpush1.bf16.msra.mxu0 %v1496
        %1502 = vmatprep.subr.bf16.mxu0 0
        %1503 = vmatpush1.bf16.msra.mxu0 %v1497
        %1504 = vmatprep.subr.bf16.mxu0 0
        %1505 = vmatpush1.bf16.msra.mxu0 0
        %1506 = vmatprep.subr.bf16.mxu0 0
        %1507 = vmatpush1.bf16.msra.mxu0 0
        %1508 = vmatprep.subr.bf16.mxu0 0
        %1509 = vmatpush1.bf16.msra.mxu0 0
        %1510 = vmatprep.subr.bf16.mxu0 0
        %1511 = vmatpush1.bf16.msra.mxu0 0
        %1512 = vmatprep.subr.bf16.mxu0 0
        %1513 = vmatpush1.bf16.msra.mxu0 0
        %1514 = vmatprep.subr.bf16.mxu0 0
        %1515 = vmatpush1.bf16.msra.mxu0 0
        %1516 = vmatprep.subr.bf16.mxu0 0
        %1517 = vmatpush1.bf16.msra.mxu0 0
        %1518 = vmatprep.subr.bf16.mxu0 0
        %1519 = vmatpush1.bf16.msra.mxu0 0
        %1520 = vmatprep.subr.bf16.mxu0 0
        %1521 = vmatpush1.bf16.msra.mxu0 0
        %1522 = vmatprep.subr.bf16.mxu0 0
        %1523 = vmatpush1.bf16.msra.mxu0 0
        %1524 = vmatprep.subr.bf16.mxu0 0
        %1525 = vmatpush1.bf16.msra.mxu0 0
        %1526 = vmatprep.subr.bf16.mxu0 0
        %1527 = vmatpush1.bf16.msra.mxu0 0
        %1528 = vmatprep.subr.bf16.mxu0 0
        %1529 = vmatpush1.bf16.msra.mxu0 0
        %1530 = vmatprep.subr.bf16.mxu0 0
        %1531 = vmatpush1.bf16.msra.mxu0 0
        %1532 = vmatprep.mubr.bf16.mxu0 0
        %1533 = vmatmul.mubr.bf16.gmra.mrb[0].mxu0 %v1082
        %v1534 = vpop.f32.mrb[0].mxu0
        %v1535 = vadd.f32 %v1486, %v1534
        %v1536 = vpop.f32.mrb[0].mxu0
        %v1537 = vpop.f32.mrb[0].mxu0
        %v1538 = vadd.f32 %v1486, %v1537
        %v1539 = vpop.f32.mrb[0].mxu0
        %1540 = vdwg.mxu0
        %v1541 = vmul.f32 %v1535, 0.25
        %v1542 = vmul.f32 %v1538, 0.25
        %s1543 = scalar_lea.vmem %s949, 16
        %v1544 = vld [vmem:[%s1543] sm:$0xf]
        %v1545 = vld [vmem:[%s1543 + $0x4] sm:$0xf]
        %v1546 = vld [vmem:[%s1543 + $0x8] sm:$0xf]
        %v1547 = vld [vmem:[%s1543 + $0xc] sm:$0xf]
        %s1548 = scalar_lea.vmem %s953, 1
        %v1549 = vld [vmem:[%s1548] sm:$0x1]
        %v1551 = vlaneseq
        %v1552 = vshrl.u32 %v1551, 7
        %v1553 = vsub.s32 0, %v1552
        %v1554 = vrot.slane %v1549, %v1553
        %v1560 = vunpack.c.l.b16 %v1544
        %v1561 = vunpack.c.l.b16 %v1545
        %v1562 = vunpack.c.l.b16 %v1546
        %v1563 = vunpack.c.l.b16 %v1547
        %v1564 = vpack.c.b16 %v1561, %v1560
        %v1565 = vpack.c.b16 %v1563, %v1562
        %1568 = vmatprep.subr.bf16.mxu0 0
        %1569 = vmatpush1.bf16.msra.mxu0 %v1564
        %1570 = vmatprep.subr.bf16.mxu0 0
        %1571 = vmatpush1.bf16.msra.mxu0 %v1565
        %1572 = vmatprep.subr.bf16.mxu0 0
        %1573 = vmatpush1.bf16.msra.mxu0 0
        %1574 = vmatprep.subr.bf16.mxu0 0
        %1575 = vmatpush1.bf16.msra.mxu0 0
        %1576 = vmatprep.subr.bf16.mxu0 0
        %1577 = vmatpush1.bf16.msra.mxu0 0
        %1578 = vmatprep.subr.bf16.mxu0 0
        %1579 = vmatpush1.bf16.msra.mxu0 0
        %1580 = vmatprep.subr.bf16.mxu0 0
        %1581 = vmatpush1.bf16.msra.mxu0 0
        %1582 = vmatprep.subr.bf16.mxu0 0
        %1583 = vmatpush1.bf16.msra.mxu0 0
        %1584 = vmatprep.subr.bf16.mxu0 0
        %1585 = vmatpush1.bf16.msra.mxu0 0
        %1586 = vmatprep.subr.bf16.mxu0 0
        %1587 = vmatpush1.bf16.msra.mxu0 0
        %1588 = vmatprep.subr.bf16.mxu0 0
        %1589 = vmatpush1.bf16.msra.mxu0 0
        %1590 = vmatprep.subr.bf16.mxu0 0
        %1591 = vmatpush1.bf16.msra.mxu0 0
        %1592 = vmatprep.subr.bf16.mxu0 0
        %1593 = vmatpush1.bf16.msra.mxu0 0
        %1594 = vmatprep.subr.bf16.mxu0 0
        %1595 = vmatpush1.bf16.msra.mxu0 0
        %1596 = vmatprep.subr.bf16.mxu0 0
        %1597 = vmatpush1.bf16.msra.mxu0 0
        %1598 = vmatprep.subr.bf16.mxu0 0
        %1599 = vmatpush1.bf16.msra.mxu0 0
        %1600 = vmatprep.mubr.bf16.mxu0 0
        %1601 = vmatmul.mubr.bf16.gmra.mrb[0].mxu0 %v1082
        %v1602 = vpop.f32.mrb[0].mxu0
        %v1603 = vadd.f32 %v1554, %v1602
        %v1604 = vpop.f32.mrb[0].mxu0
        %v1605 = vpop.f32.mrb[0].mxu0
        %v1606 = vadd.f32 %v1554, %v1605
        %v1607 = vpop.f32.mrb[0].mxu0
        %1608 = vdwg.mxu0
        %s1609 = scalar_lea.vmem %s958, 16
        %v1610 = vld [vmem:[%s1609] sm:$0xf]
        %v1611 = vld [vmem:[%s1609 + $0x4] sm:$0xf]
        %v1612 = vld [vmem:[%s1609 + $0x8] sm:$0xf]
        %v1613 = vld [vmem:[%s1609 + $0xc] sm:$0xf]
        %s1614 = scalar_lea.vmem %s962, 1
        %v1615 = vld [vmem:[%s1614] sm:$0x1]
        %v1617 = vlaneseq
        %v1618 = vshrl.u32 %v1617, 7
        %v1619 = vsub.s32 0, %v1618
        %v1620 = vrot.slane %v1615, %v1619
        %v1626 = vunpack.c.l.b16 %v1610
        %v1627 = vunpack.c.l.b16 %v1611
        %v1628 = vunpack.c.l.b16 %v1612
        %v1629 = vunpack.c.l.b16 %v1613
        %v1630 = vpack.c.b16 %v1627, %v1626
        %v1631 = vpack.c.b16 %v1629, %v1628
        %1634 = vmatprep.subr.bf16.mxu0 0
        %1635 = vmatpush1.bf16.msra.mxu0 %v1630
        %1636 = vmatprep.subr.bf16.mxu0 0
        %1637 = vmatpush1.bf16.msra.mxu0 %v1631
        %1638 = vmatprep.subr.bf16.mxu0 0
        %1639 = vmatpush1.bf16.msra.mxu0 0
        %1640 = vmatprep.subr.bf16.mxu0 0
        %1641 = vmatpush1.bf16.msra.mxu0 0
        %1642 = vmatprep.subr.bf16.mxu0 0
        %1643 = vmatpush1.bf16.msra.mxu0 0
        %1644 = vmatprep.subr.bf16.mxu0 0
        %1645 = vmatpush1.bf16.msra.mxu0 0
        %1646 = vmatprep.subr.bf16.mxu0 0
        %1647 = vmatpush1.bf16.msra.mxu0 0
        %1648 = vmatprep.subr.bf16.mxu0 0
        %1649 = vmatpush1.bf16.msra.mxu0 0
        %1650 = vmatprep.subr.bf16.mxu0 0
        %1651 = vmatpush1.bf16.msra.mxu0 0
        %1652 = vmatprep.subr.bf16.mxu0 0
        %1653 = vmatpush1.bf16.msra.mxu0 0
        %1654 = vmatprep.subr.bf16.mxu0 0
        %1655 = vmatpush1.bf16.msra.mxu0 0
        %1656 = vmatprep.subr.bf16.mxu0 0
        %1657 = vmatpush1.bf16.msra.mxu0 0
        %1658 = vmatprep.subr.bf16.mxu0 0
        %1659 = vmatpush1.bf16.msra.mxu0 0
        %1660 = vmatprep.subr.bf16.mxu0 0
        %1661 = vmatpush1.bf16.msra.mxu0 0
        %1662 = vmatprep.subr.bf16.mxu0 0
        %1663 = vmatpush1.bf16.msra.mxu0 0
        %1664 = vmatprep.subr.bf16.mxu0 0
        %1665 = vmatpush1.bf16.msra.mxu0 0
        %1666 = vmatprep.mubr.bf16.mxu0 0
        %1667 = vmatmul.mubr.bf16.gmra.mrb[0].mxu0 %v1082
        %v1668 = vpop.f32.mrb[0].mxu0
        %v1669 = vadd.f32 %v1620, %v1668
        %v1670 = vpop.f32.mrb[0].mxu0
        %v1671 = vpop.f32.mrb[0].mxu0
        %v1672 = vadd.f32 %v1620, %v1671
        %v1673 = vpop.f32.mrb[0].mxu0
        %1674 = vdwg.mxu0
        %v1675 = vpack.c.bf16 %v1541, %v1541
        %v1676 = vpack.c.bf16 %v1542, %v1542
        %v1677 = vpack.c.bf16 %v1603, %v1603
        %v1678 = vpack.c.bf16 %v1606, %v1606
        %v1680 = vsel %vm1259, %v1675, 0
        %v1683 = vsel %vm1259, %v1677, 0
        %1685 = vmatprep.subr.bf16.mxu0 0
        %1686 = vmatpush1.bf16.xpose.msra.mxu0 %v1683
        %1687 = vmatprep.subr.bf16.mxu0 0
        %1688 = vmatpush1.bf16.xpose.msra.mxu0 0
        %1689 = vmatprep.subr.bf16.mxu0 0
        %1690 = vmatpush1.bf16.xpose.msra.mxu0 0
        %1691 = vmatprep.subr.bf16.mxu0 0
        %1692 = vmatpush1.bf16.xpose.msra.mxu0 0
        %1693 = vmatprep.subr.bf16.mxu0 0
        %1694 = vmatpush1.bf16.xpose.msra.mxu0 0
        %1695 = vmatprep.subr.bf16.mxu0 0
        %1696 = vmatpush1.bf16.xpose.msra.mxu0 0
        %1697 = vmatprep.subr.bf16.mxu0 0
        %1698 = vmatpush1.bf16.xpose.msra.mxu0 0
        %1699 = vmatprep.subr.bf16.mxu0 0
        %1700 = vmatpush1.bf16.xpose.msra.mxu0 0
        %1701 = vmatprep.subr.bf16.mxu0 0
        %1702 = vmatpush1.bf16.xpose.msra.mxu0 0
        %1703 = vmatprep.subr.bf16.mxu0 0
        %1704 = vmatpush1.bf16.xpose.msra.mxu0 0
        %1705 = vmatprep.subr.bf16.mxu0 0
        %1706 = vmatpush1.bf16.xpose.msra.mxu0 0
        %1707 = vmatprep.subr.bf16.mxu0 0
        %1708 = vmatpush1.bf16.xpose.msra.mxu0 0
        %1709 = vmatprep.subr.bf16.mxu0 0
        %1710 = vmatpush1.bf16.xpose.msra.mxu0 0
        %1711 = vmatprep.subr.bf16.mxu0 0
        %1712 = vmatpush1.bf16.xpose.msra.mxu0 0
        %1713 = vmatprep.subr.bf16.mxu0 0
        %1714 = vmatpush1.bf16.xpose.msra.mxu0 0
        %1715 = vmatprep.subr.bf16.mxu0 0
        %1716 = vmatpush1.bf16.xpose.msra.mxu0 0
        %1717 = vmatprep.mubr.bf16.mxu0 0
        %1718 = vmatmul.mubr.bf16.gmra.mrb[0].mxu0 %v1680
        %v1719 = vpop.f32.mrb[0].mxu0
        %v1720 = vadd.f32 0.0, %v1719
        %v1721 = vpop.f32.mrb[0].mxu0
        %v1722 = vpop.f32.mrb[0].mxu0
        %v1723 = vpop.f32.mrb[0].mxu0
        %1724 = vdwg.mxu0
        %v1726 = vsel %vm1259, %v1676, 0
        %v1729 = vsel %vm1259, %v1678, 0
        %1731 = vmatprep.subr.bf16.mxu0 0
        %1732 = vmatpush1.bf16.xpose.msra.mxu0 %v1729
        %1733 = vmatprep.subr.bf16.mxu0 0
        %1734 = vmatpush1.bf16.xpose.msra.mxu0 0
        %1735 = vmatprep.subr.bf16.mxu0 0
        %1736 = vmatpush1.bf16.xpose.msra.mxu0 0
        %1737 = vmatprep.subr.bf16.mxu0 0
        %1738 = vmatpush1.bf16.xpose.msra.mxu0 0
        %1739 = vmatprep.subr.bf16.mxu0 0
        %1740 = vmatpush1.bf16.xpose.msra.mxu0 0
        %1741 = vmatprep.subr.bf16.mxu0 0
        %1742 = vmatpush1.bf16.xpose.msra.mxu0 0
        %1743 = vmatprep.subr.bf16.mxu0 0
        %1744 = vmatpush1.bf16.xpose.msra.mxu0 0
        %1745 = vmatprep.subr.bf16.mxu0 0
        %1746 = vmatpush1.bf16.xpose.msra.mxu0 0
        %1747 = vmatprep.subr.bf16.mxu0 0
        %1748 = vmatpush1.bf16.xpose.msra.mxu0 0
        %1749 = vmatprep.subr.bf16.mxu0 0
        %1750 = vmatpush1.bf16.xpose.msra.mxu0 0
        %1751 = vmatprep.subr.bf16.mxu0 0
        %1752 = vmatpush1.bf16.xpose.msra.mxu0 0
        %1753 = vmatprep.subr.bf16.mxu0 0
        %1754 = vmatpush1.bf16.xpose.msra.mxu0 0
        %1755 = vmatprep.subr.bf16.mxu0 0
        %1756 = vmatpush1.bf16.xpose.msra.mxu0 0
        %1757 = vmatprep.subr.bf16.mxu0 0
        %1758 = vmatpush1.bf16.xpose.msra.mxu0 0
        %1759 = vmatprep.subr.bf16.mxu0 0
        %1760 = vmatpush1.bf16.xpose.msra.mxu0 0
        %1761 = vmatprep.subr.bf16.mxu0 0
        %1762 = vmatpush1.bf16.xpose.msra.mxu0 0
        %1763 = vmatprep.mubr.bf16.mxu0 0
        %1764 = vmatmul.mubr.bf16.gmra.mrb[0].mxu0 %v1726
        %v1765 = vpop.f32.mrb[0].mxu0
        %v1766 = vadd.f32 0.0, %v1765
        %v1767 = vpop.f32.mrb[0].mxu0
        %v1768 = vpop.f32.mrb[0].mxu0
        %v1769 = vpop.f32.mrb[0].mxu0
        %1770 = vdwg.mxu0
        %v1771 = vsel %vm1352, %v1720, -inf
        %1772 = vmax.xlane.f32.xlu0 %v1771
        %v1773 = vpop.xlane.xlu0 %1772
        %v1774 = vsel %vm1352, %v1766, -inf
        %1775 = vmax.xlane.f32.xlu0 %v1774
        %v1776 = vpop.xlane.xlu0 %1775
        %v1777 = vsub.f32 %v1720, %v1773
        %v1778 = vsub.f32 %v1766, %v1776
        %v1779 = vmul.f32 %v1777, 1.442695
        %v1780 = vpow.pop %v1779
        %v1781 = vmul.f32 %v1778, 1.442695
        %v1782 = vpow.pop %v1781
        %v1783 = vsel %vm1352, %v1780, 0.0
        %1784 = vadd.xlane.f32.xlu0 %v1783
        %v1785 = vpop.xlane.xlu0 %1784
        %v1786 = vsel %vm1352, %v1782, 0.0
        %1787 = vadd.xlane.f32.xlu0 %v1786
        %v1788 = vpop.xlane.xlu0 %1787
        %v1789 = vrcp.pop %v1785
        %v1790 = vrcp.pop %v1788
        %v1791 = vmul.f32 %v1780, %v1789
        %v1792 = vmul.f32 %v1782, %v1790
        %v1793 = vpack.c.bf16 %v1791, %v1791
        %v1794 = vpack.c.bf16 %v1792, %v1792
        %v1795 = vpack.c.bf16 %v1669, %v1669
        %v1796 = vpack.c.bf16 %v1672, %v1672
        %v1798 = vsel %vm1352, %v1793, 0
        %v1801 = vsel %vm1382, %v1795, 0
        %1803 = vmatprep.subr.bf16.mxu0 0
        %1804 = vmatpush1.bf16.msra.mxu0 %v1801
        %1805 = vmatprep.subr.bf16.mxu0 0
        %1806 = vmatpush1.bf16.msra.mxu0 0
        %1807 = vmatprep.subr.bf16.mxu0 0
        %1808 = vmatpush1.bf16.msra.mxu0 0
        %1809 = vmatprep.subr.bf16.mxu0 0
        %1810 = vmatpush1.bf16.msra.mxu0 0
        %1811 = vmatprep.subr.bf16.mxu0 0
        %1812 = vmatpush1.bf16.msra.mxu0 0
        %1813 = vmatprep.subr.bf16.mxu0 0
        %1814 = vmatpush1.bf16.msra.mxu0 0
        %1815 = vmatprep.subr.bf16.mxu0 0
        %1816 = vmatpush1.bf16.msra.mxu0 0
        %1817 = vmatprep.subr.bf16.mxu0 0
        %1818 = vmatpush1.bf16.msra.mxu0 0
        %1819 = vmatprep.subr.bf16.mxu0 0
        %1820 = vmatpush1.bf16.msra.mxu0 0
        %1821 = vmatprep.subr.bf16.mxu0 0
        %1822 = vmatpush1.bf16.msra.mxu0 0
        %1823 = vmatprep.subr.bf16.mxu0 0
        %1824 = vmatpush1.bf16.msra.mxu0 0
        %1825 = vmatprep.subr.bf16.mxu0 0
        %1826 = vmatpush1.bf16.msra.mxu0 0
        %1827 = vmatprep.subr.bf16.mxu0 0
        %1828 = vmatpush1.bf16.msra.mxu0 0
        %1829 = vmatprep.subr.bf16.mxu0 0
        %1830 = vmatpush1.bf16.msra.mxu0 0
        %1831 = vmatprep.subr.bf16.mxu0 0
        %1832 = vmatpush1.bf16.msra.mxu0 0
        %1833 = vmatprep.subr.bf16.mxu0 0
        %1834 = vmatpush1.bf16.msra.mxu0 0
        %1835 = vmatprep.mubr.bf16.mxu0 0
        %1836 = vmatmul.mubr.bf16.gmra.mrb[0].mxu0 %v1798
        %v1837 = vpop.f32.mrb[0].mxu0
        %v1838 = vadd.f32 0.0, %v1837
        %v1839 = vpop.f32.mrb[0].mxu0
        %v1840 = vpop.f32.mrb[0].mxu0
        %v1841 = vpop.f32.mrb[0].mxu0
        %1842 = vdwg.mxu0
        %v1844 = vsel %vm1352, %v1794, 0
        %v1847 = vsel %vm1382, %v1796, 0
        %1849 = vmatprep.subr.bf16.mxu0 0
        %1850 = vmatpush1.bf16.msra.mxu0 %v1847
        %1851 = vmatprep.subr.bf16.mxu0 0
        %1852 = vmatpush1.bf16.msra.mxu0 0
        %1853 = vmatprep.subr.bf16.mxu0 0
        %1854 = vmatpush1.bf16.msra.mxu0 0
        %1855 = vmatprep.subr.bf16.mxu0 0
        %1856 = vmatpush1.bf16.msra.mxu0 0
        %1857 = vmatprep.subr.bf16.mxu0 0
        %1858 = vmatpush1.bf16.msra.mxu0 0
        %1859 = vmatprep.subr.bf16.mxu0 0
        %1860 = vmatpush1.bf16.msra.mxu0 0
        %1861 = vmatprep.subr.bf16.mxu0 0
        %1862 = vmatpush1.bf16.msra.mxu0 0
        %1863 = vmatprep.subr.bf16.mxu0 0
        %1864 = vmatpush1.bf16.msra.mxu0 0
        %1865 = vmatprep.subr.bf16.mxu0 0
        %1866 = vmatpush1.bf16.msra.mxu0 0
        %1867 = vmatprep.subr.bf16.mxu0 0
        %1868 = vmatpush1.bf16.msra.mxu0 0
        %1869 = vmatprep.subr.bf16.mxu0 0
        %1870 = vmatpush1.bf16.msra.mxu0 0
        %1871 = vmatprep.subr.bf16.mxu0 0
        %1872 = vmatpush1.bf16.msra.mxu0 0
        %1873 = vmatprep.subr.bf16.mxu0 0
        %1874 = vmatpush1.bf16.msra.mxu0 0
        %1875 = vmatprep.subr.bf16.mxu0 0
        %1876 = vmatpush1.bf16.msra.mxu0 0
        %1877 = vmatprep.subr.bf16.mxu0 0
        %1878 = vmatpush1.bf16.msra.mxu0 0
        %1879 = vmatprep.subr.bf16.mxu0 0
        %1880 = vmatpush1.bf16.msra.mxu0 0
        %1881 = vmatprep.mubr.bf16.mxu0 0
        %1882 = vmatmul.mubr.bf16.gmra.mrb[0].mxu0 %v1844
        %v1883 = vpop.f32.mrb[0].mxu0
        %v1884 = vadd.f32 0.0, %v1883
        %v1885 = vpop.f32.mrb[0].mxu0
        %v1886 = vpop.f32.mrb[0].mxu0
        %v1887 = vpop.f32.mrb[0].mxu0
        %1888 = vdwg.mxu0
        %s1889 = scalar_lea.vmem %s967, 8
        %v1890 = vld [vmem:[%s1889] sm:$0xf]
        %v1891 = vld [vmem:[%s1889 + $0x4] sm:$0xf]
        %v1892 = vpack.c.bf16 %v1884, %v1838
        %v1895 = vunpack.c.l.b16 %v1890
        %v1896 = vunpack.c.l.b16 %v1891
        %v1897 = vpack.c.b16 %v1896, %v1895
        %v1900 = vsel %vm1259, %v1892, 0
        %1902 = vmatprep.subr.bf16.mxu0 0
        %1903 = vmatpush1.bf16.msra.mxu0 %v1897
        %1904 = vmatprep.subr.bf16.mxu0 0
        %1905 = vmatpush1.bf16.msra.mxu0 0
        %1906 = vmatprep.subr.bf16.mxu0 0
        %1907 = vmatpush1.bf16.msra.mxu0 0
        %1908 = vmatprep.subr.bf16.mxu0 0
        %1909 = vmatpush1.bf16.msra.mxu0 0
        %1910 = vmatprep.subr.bf16.mxu0 0
        %1911 = vmatpush1.bf16.msra.mxu0 0
        %1912 = vmatprep.subr.bf16.mxu0 0
        %1913 = vmatpush1.bf16.msra.mxu0 0
        %1914 = vmatprep.subr.bf16.mxu0 0
        %1915 = vmatpush1.bf16.msra.mxu0 0
        %1916 = vmatprep.subr.bf16.mxu0 0
        %1917 = vmatpush1.bf16.msra.mxu0 0
        %1918 = vmatprep.subr.bf16.mxu0 0
        %1919 = vmatpush1.bf16.msra.mxu0 0
        %1920 = vmatprep.subr.bf16.mxu0 0
        %1921 = vmatpush1.bf16.msra.mxu0 0
        %1922 = vmatprep.subr.bf16.mxu0 0
        %1923 = vmatpush1.bf16.msra.mxu0 0
        %1924 = vmatprep.subr.bf16.mxu0 0
        %1925 = vmatpush1.bf16.msra.mxu0 0
        %1926 = vmatprep.subr.bf16.mxu0 0
        %1927 = vmatpush1.bf16.msra.mxu0 0
        %1928 = vmatprep.subr.bf16.mxu0 0
        %1929 = vmatpush1.bf16.msra.mxu0 0
        %1930 = vmatprep.subr.bf16.mxu0 0
        %1931 = vmatpush1.bf16.msra.mxu0 0
        %1932 = vmatprep.subr.bf16.mxu0 0
        %1933 = vmatpush1.bf16.msra.mxu0 0
        %1934 = vmatprep.mubr.bf16.mxu0 0
        %1935 = vmatmul.mubr.bf16.gmra.mrb[0].mxu0 %v1900
        %v1936 = vpop.f32.mrb[0].mxu0
        %v1937 = vadd.f32 0.0, %v1936
        %v1938 = vpop.f32.mrb[0].mxu0
        %v1939 = vpop.f32.mrb[0].mxu0
        %v1940 = vadd.f32 0.0, %v1939
        %v1941 = vpop.f32.mrb[0].mxu0
        %1942 = vdwg.mxu0
        %v1945 = vunpack.c.l.b16 %v1472
        %v1946 = vunpack.c.l.b16 %v1473
        %v1947 = vpack.c.b16 %v1946, %v1945
        %v1950 = vsel %vm1259, %v1474, 0
        %1952 = vmatprep.subr.bf16.mxu0 0
        %1953 = vmatpush1.bf16.msra.mxu0 %v1947
        %1954 = vmatprep.subr.bf16.mxu0 0
        %1955 = vmatpush1.bf16.msra.mxu0 0
        %1956 = vmatprep.subr.bf16.mxu0 0
        %1957 = vmatpush1.bf16.msra.mxu0 0
        %1958 = vmatprep.subr.bf16.mxu0 0
        %1959 = vmatpush1.bf16.msra.mxu0 0
        %1960 = vmatprep.subr.bf16.mxu0 0
        %1961 = vmatpush1.bf16.msra.mxu0 0
        %1962 = vmatprep.subr.bf16.mxu0 0
        %1963 = vmatpush1.bf16.msra.mxu0 0
        %1964 = vmatprep.subr.bf16.mxu0 0
        %1965 = vmatpush1.bf16.msra.mxu0 0
        %1966 = vmatprep.subr.bf16.mxu0 0
        %1967 = vmatpush1.bf16.msra.mxu0 0
        %1968 = vmatprep.subr.bf16.mxu0 0
        %1969 = vmatpush1.bf16.msra.mxu0 0
        %1970 = vmatprep.subr.bf16.mxu0 0
        %1971 = vmatpush1.bf16.msra.mxu0 0
        %1972 = vmatprep.subr.bf16.mxu0 0
        %1973 = vmatpush1.bf16.msra.mxu0 0
        %1974 = vmatprep.subr.bf16.mxu0 0
        %1975 = vmatpush1.bf16.msra.mxu0 0
        %1976 = vmatprep.subr.bf16.mxu0 0
        %1977 = vmatpush1.bf16.msra.mxu0 0
        %1978 = vmatprep.subr.bf16.mxu0 0
        %1979 = vmatpush1.bf16.msra.mxu0 0
        %1980 = vmatprep.subr.bf16.mxu0 0
        %1981 = vmatpush1.bf16.msra.mxu0 0
        %1982 = vmatprep.subr.bf16.mxu0 0
        %1983 = vmatpush1.bf16.msra.mxu0 0
        %1984 = vmatprep.mubr.bf16.mxu0 0
        %1985 = vmatmul.mubr.bf16.gmra.mrb[0].mxu0 %v1950
        %v1986 = vpop.f32.mrb[0].mxu0
        %v1987 = vadd.f32 %v1937, %v1986
        %v1988 = vpop.f32.mrb[0].mxu0
        %v1989 = vpop.f32.mrb[0].mxu0
        %v1990 = vadd.f32 %v1940, %v1989
        %v1991 = vpop.f32.mrb[0].mxu0
        %1992 = vdwg.mxu0
        %v1993 = vld [vmem:[%s970] sm:$0x1]
        %v1995 = vlaneseq
        %v1996 = vshrl.u32 %v1995, 7
        %v1997 = vsub.s32 0, %v1996
        %v1998 = vrot.slane %v1993, %v1997
        %v2000 = vadd.f32 %v1987, %v1998
        %v2001 = vadd.f32 %v1990, %v1998
        %v2002 = vadd.f32 %v2000, %v1054
        %v2003 = vadd.f32 %v2001, %v1055
        %v2004 = vld [vmem:[%s973] sm:$0x1]
        %v2005 = vld [vmem:[%s976] sm:$0x1]
        %v2006 = vsel %vm1080, %v2002, 0.0
        %2007 = vadd.xlane.f32.xlu0 %v2006
        %v2008 = vpop.xlane.xlu0 %2007
        %v2009 = vsel %vm1080, %v2003, 0.0
        %2010 = vadd.xlane.f32.xlu0 %v2009
        %v2011 = vpop.xlane.xlu0 %2010
        %v2012 = vrcp.pop 32.0
        %v2013 = vmul.f32 %v2008, %v2012
        %v2014 = vmul.f32 %v2011, %v2012
        %v2015 = vsub.f32 %v2002, %v2013
        %v2016 = vsub.f32 %v2003, %v2014
        %v2017 = vmul.f32 %v2015, %v2015
        %v2018 = vmul.f32 %v2016, %v2016
        %v2019 = vsel %vm1080, %v2017, 0.0
        %2020 = vadd.xlane.f32.xlu0 %v2019
        %v2021 = vpop.xlane.xlu0 %2020
        %v2022 = vsel %vm1080, %v2018, 0.0
        %2023 = vadd.xlane.f32.xlu0 %v2022
        %v2024 = vpop.xlane.xlu0 %2023
        %v2025 = vmul.f32 %v2021, %v2012
        %v2026 = vmul.f32 %v2024, %v2012
        %v2027 = vadd.f32 %v2025, 1e-12
        %v2028 = vadd.f32 %v2026, 1e-12
        %v2029 = vrsqrt.pop %v2027
        %v2030 = vrsqrt.pop %v2028
        %v2031 = vmul.f32 %v2015, %v2029
        %v2032 = vmul.f32 %v2016, %v2030
        %v2034 = vlaneseq
        %v2035 = vshrl.u32 %v2034, 7
        %v2036 = vsub.s32 0, %v2035
        %v2037 = vrot.slane %v2004, %v2036
        %v2039 = vmul.f32 %v2031, %v2037
        %v2040 = vmul.f32 %v2032, %v2037
        %v2042 = vlaneseq
        %v2043 = vshrl.u32 %v2042, 7
        %v2044 = vsub.s32 0, %v2043
        %v2045 = vrot.slane %v2005, %v2044
        %v2047 = vadd.f32 %v2039, %v2045
        %v2048 = vadd.f32 %v2040, %v2045
        %v2049 = vld [vmem:[%s981] sm:$0xf]
        %v2050 = vld [vmem:[%s981 + $0x4] sm:$0xf]
        %v2051 = vld [vmem:[%s981 + $0x8] sm:$0xf]
        %v2052 = vld [vmem:[%s981 + $0xc] sm:$0xf]
        %v2053 = vpack.c.bf16 %v2048, %v2047
        %v2054 = vld [vmem:[%s984] sm:$0x1]
        %v2056 = vlaneseq
        %v2057 = vshrl.u32 %v2056, 7
        %v2058 = vsub.s32 0, %v2057
        %v2059 = vrot.slane %v2054, %v2058
        %v2065 = vunpack.c.l.b16 %v2049
        %v2066 = vunpack.c.l.b16 %v2050
        %v2067 = vunpack.c.l.b16 %v2051
        %v2068 = vunpack.c.l.b16 %v2052
        %v2069 = vpack.c.b16 %v2066, %v2065
        %v2070 = vpack.c.b16 %v2068, %v2067
        %v2074 = vsel %vm1080, %v2053, 0
        %2076 = vmatprep.subr.bf16.mxu0 0
        %2077 = vmatpush1.bf16.msra.mxu0 %v2069
        %2078 = vmatprep.subr.bf16.mxu0 0
        %2079 = vmatpush1.bf16.msra.mxu0 %v2070
        %2080 = vmatprep.subr.bf16.mxu0 0
        %2081 = vmatpush1.bf16.msra.mxu0 0
        %2082 = vmatprep.subr.bf16.mxu0 0
        %2083 = vmatpush1.bf16.msra.mxu0 0
        %2084 = vmatprep.subr.bf16.mxu0 0
        %2085 = vmatpush1.bf16.msra.mxu0 0
        %2086 = vmatprep.subr.bf16.mxu0 0
        %2087 = vmatpush1.bf16.msra.mxu0 0
        %2088 = vmatprep.subr.bf16.mxu0 0
        %2089 = vmatpush1.bf16.msra.mxu0 0
        %2090 = vmatprep.subr.bf16.mxu0 0
        %2091 = vmatpush1.bf16.msra.mxu0 0
        %2092 = vmatprep.subr.bf16.mxu0 0
        %2093 = vmatpush1.bf16.msra.mxu0 0
        %2094 = vmatprep.subr.bf16.mxu0 0
        %2095 = vmatpush1.bf16.msra.mxu0 0
        %2096 = vmatprep.subr.bf16.mxu0 0
        %2097 = vmatpush1.bf16.msra.mxu0 0
        %2098 = vmatprep.subr.bf16.mxu0 0
        %2099 = vmatpush1.bf16.msra.mxu0 0
        %2100 = vmatprep.subr.bf16.mxu0 0
        %2101 = vmatpush1.bf16.msra.mxu0 0
        %2102 = vmatprep.subr.bf16.mxu0 0
        %2103 = vmatpush1.bf16.msra.mxu0 0
        %2104 = vmatprep.subr.bf16.mxu0 0
        %2105 = vmatpush1.bf16.msra.mxu0 0
        %2106 = vmatprep.subr.bf16.mxu0 0
        %2107 = vmatpush1.bf16.msra.mxu0 0
        %2108 = vmatprep.mubr.bf16.mxu0 0
        %2109 = vmatmul.mubr.bf16.gmra.mrb[0].mxu0 %v2074
        %v2110 = vpop.f32.mrb[0].mxu0
        %v2111 = vadd.f32 %v2059, %v2110
        %v2112 = vpop.f32.mrb[0].mxu0
        %v2113 = vpop.f32.mrb[0].mxu0
        %v2114 = vadd.f32 %v2059, %v2113
        %v2115 = vpop.f32.mrb[0].mxu0
        %2116 = vdwg.mxu0
        %v2117 = vmul.f32 %v2111, 0.5
        %v2118 = vmul.f32 %v2114, 0.5
        %v2119 = vmul.f32 %v2111, 0.70710677
        %v2120 = vmul.f32 %v2114, 0.70710677
        %v2121 = verf.f32.pop %v2119
        %v2122 = verf.f32.pop %v2120
        %v2123 = vadd.f32 %v2121, 1.0
        %v2124 = vadd.f32 %v2122, 1.0
        %v2125 = vmul.f32 %v2117, %v2123
        %v2126 = vmul.f32 %v2118, %v2124
        %v2127 = vld [vmem:[%s989] sm:$0xf]
        %v2128 = vld [vmem:[%s989 + $0x4] sm:$0xf]
        %v2129 = vld [vmem:[%s989 + $0x8] sm:$0xf]
        %v2130 = vld [vmem:[%s989 + $0xc] sm:$0xf]
        %v2131 = vld [vmem:[%s989 + $0x10] sm:$0xf]
        %v2132 = vld [vmem:[%s989 + $0x14] sm:$0xf]
        %v2133 = vld [vmem:[%s989 + $0x18] sm:$0xf]
        %v2134 = vld [vmem:[%s989 + $0x1c] sm:$0xf]
        %v2135 = vpack.c.bf16 %v2126, %v2125
        %v2136 = vld [vmem:[%s992] sm:$0x1]
        %v2138 = vlaneseq
        %v2139 = vshrl.u32 %v2138, 7
        %v2140 = vsub.s32 0, %v2139
        %v2141 = vrot.slane %v2136, %v2140
        %v2151 = vunpack.c.l.b16 %v2127
        %v2152 = vunpack.c.l.b16 %v2128
        %v2153 = vunpack.c.l.b16 %v2129
        %v2154 = vunpack.c.l.b16 %v2130
        %v2155 = vunpack.c.l.b16 %v2131
        %v2156 = vunpack.c.l.b16 %v2132
        %v2157 = vunpack.c.l.b16 %v2133
        %v2158 = vunpack.c.l.b16 %v2134
        %v2159 = vpack.c.b16 %v2152, %v2151
        %v2160 = vpack.c.b16 %v2154, %v2153
        %v2161 = vpack.c.b16 %v2156, %v2155
        %v2162 = vpack.c.b16 %v2158, %v2157
        %vm2167 = vcmask 523264
        %v2169 = vsel %vm2167, %v2135, 0
        %2171 = vmatprep.subr.bf16.mxu0 0
        %2172 = vmatpush1.bf16.msra.mxu0 %v2159
        %2173 = vmatprep.subr.bf16.mxu0 0
        %2174 = vmatpush1.bf16.msra.mxu0 %v2160
        %2175 = vmatprep.subr.bf16.mxu0 0
        %2176 = vmatpush1.bf16.msra.mxu0 %v2161
        %2177 = vmatprep.subr.bf16.mxu0 0
        %2178 = vmatpush1.bf16.msra.mxu0 %v2162
        %2179 = vmatprep.subr.bf16.mxu0 0
        %2180 = vmatpush1.bf16.msra.mxu0 0
        %2181 = vmatprep.subr.bf16.mxu0 0
        %2182 = vmatpush1.bf16.msra.mxu0 0
        %2183 = vmatprep.subr.bf16.mxu0 0
        %2184 = vmatpush1.bf16.msra.mxu0 0
        %2185 = vmatprep.subr.bf16.mxu0 0
        %2186 = vmatpush1.bf16.msra.mxu0 0
        %2187 = vmatprep.subr.bf16.mxu0 0
        %2188 = vmatpush1.bf16.msra.mxu0 0
        %2189 = vmatprep.subr.bf16.mxu0 0
        %2190 = vmatpush1.bf16.msra.mxu0 0
        %2191 = vmatprep.subr.bf16.mxu0 0
        %2192 = vmatpush1.bf16.msra.mxu0 0
        %2193 = vmatprep.subr.bf16.mxu0 0
        %2194 = vmatpush1.bf16.msra.mxu0 0
        %2195 = vmatprep.subr.bf16.mxu0 0
        %2196 = vmatpush1.bf16.msra.mxu0 0
        %2197 = vmatprep.subr.bf16.mxu0 0
        %2198 = vmatpush1.bf16.msra.mxu0 0
        %2199 = vmatprep.subr.bf16.mxu0 0
        %2200 = vmatpush1.bf16.msra.mxu0 0
        %2201 = vmatprep.subr.bf16.mxu0 0
        %2202 = vmatpush1.bf16.msra.mxu0 0
        %2203 = vmatprep.mubr.bf16.mxu0 0
        %2204 = vmatmul.mubr.bf16.gmra.mrb[0].mxu0 %v2169
        %v2205 = vpop.f32.mrb[0].mxu0
        %v2206 = vadd.f32 %v2141, %v2205
        %v2207 = vpop.f32.mrb[0].mxu0
        %v2208 = vpop.f32.mrb[0].mxu0
        %v2209 = vadd.f32 %v2141, %v2208
        %v2210 = vpop.f32.mrb[0].mxu0
        %2211 = vdwg.mxu0
        %v2212 = vadd.f32 %v2206, %v2047
        %v2213 = vadd.f32 %v2209, %v2048
        %v2214 = vld [vmem:[%s995] sm:$0x1]
        %v2215 = vld [vmem:[%s998] sm:$0x1]
        %v2216 = vsel %vm1080, %v2212, 0.0
        %2217 = vadd.xlane.f32.xlu0 %v2216
        %v2218 = vpop.xlane.xlu0 %2217
        %v2219 = vsel %vm1080, %v2213, 0.0
        %2220 = vadd.xlane.f32.xlu0 %v2219
        %v2221 = vpop.xlane.xlu0 %2220
        %v2222 = vmul.f32 %v2218, %v2012
        %v2223 = vmul.f32 %v2221, %v2012
        %v2224 = vsub.f32 %v2212, %v2222
        %v2225 = vsub.f32 %v2213, %v2223
        %v2226 = vmul.f32 %v2224, %v2224
        %v2227 = vmul.f32 %v2225, %v2225
        %v2228 = vsel %vm1080, %v2226, 0.0
        %2229 = vadd.xlane.f32.xlu0 %v2228
        %v2230 = vpop.xlane.xlu0 %2229
        %v2231 = vsel %vm1080, %v2227, 0.0
        %2232 = vadd.xlane.f32.xlu0 %v2231
        %v2233 = vpop.xlane.xlu0 %2232
        %v2234 = vmul.f32 %v2230, %v2012
        %v2235 = vmul.f32 %v2233, %v2012
        %v2236 = vadd.f32 %v2234, 1e-12
        %v2237 = vadd.f32 %v2235, 1e-12
        %v2238 = vrsqrt.pop %v2236
        %v2239 = vrsqrt.pop %v2237
        %v2240 = vmul.f32 %v2224, %v2238
        %v2241 = vmul.f32 %v2225, %v2239
        %v2243 = vlaneseq
        %v2244 = vshrl.u32 %v2243, 7
        %v2245 = vsub.s32 0, %v2244
        %v2246 = vrot.slane %v2214, %v2245
        %v2248 = vmul.f32 %v2240, %v2246
        %v2249 = vmul.f32 %v2241, %v2246
        %v2251 = vlaneseq
        %v2252 = vshrl.u32 %v2251, 7
        %v2253 = vsub.s32 0, %v2252
        %v2254 = vrot.slane %v2215, %v2253
        %v2256 = vadd.f32 %v2248, %v2254
        %v2257 = vadd.f32 %v2249, %v2254
        %2258 = vst.msk [vmem:[#allocation2] sm:$0xff] %vm1080, %v2256
        %2259 = vst.msk [vmem:[#allocation2 + $0x8] sm:$0xff] %vm1080, %v2257
        %p2260 = scmp.eq.s32.totalorder %s39, 1
        // Predicated region
        $region121: #{bert_forward.1} parent=115 // pred_check
          %p2261 = pneg %p2260
        $region122: #{bert_forward.1} parent=115 // pred_check_branch
          %2263 = sbr.rel (%p2261) target = $region124
        $region123: #{bert_forward.1} parent=115 // pred_region
          %v2264 = vld [vmem:[%s19] sm:$0xf]
          %v2265 = vld [vmem:[%s19 + $0x4] sm:$0xf]
          %v2266 = vld [vmem:[%s19 + $0x8] sm:$0xf]
          %v2267 = vld [vmem:[%s19 + $0xc] sm:$0xf]
          %v2268 = vpack.c.bf16 %v2256, %v2256
          %v2269 = vpack.c.bf16 %v2257, %v2257
          %v2270 = vld [vmem:[%s20] sm:$0x1]
          %v2272 = vlaneseq
          %v2273 = vshrl.u32 %v2272, 7
          %v2274 = vsub.s32 0, %v2273
          %v2275 = vrot.slane %v2270, %v2274
          %v2279 = vunpack.c.l.b16 %v2268
          %v2280 = vunpack.c.l.b16 %v2269
          %v2281 = vrot.slane %v2280, 7
          %vm2282 = vcmask 1041409
          %v2283 = vsel %vm2282, %v2281, %v2279
          %v2284 = vpack.c.b16 %v2283, %v2283
          %v2289 = vunpack.c.l.b16 %v2264
          %v2290 = vunpack.c.l.b16 %v2265
          %v2291 = vunpack.c.l.b16 %v2266
          %v2292 = vunpack.c.l.b16 %v2267
          %v2293 = vpack.c.b16 %v2290, %v2289
          %v2294 = vpack.c.b16 %v2292, %v2291
          %v2298 = vsel %vm1080, %v2284, 0
          %2300 = vmatprep.subr.bf16.mxu0 0
          %2301 = vmatpush1.bf16.msra.mxu0 %v2293
          %2302 = vmatprep.subr.bf16.mxu0 0
          %2303 = vmatpush1.bf16.msra.mxu0 %v2294
          %2304 = vmatprep.subr.bf16.mxu0 0
          %2305 = vmatpush1.bf16.msra.mxu0 0
          %2306 = vmatprep.subr.bf16.mxu0 0
          %2307 = vmatpush1.bf16.msra.mxu0 0
          %2308 = vmatprep.subr.bf16.mxu0 0
          %2309 = vmatpush1.bf16.msra.mxu0 0
          %2310 = vmatprep.subr.bf16.mxu0 0
          %2311 = vmatpush1.bf16.msra.mxu0 0
          %2312 = vmatprep.subr.bf16.mxu0 0
          %2313 = vmatpush1.bf16.msra.mxu0 0
          %2314 = vmatprep.subr.bf16.mxu0 0
          %2315 = vmatpush1.bf16.msra.mxu0 0
          %2316 = vmatprep.subr.bf16.mxu0 0
          %2317 = vmatpush1.bf16.msra.mxu0 0
          %2318 = vmatprep.subr.bf16.mxu0 0
          %2319 = vmatpush1.bf16.msra.mxu0 0
          %2320 = vmatprep.subr.bf16.mxu0 0
          %2321 = vmatpush1.bf16.msra.mxu0 0
          %2322 = vmatprep.subr.bf16.mxu0 0
          %2323 = vmatpush1.bf16.msra.mxu0 0
          %2324 = vmatprep.subr.bf16.mxu0 0
          %2325 = vmatpush1.bf16.msra.mxu0 0
          %2326 = vmatprep.subr.bf16.mxu0 0
          %2327 = vmatpush1.bf16.msra.mxu0 0
          %2328 = vmatprep.subr.bf16.mxu0 0
          %2329 = vmatpush1.bf16.msra.mxu0 0
          %2330 = vmatprep.subr.bf16.mxu0 0
          %2331 = vmatpush1.bf16.msra.mxu0 0
          %2332 = vmatprep.mubr.bf16.mxu0 0
          %2333 = vmatmul.mubr.bf16.gmra.mrb[0].mxu0 %v2298
          %v2334 = vpop.f32.mrb[0].mxu0
          %v2335 = vadd.f32 %v2275, %v2334
          %v2336 = vpop.f32.mrb[0].mxu0
          %v2337 = vpop.f32.mrb[0].mxu0
          %v2338 = vpop.f32.mrb[0].mxu0
          %2339 = vdwg.mxu0
          %v2340 = vmax.f32 %v2335, 0.0
          %v2341 = vld [vmem:[%s21] sm:$0xf]
          %v2342 = vld [vmem:[%s21 + $0x4] sm:$0xf]
          %v2343 = vld [vmem:[%s21 + $0x8] sm:$0xf]
          %v2344 = vld [vmem:[%s21 + $0xc] sm:$0xf]
          %v2345 = vpack.c.bf16 %v2340, %v2340
          %v2346 = vld [vmem:[%s22] sm:$0x1]
          %v2348 = vlaneseq
          %v2349 = vshrl.u32 %v2348, 7
          %v2350 = vsub.s32 0, %v2349
          %v2351 = vrot.slane %v2346, %v2350
          %v2357 = vunpack.c.l.b16 %v2341
          %v2358 = vunpack.c.l.b16 %v2342
          %v2359 = vunpack.c.l.b16 %v2343
          %v2360 = vunpack.c.l.b16 %v2344
          %v2361 = vpack.c.b16 %v2358, %v2357
          %v2362 = vpack.c.b16 %v2360, %v2359
          %v2366 = vsel %vm1080, %v2345, 0
          %2368 = vmatprep.subr.bf16.mxu0 0
          %2369 = vmatpush1.bf16.msra.mxu0 %v2361
          %2370 = vmatprep.subr.bf16.mxu0 0
          %2371 = vmatpush1.bf16.msra.mxu0 %v2362
          %2372 = vmatprep.subr.bf16.mxu0 0
          %2373 = vmatpush1.bf16.msra.mxu0 0
          %2374 = vmatprep.subr.bf16.mxu0 0
          %2375 = vmatpush1.bf16.msra.mxu0 0
          %2376 = vmatprep.subr.bf16.mxu0 0
          %2377 = vmatpush1.bf16.msra.mxu0 0
          %2378 = vmatprep.subr.bf16.mxu0 0
          %2379 = vmatpush1.bf16.msra.mxu0 0
          %2380 = vmatprep.subr.bf16.mxu0 0
          %2381 = vmatpush1.bf16.msra.mxu0 0
          %2382 = vmatprep.subr.bf16.mxu0 0
          %2383 = vmatpush1.bf16.msra.mxu0 0
          %2384 = vmatprep.subr.bf16.mxu0 0
          %2385 = vmatpush1.bf16.msra.mxu0 0
          %2386 = vmatprep.subr.bf16.mxu0 0
          %2387 = vmatpush1.bf16.msra.mxu0 0
          %2388 = vmatprep.subr.bf16.mxu0 0
          %2389 = vmatpush1.bf16.msra.mxu0 0
          %2390 = vmatprep.subr.bf16.mxu0 0
          %2391 = vmatpush1.bf16.msra.mxu0 0
          %2392 = vmatprep.subr.bf16.mxu0 0
          %2393 = vmatpush1.bf16.msra.mxu0 0
          %2394 = vmatprep.subr.bf16.mxu0 0
          %2395 = vmatpush1.bf16.msra.mxu0 0
          %2396 = vmatprep.subr.bf16.mxu0 0
          %2397 = vmatpush1.bf16.msra.mxu0 0
          %2398 = vmatprep.subr.bf16.mxu0 0
          %2399 = vmatpush1.bf16.msra.mxu0 0
          %2400 = vmatprep.mubr.bf16.mxu0 0
          %2401 = vmatmul.mubr.bf16.gmra.mrb[0].mxu0 %v2366
          %v2402 = vpop.f32.mrb[0].mxu0
          %v2403 = vadd.f32 %v2351, %v2402
          %v2404 = vpop.f32.mrb[0].mxu0
          %v2405 = vpop.f32.mrb[0].mxu0
          %v2406 = vpop.f32.mrb[0].mxu0
          %2407 = vdwg.mxu0
          %vm2408 = vcmask 9216
          %2409 = vst.msk [vmem:[#allocation3] sm:$0x3] %vm2408, %v2403
          %v2410 = vsel %vm2408, %v2403, -inf
          %2411 = vmax.xlane.f32.xlu0 %v2410
          %v2412 = vpop.xlane.xlu0 %2411
          %v2413 = vsub.f32 %v2403, %v2412
          %v2414 = vmul.f32 %v2413, 1.442695
          %v2415 = vpow.pop %v2414
          %v2416 = vsel %vm2408, %v2415, 0.0
          %2417 = vadd.xlane.f32.xlu0 %v2416
          %v2418 = vpop.xlane.xlu0 %2417
          %v2419 = vlog2.pop %v2418
          %v2420 = vmul.f32 %v2419, 0.6931472
          %v2421 = vadd.f32 %v2412, %v2420
          %v2422 = vlaneseq
          %v2423 = vand.u32 %v2422, 127
          %v2424 = vld [vmem:[%s23] sm:$0x3]
          %2425 = vset.pattern.permute.xlu0 0
          %2426 = vperm.xlu0 %2425, %v2424
          %v2427 = vpop.permute.xlu0 %2426
          %vm2428 = vcmp.eq.s32.totalorder %v2423, %v2427
          %v2429 = vsel %vm2428, 1, 0
          %v2430 = vcvt.s32.f32 %v2429
          %v2431 = vmul.f32 %v2430, %v2403
          %v2432 = vsel %vm2408, %v2431, 0.0
          %2433 = vadd.xlane.f32.xlu0 %v2432
          %v2434 = vpop.xlane.xlu0 %2433
          %v2435 = vsub.f32 %v2421, %v2434
          %vm2436 = vcmask 1024
          %v2437 = vsel %vm2436, %v2435, 0.0
          %2438 = vadd.xlane.f32.xlu0 %v2437
          %v2439 = vpop.xlane.xlu0 %2438
          %v2440 = vrot.slane %v2439, 4
          %v2441 = vadd.f32 %v2439, %v2440
          %v2442 = vrot.slane %v2441, 2
          %v2443 = vadd.f32 %v2441, %v2442
          %v2444 = vrot.slane %v2443, 1
          %v2445 = vadd.f32 %v2443, %v2444
          %s2446 = vtos %v2445
          %v2447 = vstv %s2446
          %v2448 = vmul.f32 %v2447, 0.5
          %vm2449 = vcmask 0
          %2450 = vst.msk [vmem:[#allocation5] sm:$0x1] %vm2449, %v2448
        $region124: #{bert_forward.1} parent=115 // pred_fallthru
          _
        // Predicated region
        $region125: #{bert_forward.1} parent=115 // pred_check
          %p2451 = pneg %p636
        $region126: #{bert_forward.1} parent=115 // pred_check_branch
          %2453 = sbr.rel (%p2451) target = $region128
        $region127: #{bert_forward.1} parent=115 // pred_region
          %s2455 = ssub.s32 32, 32
          %2456 = vsyncadd [#allocation4], %s2455
          %s2458 = sshll.u32 [#allocation3], 4
          %s2459 = int_to_ptr.vmem [resolvable:$true] %s2458
          %2461 = dma.vmem_to_hbm [thread:$0]  %s2459, 32, %s24, [#allocation4]
        $region128: #{bert_forward.1} parent=115 // pred_fallthru
          _
        // Predicated region
        $region129: #{bert_forward.1} parent=115 // pred_check
          %p2462 = pneg %p657
        $region130: #{bert_forward.1} parent=115 // pred_check_branch
          %2464 = sbr.rel (%p2462) target = $region132
        $region131: #{bert_forward.1} parent=115 // pred_region
          %s2466 = ssub.s32 16, 16
          %2467 = vsyncadd [#allocation6], %s2466
          %s2469 = sshll.u32 [#allocation5], 4
          %s2470 = int_to_ptr.vmem [resolvable:$true] %s2469
          %2472 = dma.vmem_to_hbm [thread:$0]  %s2470, 16, %s25, [#allocation6]
        $region132: #{bert_forward.1} parent=115 // pred_fallthru
          _
        // Predicated region
        $region133: #{bert_forward.1} parent=115 // pred_check
          %p2473 = pneg %p636
        $region134: #{bert_forward.1} parent=115 // pred_check_branch
          %2475 = sbr.rel (%p2473) target = $region136
        $region135: #{bert_forward.1} parent=115 // pred_region
          %2476 = dma.done [#allocation4], 32
        $region136: #{bert_forward.1} parent=115 // pred_fallthru
          _
        // Predicated region
        $region137: #{bert_forward.1} parent=115 // pred_check
          %p2477 = pneg %p657
        $region138: #{bert_forward.1} parent=115 // pred_check_branch
          %2479 = sbr.rel (%p2477) target = $region140
        $region139: #{bert_forward.1} parent=115 // pred_region
          %2480 = dma.done [#allocation6], 16
        $region140: #{bert_forward.1} parent=115 // pred_fallthru
          _
      $region116: #{bert_forward.1} parent=5 // pred_fallthru
        _
      %p2481 = scmp.le.s32.totalorder 2, %s34
      // Predicated region
      $region141: #{bert_forward.1} parent=5 // pred_check
        %p2482 = pneg %p2481
      $region142: #{bert_forward.1} parent=5 // pred_check_branch
        %2484 = sbr.rel (%p2482) target = $region144
      $region143: #{bert_forward.1} parent=5 // pred_region
        %s2485 = ssub.s32 %s34, 2
      $region144: #{bert_forward.1} parent=5 // pred_fallthru
        _
    $region6: #{bert_forward.1} parent=1 // loop_footer
      %s38 = sadd.s32 1, %s34
    $region7: #{bert_forward.1} parent=1 // loop_footer_branch
      %33 = sbr.rel target = $region3
    $region8: #{bert_forward.1} parent=1 // loop_exit
      _
    %2486 = vsyncpa [#allocation4], 1
    %s2487 = scalar_lea.sflag [#allocation4], 1
    %2488 = vsyncpa %s2487, 1
    %2489 = vsyncpa [#allocation6], 1

</llo_original>
